<compile_context>
chip_gen: v5e
topology: v5e:2x2
jax: 0.10.0
libtpu: 0.0.40
codegen_flags: <defaults>
</compile_context>

<pallas_src>
import functools

import jax
import jax.numpy as jnp
from jax.experimental import pallas as pl
from jax.experimental.pallas import tpu as pltpu


IN_CHANNELS = 1
NUM_FMAPS = 8
FMAP_INC = 2


# --------------------------- in-kernel helpers -------------------------------

def _tap_offsets(kh, kw, row_stride):
    return tuple(di * row_stride + dj for di in range(kh) for dj in range(kw))


def _stack_patches(src, offsets, n_out):
    """Stack the kh*kw shifted flat views along the sublane axis.

    src: (Cin, L) flat activations (lane axis = flattened pixels, the row stride
    is baked into `offsets`).  Returns (kh*kw*Cin, n_out) so a whole 3x3 stage is
    a single MXU GEMM with K = 9*Cin."""
    return jnp.concatenate([src[:, off:off + n_out] for off in offsets], axis=0)


def _conv3x3(src, w_ref, b_ref, offsets, n_out):
    """One 3x3 valid-conv stage as a single stacked GEMM + bias (no activation)."""
    p = _stack_patches(src, offsets, n_out)                  # (9*Cin, n_out)
    return jnp.dot(w_ref[...], p, preferred_element_type=jnp.float32) + b_ref[...]


# --------------------------- Pallas kernels ----------------------------------

def _chain_a_kernel(x_ref, w0_ref, b0_ref, w1_ref, b1_ref, vp_ref, f0c_ref,
                    *, W, Hp, Wv, crop, Tc):
    """l0 conv0+conv1 (ReLU), vertical half of 2x2 max-pool, skip center crop.

    x_ref  : (1, H*W)      flat NCHW input, row stride W
    vp_ref : (C0, Hp, Wv)  vertically pooled rows (full 2x2 pool finished in B)
    f0c_ref: (C0, Tc*Tc)   center-cropped skip connection, compact row stride Tc
    """
    offs = _tap_offsets(3, 3, W)
    x = x_ref[...].astype(jnp.float32)                       # (1, L)
    L = x.shape[-1]
    n1 = L - 2 * W - 2
    # Cin == 1: 9 VPU outer products are cheaper than a K=9 GEMM.
    w0 = w0_ref[...]                                         # (C0, 9)
    acc = None
    for t, off in enumerate(offs):
        contrib = w0[:, t:t + 1] * x[:, off:off + n1]        # (C0,1)*(1,n1)
        acc = contrib if acc is None else acc + contrib
    h = jnp.maximum(acc + b0_ref[...], 0.0)                  # (C0, n1)

    n2 = n1 - 2 * W - 2
    f0 = jnp.maximum(_conv3x3(h, w1_ref, b1_ref, offs, n2), 0.0)   # (C0, n2)
    # f0 is valid on (H-4)x(W-4) at row stride W; trailing columns of each row
    # carry wrap garbage that is never read below (only cols < Wv are touched).

    # fused vertical half of the 2x2 max-pool
    for i in range(Hp):
        r0 = f0[:, (2 * i) * W:(2 * i) * W + Wv]
        r1 = f0[:, (2 * i + 1) * W:(2 * i + 1) * W + Wv]
        vp_ref[:, i, :] = jnp.maximum(r0, r1)

    # fused center crop of the skip connection, emitted compact (row stride Tc)
    for r in range(Tc):
        src = f0[:, (r + crop) * W + crop:(r + crop) * W + crop + Tc]
        f0c_ref[:, r * Tc:(r + 1) * Tc] = src


def _chain_b_kernel(p0_ref, p1_ref, w0_ref, b0_ref, w1_ref, b1_ref,
                    wu_ref, bu_ref, o_ref, *, W):
    """Horizontal pool half + l1 conv0+conv1 (ReLU) + fused ConvTranspose2d GEMM.

    p0_ref/p1_ref: (C0, Hg*Wg) the two column-phase views of the vertically
    pooled activations.  o_ref: (4*C1, Lpad) lane-dense padded output whose row
    index is f*4 + di*2 + dj (upsample phases, interleaved by the wrapper)."""
    offs = _tap_offsets(3, 3, W)
    g = jnp.maximum(p0_ref[...], p1_ref[...]).astype(jnp.float32)   # 2x2 pool done
    L = g.shape[-1]
    n1 = L - 2 * W - 2
    h = jnp.maximum(_conv3x3(g, w0_ref, b0_ref, offs, n1), 0.0)
    n2 = n1 - 2 * W - 2
    h = jnp.maximum(_conv3x3(h, w1_ref, b1_ref, offs, n2), 0.0)
    up = jnp.dot(wu_ref[...], h, preferred_element_type=jnp.float32) + bu_ref[...]
    pad = o_ref.shape[-1] - n2
    o_ref[...] = jnp.concatenate(
        [up, jnp.zeros((up.shape[0], pad), jnp.float32)], axis=1)


def _chain_c_kernel(sk_ref, up_ref, w0s_ref, w0u_ref, b0_ref, w1_ref, b1_ref,
                    wh_ref, bh_ref, o_ref, *, W):
    """Right ConvPass (skip-concat eliminated) + fused lsd/sdt 1x1 Tanh head.

    sk_ref: (C0, L) compact skip; up_ref: (C1, L) compact upsampled features.
    o_ref : (8, Lpad) lane-dense padded output (rows 0..5 lsd, 6 sdt, 7 pad)."""
    offs = _tap_offsets(3, 3, W)
    sk = sk_ref[...].astype(jnp.float32)
    up = up_ref[...].astype(jnp.float32)
    L = sk.shape[-1]
    n1 = L - 2 * W - 2
    # stage 0: two stacked GEMMs (K = 9*C0 and K = 9*C1) summed — no concat needed
    h = jnp.dot(w0s_ref[...], _stack_patches(sk, offs, n1),
                preferred_element_type=jnp.float32)
    h = h + jnp.dot(w0u_ref[...], _stack_patches(up, offs, n1),
                    preferred_element_type=jnp.float32)
    h = jnp.maximum(h + b0_ref[...], 0.0)
    n2 = n1 - 2 * W - 2
    z = jnp.maximum(_conv3x3(h, w1_ref, b1_ref, offs, n2), 0.0)
    # fused heads: one 1x1 GEMM (8 padded output channels) + Tanh
    out = jnp.tanh(jnp.dot(wh_ref[...], z,
                           preferred_element_type=jnp.float32) + bh_ref[...])
    pad = o_ref.shape[-1] - n2
    o_ref[...] = jnp.concatenate(
        [out, jnp.zeros((out.shape[0], pad), jnp.float32)], axis=1)


# --------------------------- spec helpers ------------------------------------

def _batch_spec(shape):
    nd = len(shape)
    return pl.BlockSpec((None,) + tuple(shape), lambda b: (b,) + (0,) * nd)


def _const_spec(shape):
    nd = len(shape)
    return pl.BlockSpec(tuple(shape), lambda b: (0,) * nd)


def _stacked_weight(w):
    """torch Conv2d weight (Cout, Cin, kh, kw) -> (Cout, kh*kw*Cin), matching the
    (tap, Cin) row order produced by _stack_patches."""
    co, ci, kh, kw = w.shape
    return w.transpose(0, 2, 3, 1).reshape(co, kh * kw * ci)


def _round_up(n, m):
    return -(-n // m) * m


# --------------------------- layout / crop helpers ---------------------------

def center_crop(x, target_hw):
    H, W = x.shape[-2:]
    th, tw = target_hw
    oh, ow = (H - th) // 2, (W - tw) // 2
    return x[:, :, oh:oh + th, ow:ow + tw]


def crop_to_factor(x, factor, kernel_sizes):
    """Mirror of funlib UNet.crop_to_factor (no-op at these sizes)."""
    shape = x.shape[-2:]
    conv_crop = tuple(sum(ks[d] - 1 for ks in kernel_sizes) for d in range(2))
    ns = tuple((s - c) // f for s, c, f in zip(shape, conv_crop, factor))
    target = tuple(n * f + c for n, f, c in zip(ns, factor, conv_crop))
    if tuple(target) != tuple(shape):
        return center_crop(x, target)
    return x


# --------------------------- parameters & forward ----------------------------

def init_params(key):
    ks = jax.random.split(key, 16)

    def cw(k, cout, cin, kh, kw):
        return 0.1 * jax.random.normal(k, (cout, cin, kh, kw), jnp.float32)

    def cb(k, cout):
        return 0.05 * jax.random.normal(k, (cout,), jnp.float32)

    c0 = NUM_FMAPS                # 8
    c1 = NUM_FMAPS * FMAP_INC     # 16
    p = {
        # level 0 (top) down ConvPass: in_channels -> c0, two 3x3 valid convs + ReLU
        "l0_w0": cw(ks[0], c0, IN_CHANNELS, 3, 3), "l0_b0": cb(ks[1], c0),
        "l0_w1": cw(ks[2], c0, c0, 3, 3),          "l0_b1": cb(ks[3], c0),
        # level 1 (bottom) ConvPass: c0 -> c1
        "l1_w0": cw(ks[4], c1, c0, 3, 3),          "l1_b0": cb(ks[5], c1),
        "l1_w1": cw(ks[6], c1, c1, 3, 3),          "l1_b1": cb(ks[7], c1),
        # Upsample: ConvTranspose2d(c1 -> c1, kernel=2, stride=2); torch layout (Cin,Cout,2,2)
        "up_w": 0.1 * jax.random.normal(ks[8], (c1, c1, 2, 2), jnp.float32),
        "up_b": cb(ks[9], c1),
        # right ConvPass: (c0 + c1) -> c0
        "r0_w0": cw(ks[10], c0, c0 + c1, 3, 3),    "r0_b0": cb(ks[11], c0),
        "r0_w1": cw(ks[12], c0, c0, 3, 3),         "r0_b1": cb(ks[13], c0),
        # heads: 1x1 convs + Tanh
        "lsd_w": cw(ks[14], 6, c0, 1, 1),          "lsd_b": jnp.zeros((6,), jnp.float32),
        "sdt_w": cw(ks[15], 1, c0, 1, 1),          "sdt_b": jnp.zeros((1,), jnp.float32),
    }
    return p


def unet_model_forward(params, x):
    B, Cin, H, W = x.shape
    c0 = NUM_FMAPS                       # 8
    c1 = NUM_FMAPS * FMAP_INC            # 16

    H0, W0 = H - 4, W - 4                # after chain A               (32, 32)
    Hg, Wg = H0 // 2, W0 // 2            # after 2x2 max-pool          (16, 16)
    Hb, Wb = Hg - 4, Wg - 4              # after chain B 3x3 convs     (12, 12)
    Hu, Wu = 2 * Hb, 2 * Wb              # after upsample              (24, 24)
    Ho, Wo = Hu - 4, Wu - 4              # final                       (20, 20)
    crop = (H0 - Hu) // 2                # skip center-crop offset     (4)

    # ---- stacked / fused weights (tiny, done per call under jit) -----------
    w_a0 = _stacked_weight(params["l0_w0"]); b_a0 = params["l0_b0"].reshape(-1, 1)
    w_a1 = _stacked_weight(params["l0_w1"]); b_a1 = params["l0_b1"].reshape(-1, 1)
    w_b0 = _stacked_weight(params["l1_w0"]); b_b0 = params["l1_b0"].reshape(-1, 1)
    w_b1 = _stacked_weight(params["l1_w1"]); b_b1 = params["l1_b1"].reshape(-1, 1)
    # ConvTranspose2d(2,2) as one 1x1 GEMM with N = 4*Cout, row = f*4 + di*2 + dj
    w_up = params["up_w"].transpose(1, 2, 3, 0).reshape(4 * c1, c1)
    b_up = jnp.repeat(params["up_b"], 4).reshape(-1, 1)
    # right ConvPass stage 0, split by input group (skip: 8ch | upsampled: 16ch)
    w_c0s = _stacked_weight(params["r0_w0"][:, :c0])
    w_c0u = _stacked_weight(params["r0_w0"][:, c0:])
    b_c0 = params["r0_b0"].reshape(-1, 1)
    w_c1 = _stacked_weight(params["r0_w1"]); b_c1 = params["r0_b1"].reshape(-1, 1)
    # fused lsd/sdt heads padded to 8 output channels (row 7 is a zero pad)
    w_h = jnp.concatenate([params["lsd_w"].reshape(6, c0),
                           params["sdt_w"].reshape(1, c0),
                           jnp.zeros((1, c0), jnp.float32)], axis=0)
    b_h = jnp.concatenate([params["lsd_b"], params["sdt_b"],
                           jnp.zeros((1,), jnp.float32)]).reshape(-1, 1)

    par = pltpu.CompilerParams(dimension_semantics=("parallel",))

    # ---- chain A: l0 convs + vertical pool half + skip crop -----------------
    n1a = H * W - 2 * W - 2
    n2a = n1a - 2 * W - 2
    ce_a = pl.CostEstimate(
        flops=int(B * 2 * (c0 * 9 * Cin * n1a + c0 * 9 * c0 * n2a)),
        transcendentals=0,
        bytes_accessed=int(4 * (B * (Cin * H * W + c0 * Hg * W0 + c0 * Hu * Wu)
                                + w_a0.size + w_a1.size + 2 * c0)))
    vp, f0c = pl.pallas_call(
        functools.partial(_chain_a_kernel, W=W, Hp=Hg, Wv=W0, crop=crop, Tc=Hu),
        out_shape=(jax.ShapeDtypeStruct((B, c0, Hg, W0), jnp.float32),
                   jax.ShapeDtypeStruct((B, c0, Hu * Wu), jnp.float32)),
        grid=(B,),
        in_specs=[_batch_spec((Cin, H * W)),
                  _const_spec(w_a0.shape), _const_spec(b_a0.shape),
                  _const_spec(w_a1.shape), _const_spec(b_a1.shape)],
        out_specs=(_batch_spec((c0, Hg, W0)), _batch_spec((c0, Hu * Wu))),
        compiler_params=par,
        cost_estimate=ce_a,
    )(x.reshape(B, Cin, H * W), w_a0, b_a0, w_a1, b_a1)

    # ---- column-phase views of the vertically pooled rows (tiny XLA glue) ---
    p0 = vp[:, :, :, 0::2].reshape(B, c0, Hg * Wg)
    p1 = vp[:, :, :, 1::2].reshape(B, c0, Hg * Wg)

    # ---- chain B: pool (horizontal half) + l1 convs + upsample GEMM ---------
    n1b = Hg * Wg - 2 * Wg - 2
    n2b = n1b - 2 * Wg - 2
    Lb_pad = _round_up(max(n2b, Hb * Wg), 128)
    ce_b = pl.CostEstimate(
        flops=int(B * 2 * (c1 * 9 * c0 * n1b + c1 * 9 * c1 * n2b
                           + 4 * c1 * c1 * n2b)),
        transcendentals=0,
        bytes_accessed=int(4 * (B * (2 * c0 * Hg * Wg + 4 * c1 * Lb_pad)
                                + w_b0.size + w_b1.size + w_up.size)))
    upg = pl.pallas_call(
        functools.partial(_chain_b_kernel, W=Wg),
        out_shape=jax.ShapeDtypeStruct((B, 4 * c1, Lb_pad), jnp.float32),
        grid=(B,),
        in_specs=[_batch_spec((c0, Hg * Wg)), _batch_spec((c0, Hg * Wg)),
                  _const_spec(w_b0.shape), _const_spec(b_b0.shape),
                  _const_spec(w_b1.shape), _const_spec(b_b1.shape),
                  _const_spec(w_up.shape), _const_spec(b_up.shape)],
        out_specs=_batch_spec((4 * c1, Lb_pad)),
        compiler_params=par,
        cost_estimate=ce_b,
    )(p0, p1, w_b0, b_b0, w_b1, b_b1, w_up, b_up)

    # ---- interleave the upsample phases onto the stride-2 grid (tiny glue) --
    up_sp = upg[:, :, :Hb * Wg].reshape(B, 4 * c1, Hb, Wg)[:, :, :, :Wb]
    up = up_sp.reshape(B, c1, 2, 2, Hb, Wb).transpose(0, 1, 4, 2, 5, 3)
    up = up.reshape(B, c1, Hu, Wu)
    up = crop_to_factor(up, (2, 2), [(3, 3), (3, 3)])       # no-op at these sizes
    assert up.shape[-2:] == (Hu, Wu)

    # ---- chain C: right ConvPass (split skip/up GEMMs) + fused Tanh heads ---
    n1c = Hu * Wu - 2 * Wu - 2
    n2c = n1c - 2 * Wu - 2
    Lc_pad = _round_up(max(n2c, Ho * Wu), 128)
    ce_c = pl.CostEstimate(
        flops=int(B * 2 * (c0 * 9 * c0 * n1c + c0 * 9 * c1 * n1c
                           + c0 * 9 * c0 * n2c + 8 * c0 * n2c)),
        transcendentals=int(B * 8 * n2c),
        bytes_accessed=int(4 * (B * (c0 * Hu * Wu + c1 * Hu * Wu + 8 * Lc_pad)
                                + w_c0s.size + w_c0u.size + w_c1.size + w_h.size)))
    out = pl.pallas_call(
        functools.partial(_chain_c_kernel, W=Wu),
        out_shape=jax.ShapeDtypeStruct((B, 8, Lc_pad), jnp.float32),
        grid=(B,),
        in_specs=[_batch_spec((c0, Hu * Wu)), _batch_spec((c1, Hu * Wu)),
                  _const_spec(w_c0s.shape), _const_spec(w_c0u.shape),
                  _const_spec(b_c0.shape),
                  _const_spec(w_c1.shape), _const_spec(b_c1.shape),
                  _const_spec(w_h.shape), _const_spec(b_h.shape)],
        out_specs=_batch_spec((8, Lc_pad)),
        compiler_params=par,
        cost_estimate=ce_c,
    )(f0c, up.reshape(B, c1, Hu * Wu),
      w_c0s, w_c0u, b_c0, w_c1, b_c1, w_h, b_h)

    # ---- final crop of the lane-dense padded output --------------------------
    y = out[:, :, :Ho * Wu].reshape(B, 8, Ho, Wu)[:, :, :, :Wo]
    lsd, sdt = y[:, :6], y[:, 6:7]
    return lsd, sdt


# --------------------------- pure-XLA reference -------------------------------

def _ref_conv(x, w, b, act):
    y = jax.lax.conv_general_dilated(
        x, w, window_strides=(1, 1), padding="VALID",
        dimension_numbers=("NCHW", "OIHW", "NCHW"))
    y = y + b.reshape(1, -1, 1, 1)
    if act == "relu":
        y = jnp.maximum(y, 0.0)
    elif act == "tanh":
        y = jnp.tanh(y)
    return y


def reference_forward(params, x):
    f0 = _ref_conv(x, params["l0_w0"], params["l0_b0"], "relu")
    f0 = _ref_conv(f0, params["l0_w1"], params["l0_b1"], "relu")
    g = jax.lax.reduce_window(f0, -jnp.inf, jax.lax.max,
                              (1, 1, 2, 2), (1, 1, 2, 2), "VALID")
    g = _ref_conv(g, params["l1_w0"], params["l1_b0"], "relu")
    g = _ref_conv(g, params["l1_w1"], params["l1_b1"], "relu")
    # ConvTranspose2d(kernel=2, stride=2): non-overlapping scatter of outer products
    up = jnp.einsum("bchw,cfij->bfhiwj", g, params["up_w"])
    Bn, Cf, Hh, _, Ww, _ = up.shape
    up = up.reshape(Bn, Cf, 2 * Hh, 2 * Ww) + params["up_b"].reshape(1, -1, 1, 1)
    up = crop_to_factor(up, (2, 2), [(3, 3), (3, 3)])
    f0c = center_crop(f0, up.shape[-2:])
    h = jnp.concatenate([f0c, up], axis=1)
    h = _ref_conv(h, params["r0_w0"], params["r0_b0"], "relu")
    z = _ref_conv(h, params["r0_w1"], params["r0_b1"], "relu")
    lsd = _ref_conv(z, params["lsd_w"], params["lsd_b"], "tanh")
    sdt = _ref_conv(z, params["sdt_w"], params["sdt_b"], "tanh")
    return lsd, sdt


if __name__ == "__main__":
    key = jax.random.PRNGKey(0)
    pkey, xkey = jax.random.split(key)
    params = init_params(pkey)
    # NCHW input; spatial 36 so all valid-conv / pool / upsample sizes line up.
    x = jax.random.normal(xkey, (2, IN_CHANNELS, 36, 36), jnp.float32)

    fwd = jax.jit(unet_model_forward)
    lsd, sdt = fwd(params, x)
    jax.block_until_ready((lsd, sdt))

    assert lsd.shape == (2, 6, 20, 20), lsd.shape
    assert sdt.shape == (2, 1, 20, 20), sdt.shape
    assert bool(jnp.all(jnp.isfinite(lsd))) and bool(jnp.all(jnp.isfinite(sdt)))

    # cross-check against a pure-XLA reference implementation
    lsd_r, sdt_r = jax.jit(reference_forward)(params, x)
    err = max(float(jnp.max(jnp.abs(lsd - lsd_r))),
              float(jnp.max(jnp.abs(sdt - sdt_r))))
    assert err < 1e-2, f"max abs error vs reference: {err}"

    print("KERNEL_OK")
</pallas_src>

<mosaic_0001>
module attributes {stable_mosaic.version = 11 : i64} {
  func.func @_chain_a_kernel(%arg0: i32, %arg1: memref<1x1x1296xf32, #tpu.memory_space<vmem>>, %arg2: memref<8x9xf32, #tpu.memory_space<vmem>>, %arg3: memref<8x1xf32, #tpu.memory_space<vmem>>, %arg4: memref<8x72xf32, #tpu.memory_space<vmem>>, %arg5: memref<8x1xf32, #tpu.memory_space<vmem>>, %arg6: memref<1x8x16x32xf32, #tpu.memory_space<vmem>>, %arg7: memref<1x8x576xf32, #tpu.memory_space<vmem>>) attributes {dimension_semantics = [#tpu.dimension_semantics<parallel>], iteration_bounds = array<i64: 2>, scalar_prefetch = 0 : i64, scratch_operands = 0 : i64, tpu.core_type = #tpu.core_type<tc>, window_params = [{transform_indices = @transform_0, window_bounds = array<i64: 1, 1, 1296>}, {pipeline_mode = #tpu.pipeline_mode<synchronous>, transform_indices = @transform_1, window_bounds = array<i64: 8, 9>}, {pipeline_mode = #tpu.pipeline_mode<synchronous>, transform_indices = @transform_2, window_bounds = array<i64: 8, 1>}, {pipeline_mode = #tpu.pipeline_mode<synchronous>, transform_indices = @transform_3, window_bounds = array<i64: 8, 72>}, {pipeline_mode = #tpu.pipeline_mode<synchronous>, transform_indices = @transform_4, window_bounds = array<i64: 8, 1>}, {transform_indices = @transform_5, window_bounds = array<i64: 1, 8, 16, 32>}, {transform_indices = @transform_6, window_bounds = array<i64: 1, 8, 576>}]} {
    %c0 = arith.constant 0 : index
    %c0_0 = arith.constant 0 : index
    %c0_1 = arith.constant 0 : index
    %0 = vector.load %arg1[%c0, %c0_0, %c0_1] : memref<1x1x1296xf32, #tpu.memory_space<vmem>>, vector<1x1x1296xf32>
    %1 = vector.shape_cast %0 : vector<1x1x1296xf32> to vector<1x1296xf32>
    %c0_2 = arith.constant 0 : index
    %c0_3 = arith.constant 0 : index
    %2 = vector.load %arg2[%c0_2, %c0_3] : memref<8x9xf32, #tpu.memory_space<vmem>>, vector<8x9xf32>
    %3 = vector.extract_strided_slice %2 {offsets = [0, 0], sizes = [8, 1], strides = [1, 1]} : vector<8x9xf32> to vector<8x1xf32>
    %4 = vector.extract_strided_slice %1 {offsets = [0, 0], sizes = [1, 1222], strides = [1, 1]} : vector<1x1296xf32> to vector<1x1222xf32>
    %5 = vector.broadcast %3 : vector<8x1xf32> to vector<8x1222xf32>
    %6 = vector.broadcast %4 : vector<1x1222xf32> to vector<8x1222xf32>
    %7 = arith.mulf %5, %6 : vector<8x1222xf32>
    %8 = vector.extract_strided_slice %2 {offsets = [0, 1], sizes = [8, 1], strides = [1, 1]} : vector<8x9xf32> to vector<8x1xf32>
    %9 = vector.extract_strided_slice %1 {offsets = [0, 1], sizes = [1, 1222], strides = [1, 1]} : vector<1x1296xf32> to vector<1x1222xf32>
    %10 = vector.broadcast %8 : vector<8x1xf32> to vector<8x1222xf32>
    %11 = vector.broadcast %9 : vector<1x1222xf32> to vector<8x1222xf32>
    %12 = arith.mulf %10, %11 : vector<8x1222xf32>
    %13 = arith.addf %7, %12 : vector<8x1222xf32>
    %14 = vector.extract_strided_slice %2 {offsets = [0, 2], sizes = [8, 1], strides = [1, 1]} : vector<8x9xf32> to vector<8x1xf32>
    %15 = vector.extract_strided_slice %1 {offsets = [0, 2], sizes = [1, 1222], strides = [1, 1]} : vector<1x1296xf32> to vector<1x1222xf32>
    %16 = vector.broadcast %14 : vector<8x1xf32> to vector<8x1222xf32>
    %17 = vector.broadcast %15 : vector<1x1222xf32> to vector<8x1222xf32>
    %18 = arith.mulf %16, %17 : vector<8x1222xf32>
    %19 = arith.addf %13, %18 : vector<8x1222xf32>
    %20 = vector.extract_strided_slice %2 {offsets = [0, 3], sizes = [8, 1], strides = [1, 1]} : vector<8x9xf32> to vector<8x1xf32>
    %21 = vector.extract_strided_slice %1 {offsets = [0, 36], sizes = [1, 1222], strides = [1, 1]} : vector<1x1296xf32> to vector<1x1222xf32>
    %22 = vector.broadcast %20 : vector<8x1xf32> to vector<8x1222xf32>
    %23 = vector.broadcast %21 : vector<1x1222xf32> to vector<8x1222xf32>
    %24 = arith.mulf %22, %23 : vector<8x1222xf32>
    %25 = arith.addf %19, %24 : vector<8x1222xf32>
    %26 = vector.extract_strided_slice %2 {offsets = [0, 4], sizes = [8, 1], strides = [1, 1]} : vector<8x9xf32> to vector<8x1xf32>
    %27 = vector.extract_strided_slice %1 {offsets = [0, 37], sizes = [1, 1222], strides = [1, 1]} : vector<1x1296xf32> to vector<1x1222xf32>
    %28 = vector.broadcast %26 : vector<8x1xf32> to vector<8x1222xf32>
    %29 = vector.broadcast %27 : vector<1x1222xf32> to vector<8x1222xf32>
    %30 = arith.mulf %28, %29 : vector<8x1222xf32>
    %31 = arith.addf %25, %30 : vector<8x1222xf32>
    %32 = vector.extract_strided_slice %2 {offsets = [0, 5], sizes = [8, 1], strides = [1, 1]} : vector<8x9xf32> to vector<8x1xf32>
    %33 = vector.extract_strided_slice %1 {offsets = [0, 38], sizes = [1, 1222], strides = [1, 1]} : vector<1x1296xf32> to vector<1x1222xf32>
    %34 = vector.broadcast %32 : vector<8x1xf32> to vector<8x1222xf32>
    %35 = vector.broadcast %33 : vector<1x1222xf32> to vector<8x1222xf32>
    %36 = arith.mulf %34, %35 : vector<8x1222xf32>
    %37 = arith.addf %31, %36 : vector<8x1222xf32>
    %38 = vector.extract_strided_slice %2 {offsets = [0, 6], sizes = [8, 1], strides = [1, 1]} : vector<8x9xf32> to vector<8x1xf32>
    %39 = vector.extract_strided_slice %1 {offsets = [0, 72], sizes = [1, 1222], strides = [1, 1]} : vector<1x1296xf32> to vector<1x1222xf32>
    %40 = vector.broadcast %38 : vector<8x1xf32> to vector<8x1222xf32>
    %41 = vector.broadcast %39 : vector<1x1222xf32> to vector<8x1222xf32>
    %42 = arith.mulf %40, %41 : vector<8x1222xf32>
    %43 = arith.addf %37, %42 : vector<8x1222xf32>
    %44 = vector.extract_strided_slice %2 {offsets = [0, 7], sizes = [8, 1], strides = [1, 1]} : vector<8x9xf32> to vector<8x1xf32>
    %45 = vector.extract_strided_slice %1 {offsets = [0, 73], sizes = [1, 1222], strides = [1, 1]} : vector<1x1296xf32> to vector<1x1222xf32>
    %46 = vector.broadcast %44 : vector<8x1xf32> to vector<8x1222xf32>
    %47 = vector.broadcast %45 : vector<1x1222xf32> to vector<8x1222xf32>
    %48 = arith.mulf %46, %47 : vector<8x1222xf32>
    %49 = arith.addf %43, %48 : vector<8x1222xf32>
    %50 = vector.extract_strided_slice %2 {offsets = [0, 8], sizes = [8, 1], strides = [1, 1]} : vector<8x9xf32> to vector<8x1xf32>
    %51 = vector.extract_strided_slice %1 {offsets = [0, 74], sizes = [1, 1222], strides = [1, 1]} : vector<1x1296xf32> to vector<1x1222xf32>
    %52 = vector.broadcast %50 : vector<8x1xf32> to vector<8x1222xf32>
    %53 = vector.broadcast %51 : vector<1x1222xf32> to vector<8x1222xf32>
    %54 = arith.mulf %52, %53 : vector<8x1222xf32>
    %55 = arith.addf %49, %54 : vector<8x1222xf32>
    %c0_4 = arith.constant 0 : index
    %c0_5 = arith.constant 0 : index
    %56 = vector.load %arg3[%c0_4, %c0_5] : memref<8x1xf32, #tpu.memory_space<vmem>>, vector<8x1xf32>
    %57 = vector.broadcast %56 : vector<8x1xf32> to vector<8x1222xf32>
    %58 = arith.addf %55, %57 : vector<8x1222xf32>
    %cst = arith.constant 0.000000e+00 : f32
    %59 = vector.broadcast %cst : f32 to vector<8x1222xf32>
    %60 = arith.maximumf %58, %59 : vector<8x1222xf32>
    %61 = vector.extract_strided_slice %60 {offsets = [0, 0], sizes = [8, 1148], strides = [1, 1]} : vector<8x1222xf32> to vector<8x1148xf32>
    %62 = vector.extract_strided_slice %60 {offsets = [0, 1], sizes = [8, 1148], strides = [1, 1]} : vector<8x1222xf32> to vector<8x1148xf32>
    %63 = vector.extract_strided_slice %60 {offsets = [0, 2], sizes = [8, 1148], strides = [1, 1]} : vector<8x1222xf32> to vector<8x1148xf32>
    %64 = vector.extract_strided_slice %60 {offsets = [0, 36], sizes = [8, 1148], strides = [1, 1]} : vector<8x1222xf32> to vector<8x1148xf32>
    %65 = vector.extract_strided_slice %60 {offsets = [0, 37], sizes = [8, 1148], strides = [1, 1]} : vector<8x1222xf32> to vector<8x1148xf32>
    %66 = vector.extract_strided_slice %60 {offsets = [0, 38], sizes = [8, 1148], strides = [1, 1]} : vector<8x1222xf32> to vector<8x1148xf32>
    %67 = vector.extract_strided_slice %60 {offsets = [0, 72], sizes = [8, 1148], strides = [1, 1]} : vector<8x1222xf32> to vector<8x1148xf32>
    %68 = vector.extract_strided_slice %60 {offsets = [0, 73], sizes = [8, 1148], strides = [1, 1]} : vector<8x1222xf32> to vector<8x1148xf32>
    %69 = vector.extract_strided_slice %60 {offsets = [0, 74], sizes = [8, 1148], strides = [1, 1]} : vector<8x1222xf32> to vector<8x1148xf32>
    %70 = tpu.concatenate %61, %62, %63, %64, %65, %66, %67, %68, %69 in 0 : vector<8x1148xf32>, vector<8x1148xf32>, vector<8x1148xf32>, vector<8x1148xf32>, vector<8x1148xf32>, vector<8x1148xf32>, vector<8x1148xf32>, vector<8x1148xf32>, vector<8x1148xf32> -> vector<72x1148xf32>
    %c0_6 = arith.constant 0 : index
    %c0_7 = arith.constant 0 : index
    %71 = vector.load %arg4[%c0_6, %c0_7] : memref<8x72xf32, #tpu.memory_space<vmem>>, vector<8x72xf32>
    %cst_8 = arith.constant dense<0.000000e+00> : vector<8x1148xf32>
    %72 = tpu.matmul %71, %70, %cst_8 {dimension_numbers = #tpu.dot_dimension_numbers<[1], [0], [0], [1], [0, 0, 1, 1], [], []>} : vector<8x72xf32>, vector<72x1148xf32>, vector<8x1148xf32> -> vector<8x1148xf32>
    %c0_9 = arith.constant 0 : index
    %c0_10 = arith.constant 0 : index
    %73 = vector.load %arg5[%c0_9, %c0_10] : memref<8x1xf32, #tpu.memory_space<vmem>>, vector<8x1xf32>
    %74 = vector.broadcast %73 : vector<8x1xf32> to vector<8x1148xf32>
    %75 = arith.addf %72, %74 : vector<8x1148xf32>
    %cst_11 = arith.constant 0.000000e+00 : f32
    %76 = vector.broadcast %cst_11 : f32 to vector<8x1148xf32>
    %77 = arith.maximumf %75, %76 : vector<8x1148xf32>
    %78 = vector.extract_strided_slice %77 {offsets = [0, 0], sizes = [8, 32], strides = [1, 1]} : vector<8x1148xf32> to vector<8x32xf32>
    %79 = vector.extract_strided_slice %77 {offsets = [0, 36], sizes = [8, 32], strides = [1, 1]} : vector<8x1148xf32> to vector<8x32xf32>
    %80 = arith.maximumf %78, %79 : vector<8x32xf32>
    %c0_12 = arith.constant 0 : index
    %c0_13 = arith.constant 0 : index
    %c0_14 = arith.constant 0 : index
    %c0_15 = arith.constant 0 : index
    %81 = vector.load %arg6[%c0_12, %c0_13, %c0_14, %c0_15] : memref<1x8x16x32xf32, #tpu.memory_space<vmem>>, vector<1x8x1x32xf32>
    %82 = vector.shape_cast %81 : vector<1x8x1x32xf32> to vector<8x32xf32>
    %83 = vector.shape_cast %80 : vector<8x32xf32> to vector<1x8x1x32xf32>
    tpu.vector_store %arg6[%c0_12, %c0_13, %c0_14, %c0_15], %83 {strides = array<i32>} : memref<1x8x16x32xf32, #tpu.memory_space<vmem>>, vector<1x8x1x32xf32>,
    %84 = vector.extract_strided_slice %77 {offsets = [0, 72], sizes = [8, 32], strides = [1, 1]} : vector<8x1148xf32> to vector<8x32xf32>
    %85 = vector.extract_strided_slice %77 {offsets = [0, 108], sizes = [8, 32], strides = [1, 1]} : vector<8x1148xf32> to vector<8x32xf32>
    %86 = arith.maximumf %84, %85 : vector<8x32xf32>
    %c0_16 = arith.constant 0 : index
    %c0_17 = arith.constant 0 : index
    %c1 = arith.constant 1 : index
    %c0_18 = arith.constant 0 : index
    %87 = vector.load %arg6[%c0_16, %c0_17, %c1, %c0_18] : memref<1x8x16x32xf32, #tpu.memory_space<vmem>>, vector<1x8x1x32xf32>
    %88 = vector.shape_cast %87 : vector<1x8x1x32xf32> to vector<8x32xf32>
    %89 = vector.shape_cast %86 : vector<8x32xf32> to vector<1x8x1x32xf32>
    tpu.vector_store %arg6[%c0_16, %c0_17, %c1, %c0_18], %89 {strides = array<i32>} : memref<1x8x16x32xf32, #tpu.memory_space<vmem>>, vector<1x8x1x32xf32>,
    %90 = vector.extract_strided_slice %77 {offsets = [0, 144], sizes = [8, 32], strides = [1, 1]} : vector<8x1148xf32> to vector<8x32xf32>
    %91 = vector.extract_strided_slice %77 {offsets = [0, 180], sizes = [8, 32], strides = [1, 1]} : vector<8x1148xf32> to vector<8x32xf32>
    %92 = arith.maximumf %90, %91 : vector<8x32xf32>
    %c0_19 = arith.constant 0 : index
    %c0_20 = arith.constant 0 : index
    %c2 = arith.constant 2 : index
    %c0_21 = arith.constant 0 : index
    %93 = vector.load %arg6[%c0_19, %c0_20, %c2, %c0_21] : memref<1x8x16x32xf32, #tpu.memory_space<vmem>>, vector<1x8x1x32xf32>
    %94 = vector.shape_cast %93 : vector<1x8x1x32xf32> to vector<8x32xf32>
    %95 = vector.shape_cast %92 : vector<8x32xf32> to vector<1x8x1x32xf32>
    tpu.vector_store %arg6[%c0_19, %c0_20, %c2, %c0_21], %95 {strides = array<i32>} : memref<1x8x16x32xf32, #tpu.memory_space<vmem>>, vector<1x8x1x32xf32>,
    %96 = vector.extract_strided_slice %77 {offsets = [0, 216], sizes = [8, 32], strides = [1, 1]} : vector<8x1148xf32> to vector<8x32xf32>
    %97 = vector.extract_strided_slice %77 {offsets = [0, 252], sizes = [8, 32], strides = [1, 1]} : vector<8x1148xf32> to vector<8x32xf32>
    %98 = arith.maximumf %96, %97 : vector<8x32xf32>
    %c0_22 = arith.constant 0 : index
    %c0_23 = arith.constant 0 : index
    %c3 = arith.constant 3 : index
    %c0_24 = arith.constant 0 : index
    %99 = vector.load %arg6[%c0_22, %c0_23, %c3, %c0_24] : memref<1x8x16x32xf32, #tpu.memory_space<vmem>>, vector<1x8x1x32xf32>
    %100 = vector.shape_cast %99 : vector<1x8x1x32xf32> to vector<8x32xf32>
    %101 = vector.shape_cast %98 : vector<8x32xf32> to vector<1x8x1x32xf32>
    tpu.vector_store %arg6[%c0_22, %c0_23, %c3, %c0_24], %101 {strides = array<i32>} : memref<1x8x16x32xf32, #tpu.memory_space<vmem>>, vector<1x8x1x32xf32>,
    %102 = vector.extract_strided_slice %77 {offsets = [0, 288], sizes = [8, 32], strides = [1, 1]} : vector<8x1148xf32> to vector<8x32xf32>
    %103 = vector.extract_strided_slice %77 {offsets = [0, 324], sizes = [8, 32], strides = [1, 1]} : vector<8x1148xf32> to vector<8x32xf32>
    %104 = arith.maximumf %102, %103 : vector<8x32xf32>
    %c0_25 = arith.constant 0 : index
    %c0_26 = arith.constant 0 : index
    %c4 = arith.constant 4 : index
    %c0_27 = arith.constant 0 : index
    %105 = vector.load %arg6[%c0_25, %c0_26, %c4, %c0_27] : memref<1x8x16x32xf32, #tpu.memory_space<vmem>>, vector<1x8x1x32xf32>
    %106 = vector.shape_cast %105 : vector<1x8x1x32xf32> to vector<8x32xf32>
    %107 = vector.shape_cast %104 : vector<8x32xf32> to vector<1x8x1x32xf32>
    tpu.vector_store %arg6[%c0_25, %c0_26, %c4, %c0_27], %107 {strides = array<i32>} : memref<1x8x16x32xf32, #tpu.memory_space<vmem>>, vector<1x8x1x32xf32>,
    %108 = vector.extract_strided_slice %77 {offsets = [0, 360], sizes = [8, 32], strides = [1, 1]} : vector<8x1148xf32> to vector<8x32xf32>
    %109 = vector.extract_strided_slice %77 {offsets = [0, 396], sizes = [8, 32], strides = [1, 1]} : vector<8x1148xf32> to vector<8x32xf32>
    %110 = arith.maximumf %108, %109 : vector<8x32xf32>
    %c0_28 = arith.constant 0 : index
    %c0_29 = arith.constant 0 : index
    %c5 = arith.constant 5 : index
    %c0_30 = arith.constant 0 : index
    %111 = vector.load %arg6[%c0_28, %c0_29, %c5, %c0_30] : memref<1x8x16x32xf32, #tpu.memory_space<vmem>>, vector<1x8x1x32xf32>
    %112 = vector.shape_cast %111 : vector<1x8x1x32xf32> to vector<8x32xf32>
    %113 = vector.shape_cast %110 : vector<8x32xf32> to vector<1x8x1x32xf32>
    tpu.vector_store %arg6[%c0_28, %c0_29, %c5, %c0_30], %113 {strides = array<i32>} : memref<1x8x16x32xf32, #tpu.memory_space<vmem>>, vector<1x8x1x32xf32>,
    %114 = vector.extract_strided_slice %77 {offsets = [0, 432], sizes = [8, 32], strides = [1, 1]} : vector<8x1148xf32> to vector<8x32xf32>
    %115 = vector.extract_strided_slice %77 {offsets = [0, 468], sizes = [8, 32], strides = [1, 1]} : vector<8x1148xf32> to vector<8x32xf32>
    %116 = arith.maximumf %114, %115 : vector<8x32xf32>
    %c0_31 = arith.constant 0 : index
    %c0_32 = arith.constant 0 : index
    %c6 = arith.constant 6 : index
    %c0_33 = arith.constant 0 : index
    %117 = vector.load %arg6[%c0_31, %c0_32, %c6, %c0_33] : memref<1x8x16x32xf32, #tpu.memory_space<vmem>>, vector<1x8x1x32xf32>
    %118 = vector.shape_cast %117 : vector<1x8x1x32xf32> to vector<8x32xf32>
    %119 = vector.shape_cast %116 : vector<8x32xf32> to vector<1x8x1x32xf32>
    tpu.vector_store %arg6[%c0_31, %c0_32, %c6, %c0_33], %119 {strides = array<i32>} : memref<1x8x16x32xf32, #tpu.memory_space<vmem>>, vector<1x8x1x32xf32>,
    %120 = vector.extract_strided_slice %77 {offsets = [0, 504], sizes = [8, 32], strides = [1, 1]} : vector<8x1148xf32> to vector<8x32xf32>
    %121 = vector.extract_strided_slice %77 {offsets = [0, 540], sizes = [8, 32], strides = [1, 1]} : vector<8x1148xf32> to vector<8x32xf32>
    %122 = arith.maximumf %120, %121 : vector<8x32xf32>
    %c0_34 = arith.constant 0 : index
    %c0_35 = arith.constant 0 : index
    %c7 = arith.constant 7 : index
    %c0_36 = arith.constant 0 : index
    %123 = vector.load %arg6[%c0_34, %c0_35, %c7, %c0_36] : memref<1x8x16x32xf32, #tpu.memory_space<vmem>>, vector<1x8x1x32xf32>
    %124 = vector.shape_cast %123 : vector<1x8x1x32xf32> to vector<8x32xf32>
    %125 = vector.shape_cast %122 : vector<8x32xf32> to vector<1x8x1x32xf32>
    tpu.vector_store %arg6[%c0_34, %c0_35, %c7, %c0_36], %125 {strides = array<i32>} : memref<1x8x16x32xf32, #tpu.memory_space<vmem>>, vector<1x8x1x32xf32>,
    %126 = vector.extract_strided_slice %77 {offsets = [0, 576], sizes = [8, 32], strides = [1, 1]} : vector<8x1148xf32> to vector<8x32xf32>
    %127 = vector.extract_strided_slice %77 {offsets = [0, 612], sizes = [8, 32], strides = [1, 1]} : vector<8x1148xf32> to vector<8x32xf32>
    %128 = arith.maximumf %126, %127 : vector<8x32xf32>
    %c0_37 = arith.constant 0 : index
    %c0_38 = arith.constant 0 : index
    %c8 = arith.constant 8 : index
    %c0_39 = arith.constant 0 : index
    %129 = vector.load %arg6[%c0_37, %c0_38, %c8, %c0_39] : memref<1x8x16x32xf32, #tpu.memory_space<vmem>>, vector<1x8x1x32xf32>
    %130 = vector.shape_cast %129 : vector<1x8x1x32xf32> to vector<8x32xf32>
    %131 = vector.shape_cast %128 : vector<8x32xf32> to vector<1x8x1x32xf32>
    tpu.vector_store %arg6[%c0_37, %c0_38, %c8, %c0_39], %131 {strides = array<i32>} : memref<1x8x16x32xf32, #tpu.memory_space<vmem>>, vector<1x8x1x32xf32>,
    %132 = vector.extract_strided_slice %77 {offsets = [0, 648], sizes = [8, 32], strides = [1, 1]} : vector<8x1148xf32> to vector<8x32xf32>
    %133 = vector.extract_strided_slice %77 {offsets = [0, 684], sizes = [8, 32], strides = [1, 1]} : vector<8x1148xf32> to vector<8x32xf32>
    %134 = arith.maximumf %132, %133 : vector<8x32xf32>
    %c0_40 = arith.constant 0 : index
    %c0_41 = arith.constant 0 : index
    %c9 = arith.constant 9 : index
    %c0_42 = arith.constant 0 : index
    %135 = vector.load %arg6[%c0_40, %c0_41, %c9, %c0_42] : memref<1x8x16x32xf32, #tpu.memory_space<vmem>>, vector<1x8x1x32xf32>
    %136 = vector.shape_cast %135 : vector<1x8x1x32xf32> to vector<8x32xf32>
    %137 = vector.shape_cast %134 : vector<8x32xf32> to vector<1x8x1x32xf32>
    tpu.vector_store %arg6[%c0_40, %c0_41, %c9, %c0_42], %137 {strides = array<i32>} : memref<1x8x16x32xf32, #tpu.memory_space<vmem>>, vector<1x8x1x32xf32>,
    %138 = vector.extract_strided_slice %77 {offsets = [0, 720], sizes = [8, 32], strides = [1, 1]} : vector<8x1148xf32> to vector<8x32xf32>
    %139 = vector.extract_strided_slice %77 {offsets = [0, 756], sizes = [8, 32], strides = [1, 1]} : vector<8x1148xf32> to vector<8x32xf32>
    %140 = arith.maximumf %138, %139 : vector<8x32xf32>
    %c0_43 = arith.constant 0 : index
    %c0_44 = arith.constant 0 : index
    %c10 = arith.constant 10 : index
    %c0_45 = arith.constant 0 : index
    %141 = vector.load %arg6[%c0_43, %c0_44, %c10, %c0_45] : memref<1x8x16x32xf32, #tpu.memory_space<vmem>>, vector<1x8x1x32xf32>
    %142 = vector.shape_cast %141 : vector<1x8x1x32xf32> to vector<8x32xf32>
    %143 = vector.shape_cast %140 : vector<8x32xf32> to vector<1x8x1x32xf32>
    tpu.vector_store %arg6[%c0_43, %c0_44, %c10, %c0_45], %143 {strides = array<i32>} : memref<1x8x16x32xf32, #tpu.memory_space<vmem>>, vector<1x8x1x32xf32>,
    %144 = vector.extract_strided_slice %77 {offsets = [0, 792], sizes = [8, 32], strides = [1, 1]} : vector<8x1148xf32> to vector<8x32xf32>
    %145 = vector.extract_strided_slice %77 {offsets = [0, 828], sizes = [8, 32], strides = [1, 1]} : vector<8x1148xf32> to vector<8x32xf32>
    %146 = arith.maximumf %144, %145 : vector<8x32xf32>
    %c0_46 = arith.constant 0 : index
    %c0_47 = arith.constant 0 : index
    %c11 = arith.constant 11 : index
    %c0_48 = arith.constant 0 : index
    %147 = vector.load %arg6[%c0_46, %c0_47, %c11, %c0_48] : memref<1x8x16x32xf32, #tpu.memory_space<vmem>>, vector<1x8x1x32xf32>
    %148 = vector.shape_cast %147 : vector<1x8x1x32xf32> to vector<8x32xf32>
    %149 = vector.shape_cast %146 : vector<8x32xf32> to vector<1x8x1x32xf32>
    tpu.vector_store %arg6[%c0_46, %c0_47, %c11, %c0_48], %149 {strides = array<i32>} : memref<1x8x16x32xf32, #tpu.memory_space<vmem>>, vector<1x8x1x32xf32>,
    %150 = vector.extract_strided_slice %77 {offsets = [0, 864], sizes = [8, 32], strides = [1, 1]} : vector<8x1148xf32> to vector<8x32xf32>
    %151 = vector.extract_strided_slice %77 {offsets = [0, 900], sizes = [8, 32], strides = [1, 1]} : vector<8x1148xf32> to vector<8x32xf32>
    %152 = arith.maximumf %150, %151 : vector<8x32xf32>
    %c0_49 = arith.constant 0 : index
    %c0_50 = arith.constant 0 : index
    %c12 = arith.constant 12 : index
    %c0_51 = arith.constant 0 : index
    %153 = vector.load %arg6[%c0_49, %c0_50, %c12, %c0_51] : memref<1x8x16x32xf32, #tpu.memory_space<vmem>>, vector<1x8x1x32xf32>
    %154 = vector.shape_cast %153 : vector<1x8x1x32xf32> to vector<8x32xf32>
    %155 = vector.shape_cast %152 : vector<8x32xf32> to vector<1x8x1x32xf32>
    tpu.vector_store %arg6[%c0_49, %c0_50, %c12, %c0_51], %155 {strides = array<i32>} : memref<1x8x16x32xf32, #tpu.memory_space<vmem>>, vector<1x8x1x32xf32>,
    %156 = vector.extract_strided_slice %77 {offsets = [0, 936], sizes = [8, 32], strides = [1, 1]} : vector<8x1148xf32> to vector<8x32xf32>
    %157 = vector.extract_strided_slice %77 {offsets = [0, 972], sizes = [8, 32], strides = [1, 1]} : vector<8x1148xf32> to vector<8x32xf32>
    %158 = arith.maximumf %156, %157 : vector<8x32xf32>
    %c0_52 = arith.constant 0 : index
    %c0_53 = arith.constant 0 : index
    %c13 = arith.constant 13 : index
    %c0_54 = arith.constant 0 : index
    %159 = vector.load %arg6[%c0_52, %c0_53, %c13, %c0_54] : memref<1x8x16x32xf32, #tpu.memory_space<vmem>>, vector<1x8x1x32xf32>
    %160 = vector.shape_cast %159 : vector<1x8x1x32xf32> to vector<8x32xf32>
    %161 = vector.shape_cast %158 : vector<8x32xf32> to vector<1x8x1x32xf32>
    tpu.vector_store %arg6[%c0_52, %c0_53, %c13, %c0_54], %161 {strides = array<i32>} : memref<1x8x16x32xf32, #tpu.memory_space<vmem>>, vector<1x8x1x32xf32>,
    %162 = vector.extract_strided_slice %77 {offsets = [0, 1008], sizes = [8, 32], strides = [1, 1]} : vector<8x1148xf32> to vector<8x32xf32>
    %163 = vector.extract_strided_slice %77 {offsets = [0, 1044], sizes = [8, 32], strides = [1, 1]} : vector<8x1148xf32> to vector<8x32xf32>
    %164 = arith.maximumf %162, %163 : vector<8x32xf32>
    %c0_55 = arith.constant 0 : index
    %c0_56 = arith.constant 0 : index
    %c14 = arith.constant 14 : index
    %c0_57 = arith.constant 0 : index
    %165 = vector.load %arg6[%c0_55, %c0_56, %c14, %c0_57] : memref<1x8x16x32xf32, #tpu.memory_space<vmem>>, vector<1x8x1x32xf32>
    %166 = vector.shape_cast %165 : vector<1x8x1x32xf32> to vector<8x32xf32>
    %167 = vector.shape_cast %164 : vector<8x32xf32> to vector<1x8x1x32xf32>
    tpu.vector_store %arg6[%c0_55, %c0_56, %c14, %c0_57], %167 {strides = array<i32>} : memref<1x8x16x32xf32, #tpu.memory_space<vmem>>, vector<1x8x1x32xf32>,
    %168 = vector.extract_strided_slice %77 {offsets = [0, 1080], sizes = [8, 32], strides = [1, 1]} : vector<8x1148xf32> to vector<8x32xf32>
    %169 = vector.extract_strided_slice %77 {offsets = [0, 1116], sizes = [8, 32], strides = [1, 1]} : vector<8x1148xf32> to vector<8x32xf32>
    %170 = arith.maximumf %168, %169 : vector<8x32xf32>
    %c0_58 = arith.constant 0 : index
    %c0_59 = arith.constant 0 : index
    %c15 = arith.constant 15 : index
    %c0_60 = arith.constant 0 : index
    %171 = vector.load %arg6[%c0_58, %c0_59, %c15, %c0_60] : memref<1x8x16x32xf32, #tpu.memory_space<vmem>>, vector<1x8x1x32xf32>
    %172 = vector.shape_cast %171 : vector<1x8x1x32xf32> to vector<8x32xf32>
    %173 = vector.shape_cast %170 : vector<8x32xf32> to vector<1x8x1x32xf32>
    tpu.vector_store %arg6[%c0_58, %c0_59, %c15, %c0_60], %173 {strides = array<i32>} : memref<1x8x16x32xf32, #tpu.memory_space<vmem>>, vector<1x8x1x32xf32>,
    %174 = vector.extract_strided_slice %77 {offsets = [0, 148], sizes = [8, 24], strides = [1, 1]} : vector<8x1148xf32> to vector<8x24xf32>
    %c0_61 = arith.constant 0 : index
    %c0_62 = arith.constant 0 : index
    %c0_63 = arith.constant 0 : index
    %175 = vector.load %arg7[%c0_61, %c0_62, %c0_63] : memref<1x8x576xf32, #tpu.memory_space<vmem>>, vector<1x8x24xf32>
    %176 = vector.shape_cast %175 : vector<1x8x24xf32> to vector<8x24xf32>
    %177 = vector.shape_cast %174 : vector<8x24xf32> to vector<1x8x24xf32>
    tpu.vector_store %arg7[%c0_61, %c0_62, %c0_63], %177 {strides = array<i32>} : memref<1x8x576xf32, #tpu.memory_space<vmem>>, vector<1x8x24xf32>,
    %178 = vector.extract_strided_slice %77 {offsets = [0, 184], sizes = [8, 24], strides = [1, 1]} : vector<8x1148xf32> to vector<8x24xf32>
    %c0_64 = arith.constant 0 : index
    %c0_65 = arith.constant 0 : index
    %c24 = arith.constant 24 : index
    %179 = vector.load %arg7[%c0_64, %c0_65, %c24] : memref<1x8x576xf32, #tpu.memory_space<vmem>>, vector<1x8x24xf32>
    %180 = vector.shape_cast %179 : vector<1x8x24xf32> to vector<8x24xf32>
    %181 = vector.shape_cast %178 : vector<8x24xf32> to vector<1x8x24xf32>
    tpu.vector_store %arg7[%c0_64, %c0_65, %c24], %181 {strides = array<i32>} : memref<1x8x576xf32, #tpu.memory_space<vmem>>, vector<1x8x24xf32>,
    %182 = vector.extract_strided_slice %77 {offsets = [0, 220], sizes = [8, 24], strides = [1, 1]} : vector<8x1148xf32> to vector<8x24xf32>
    %c0_66 = arith.constant 0 : index
    %c0_67 = arith.constant 0 : index
    %c48 = arith.constant 48 : index
    %183 = vector.load %arg7[%c0_66, %c0_67, %c48] : memref<1x8x576xf32, #tpu.memory_space<vmem>>, vector<1x8x24xf32>
    %184 = vector.shape_cast %183 : vector<1x8x24xf32> to vector<8x24xf32>
    %185 = vector.shape_cast %182 : vector<8x24xf32> to vector<1x8x24xf32>
    tpu.vector_store %arg7[%c0_66, %c0_67, %c48], %185 {strides = array<i32>} : memref<1x8x576xf32, #tpu.memory_space<vmem>>, vector<1x8x24xf32>,
    %186 = vector.extract_strided_slice %77 {offsets = [0, 256], sizes = [8, 24], strides = [1, 1]} : vector<8x1148xf32> to vector<8x24xf32>
    %c0_68 = arith.constant 0 : index
    %c0_69 = arith.constant 0 : index
    %c72 = arith.constant 72 : index
    %187 = vector.load %arg7[%c0_68, %c0_69, %c72] : memref<1x8x576xf32, #tpu.memory_space<vmem>>, vector<1x8x24xf32>
    %188 = vector.shape_cast %187 : vector<1x8x24xf32> to vector<8x24xf32>
    %189 = vector.shape_cast %186 : vector<8x24xf32> to vector<1x8x24xf32>
    tpu.vector_store %arg7[%c0_68, %c0_69, %c72], %189 {strides = array<i32>} : memref<1x8x576xf32, #tpu.memory_space<vmem>>, vector<1x8x24xf32>,
    %190 = vector.extract_strided_slice %77 {offsets = [0, 292], sizes = [8, 24], strides = [1, 1]} : vector<8x1148xf32> to vector<8x24xf32>
    %c0_70 = arith.constant 0 : index
    %c0_71 = arith.constant 0 : index
    %c96 = arith.constant 96 : index
    %191 = vector.load %arg7[%c0_70, %c0_71, %c96] : memref<1x8x576xf32, #tpu.memory_space<vmem>>, vector<1x8x24xf32>
    %192 = vector.shape_cast %191 : vector<1x8x24xf32> to vector<8x24xf32>
    %193 = vector.shape_cast %190 : vector<8x24xf32> to vector<1x8x24xf32>
    tpu.vector_store %arg7[%c0_70, %c0_71, %c96], %193 {strides = array<i32>} : memref<1x8x576xf32, #tpu.memory_space<vmem>>, vector<1x8x24xf32>,
    %194 = vector.extract_strided_slice %77 {offsets = [0, 328], sizes = [8, 24], strides = [1, 1]} : vector<8x1148xf32> to vector<8x24xf32>
    %c0_72 = arith.constant 0 : index
    %c0_73 = arith.constant 0 : index
    %c120 = arith.constant 120 : index
    %195 = vector.load %arg7[%c0_72, %c0_73, %c120] : memref<1x8x576xf32, #tpu.memory_space<vmem>>, vector<1x8x24xf32>
    %196 = vector.shape_cast %195 : vector<1x8x24xf32> to vector<8x24xf32>
    %197 = vector.shape_cast %194 : vector<8x24xf32> to vector<1x8x24xf32>
    tpu.vector_store %arg7[%c0_72, %c0_73, %c120], %197 {strides = array<i32>} : memref<1x8x576xf32, #tpu.memory_space<vmem>>, vector<1x8x24xf32>,
    %198 = vector.extract_strided_slice %77 {offsets = [0, 364], sizes = [8, 24], strides = [1, 1]} : vector<8x1148xf32> to vector<8x24xf32>
    %c0_74 = arith.constant 0 : index
    %c0_75 = arith.constant 0 : index
    %c144 = arith.constant 144 : index
    %199 = vector.load %arg7[%c0_74, %c0_75, %c144] : memref<1x8x576xf32, #tpu.memory_space<vmem>>, vector<1x8x24xf32>
    %200 = vector.shape_cast %199 : vector<1x8x24xf32> to vector<8x24xf32>
    %201 = vector.shape_cast %198 : vector<8x24xf32> to vector<1x8x24xf32>
    tpu.vector_store %arg7[%c0_74, %c0_75, %c144], %201 {strides = array<i32>} : memref<1x8x576xf32, #tpu.memory_space<vmem>>, vector<1x8x24xf32>,
    %202 = vector.extract_strided_slice %77 {offsets = [0, 400], sizes = [8, 24], strides = [1, 1]} : vector<8x1148xf32> to vector<8x24xf32>
    %c0_76 = arith.constant 0 : index
    %c0_77 = arith.constant 0 : index
    %c168 = arith.constant 168 : index
    %203 = vector.load %arg7[%c0_76, %c0_77, %c168] : memref<1x8x576xf32, #tpu.memory_space<vmem>>, vector<1x8x24xf32>
    %204 = vector.shape_cast %203 : vector<1x8x24xf32> to vector<8x24xf32>
    %205 = vector.shape_cast %202 : vector<8x24xf32> to vector<1x8x24xf32>
    tpu.vector_store %arg7[%c0_76, %c0_77, %c168], %205 {strides = array<i32>} : memref<1x8x576xf32, #tpu.memory_space<vmem>>, vector<1x8x24xf32>,
    %206 = vector.extract_strided_slice %77 {offsets = [0, 436], sizes = [8, 24], strides = [1, 1]} : vector<8x1148xf32> to vector<8x24xf32>
    %c0_78 = arith.constant 0 : index
    %c0_79 = arith.constant 0 : index
    %c192 = arith.constant 192 : index
    %207 = vector.load %arg7[%c0_78, %c0_79, %c192] : memref<1x8x576xf32, #tpu.memory_space<vmem>>, vector<1x8x24xf32>
    %208 = vector.shape_cast %207 : vector<1x8x24xf32> to vector<8x24xf32>
    %209 = vector.shape_cast %206 : vector<8x24xf32> to vector<1x8x24xf32>
    tpu.vector_store %arg7[%c0_78, %c0_79, %c192], %209 {strides = array<i32>} : memref<1x8x576xf32, #tpu.memory_space<vmem>>, vector<1x8x24xf32>,
    %210 = vector.extract_strided_slice %77 {offsets = [0, 472], sizes = [8, 24], strides = [1, 1]} : vector<8x1148xf32> to vector<8x24xf32>
    %c0_80 = arith.constant 0 : index
    %c0_81 = arith.constant 0 : index
    %c216 = arith.constant 216 : index
    %211 = vector.load %arg7[%c0_80, %c0_81, %c216] : memref<1x8x576xf32, #tpu.memory_space<vmem>>, vector<1x8x24xf32>
    %212 = vector.shape_cast %211 : vector<1x8x24xf32> to vector<8x24xf32>
    %213 = vector.shape_cast %210 : vector<8x24xf32> to vector<1x8x24xf32>
    tpu.vector_store %arg7[%c0_80, %c0_81, %c216], %213 {strides = array<i32>} : memref<1x8x576xf32, #tpu.memory_space<vmem>>, vector<1x8x24xf32>,
    %214 = vector.extract_strided_slice %77 {offsets = [0, 508], sizes = [8, 24], strides = [1, 1]} : vector<8x1148xf32> to vector<8x24xf32>
    %c0_82 = arith.constant 0 : index
    %c0_83 = arith.constant 0 : index
    %c240 = arith.constant 240 : index
    %215 = vector.load %arg7[%c0_82, %c0_83, %c240] : memref<1x8x576xf32, #tpu.memory_space<vmem>>, vector<1x8x24xf32>
    %216 = vector.shape_cast %215 : vector<1x8x24xf32> to vector<8x24xf32>
    %217 = vector.shape_cast %214 : vector<8x24xf32> to vector<1x8x24xf32>
    tpu.vector_store %arg7[%c0_82, %c0_83, %c240], %217 {strides = array<i32>} : memref<1x8x576xf32, #tpu.memory_space<vmem>>, vector<1x8x24xf32>,
    %218 = vector.extract_strided_slice %77 {offsets = [0, 544], sizes = [8, 24], strides = [1, 1]} : vector<8x1148xf32> to vector<8x24xf32>
    %c0_84 = arith.constant 0 : index
    %c0_85 = arith.constant 0 : index
    %c264 = arith.constant 264 : index
    %219 = vector.load %arg7[%c0_84, %c0_85, %c264] : memref<1x8x576xf32, #tpu.memory_space<vmem>>, vector<1x8x24xf32>
    %220 = vector.shape_cast %219 : vector<1x8x24xf32> to vector<8x24xf32>
    %221 = vector.shape_cast %218 : vector<8x24xf32> to vector<1x8x24xf32>
    tpu.vector_store %arg7[%c0_84, %c0_85, %c264], %221 {strides = array<i32>} : memref<1x8x576xf32, #tpu.memory_space<vmem>>, vector<1x8x24xf32>,
    %222 = vector.extract_strided_slice %77 {offsets = [0, 580], sizes = [8, 24], strides = [1, 1]} : vector<8x1148xf32> to vector<8x24xf32>
    %c0_86 = arith.constant 0 : index
    %c0_87 = arith.constant 0 : index
    %c288 = arith.constant 288 : index
    %223 = vector.load %arg7[%c0_86, %c0_87, %c288] : memref<1x8x576xf32, #tpu.memory_space<vmem>>, vector<1x8x24xf32>
    %224 = vector.shape_cast %223 : vector<1x8x24xf32> to vector<8x24xf32>
    %225 = vector.shape_cast %222 : vector<8x24xf32> to vector<1x8x24xf32>
    tpu.vector_store %arg7[%c0_86, %c0_87, %c288], %225 {strides = array<i32>} : memref<1x8x576xf32, #tpu.memory_space<vmem>>, vector<1x8x24xf32>,
    %226 = vector.extract_strided_slice %77 {offsets = [0, 616], sizes = [8, 24], strides = [1, 1]} : vector<8x1148xf32> to vector<8x24xf32>
    %c0_88 = arith.constant 0 : index
    %c0_89 = arith.constant 0 : index
    %c312 = arith.constant 312 : index
    %227 = vector.load %arg7[%c0_88, %c0_89, %c312] : memref<1x8x576xf32, #tpu.memory_space<vmem>>, vector<1x8x24xf32>
    %228 = vector.shape_cast %227 : vector<1x8x24xf32> to vector<8x24xf32>
    %229 = vector.shape_cast %226 : vector<8x24xf32> to vector<1x8x24xf32>
    tpu.vector_store %arg7[%c0_88, %c0_89, %c312], %229 {strides = array<i32>} : memref<1x8x576xf32, #tpu.memory_space<vmem>>, vector<1x8x24xf32>,
    %230 = vector.extract_strided_slice %77 {offsets = [0, 652], sizes = [8, 24], strides = [1, 1]} : vector<8x1148xf32> to vector<8x24xf32>
    %c0_90 = arith.constant 0 : index
    %c0_91 = arith.constant 0 : index
    %c336 = arith.constant 336 : index
    %231 = vector.load %arg7[%c0_90, %c0_91, %c336] : memref<1x8x576xf32, #tpu.memory_space<vmem>>, vector<1x8x24xf32>
    %232 = vector.shape_cast %231 : vector<1x8x24xf32> to vector<8x24xf32>
    %233 = vector.shape_cast %230 : vector<8x24xf32> to vector<1x8x24xf32>
    tpu.vector_store %arg7[%c0_90, %c0_91, %c336], %233 {strides = array<i32>} : memref<1x8x576xf32, #tpu.memory_space<vmem>>, vector<1x8x24xf32>,
    %234 = vector.extract_strided_slice %77 {offsets = [0, 688], sizes = [8, 24], strides = [1, 1]} : vector<8x1148xf32> to vector<8x24xf32>
    %c0_92 = arith.constant 0 : index
    %c0_93 = arith.constant 0 : index
    %c360 = arith.constant 360 : index
    %235 = vector.load %arg7[%c0_92, %c0_93, %c360] : memref<1x8x576xf32, #tpu.memory_space<vmem>>, vector<1x8x24xf32>
    %236 = vector.shape_cast %235 : vector<1x8x24xf32> to vector<8x24xf32>
    %237 = vector.shape_cast %234 : vector<8x24xf32> to vector<1x8x24xf32>
    tpu.vector_store %arg7[%c0_92, %c0_93, %c360], %237 {strides = array<i32>} : memref<1x8x576xf32, #tpu.memory_space<vmem>>, vector<1x8x24xf32>,
    %238 = vector.extract_strided_slice %77 {offsets = [0, 724], sizes = [8, 24], strides = [1, 1]} : vector<8x1148xf32> to vector<8x24xf32>
    %c0_94 = arith.constant 0 : index
    %c0_95 = arith.constant 0 : index
    %c384 = arith.constant 384 : index
    %239 = vector.load %arg7[%c0_94, %c0_95, %c384] : memref<1x8x576xf32, #tpu.memory_space<vmem>>, vector<1x8x24xf32>
    %240 = vector.shape_cast %239 : vector<1x8x24xf32> to vector<8x24xf32>
    %241 = vector.shape_cast %238 : vector<8x24xf32> to vector<1x8x24xf32>
    tpu.vector_store %arg7[%c0_94, %c0_95, %c384], %241 {strides = array<i32>} : memref<1x8x576xf32, #tpu.memory_space<vmem>>, vector<1x8x24xf32>,
    %242 = vector.extract_strided_slice %77 {offsets = [0, 760], sizes = [8, 24], strides = [1, 1]} : vector<8x1148xf32> to vector<8x24xf32>
    %c0_96 = arith.constant 0 : index
    %c0_97 = arith.constant 0 : index
    %c408 = arith.constant 408 : index
    %243 = vector.load %arg7[%c0_96, %c0_97, %c408] : memref<1x8x576xf32, #tpu.memory_space<vmem>>, vector<1x8x24xf32>
    %244 = vector.shape_cast %243 : vector<1x8x24xf32> to vector<8x24xf32>
    %245 = vector.shape_cast %242 : vector<8x24xf32> to vector<1x8x24xf32>
    tpu.vector_store %arg7[%c0_96, %c0_97, %c408], %245 {strides = array<i32>} : memref<1x8x576xf32, #tpu.memory_space<vmem>>, vector<1x8x24xf32>,
    %246 = vector.extract_strided_slice %77 {offsets = [0, 796], sizes = [8, 24], strides = [1, 1]} : vector<8x1148xf32> to vector<8x24xf32>
    %c0_98 = arith.constant 0 : index
    %c0_99 = arith.constant 0 : index
    %c432 = arith.constant 432 : index
    %247 = vector.load %arg7[%c0_98, %c0_99, %c432] : memref<1x8x576xf32, #tpu.memory_space<vmem>>, vector<1x8x24xf32>
    %248 = vector.shape_cast %247 : vector<1x8x24xf32> to vector<8x24xf32>
    %249 = vector.shape_cast %246 : vector<8x24xf32> to vector<1x8x24xf32>
    tpu.vector_store %arg7[%c0_98, %c0_99, %c432], %249 {strides = array<i32>} : memref<1x8x576xf32, #tpu.memory_space<vmem>>, vector<1x8x24xf32>,
    %250 = vector.extract_strided_slice %77 {offsets = [0, 832], sizes = [8, 24], strides = [1, 1]} : vector<8x1148xf32> to vector<8x24xf32>
    %c0_100 = arith.constant 0 : index
    %c0_101 = arith.constant 0 : index
    %c456 = arith.constant 456 : index
    %251 = vector.load %arg7[%c0_100, %c0_101, %c456] : memref<1x8x576xf32, #tpu.memory_space<vmem>>, vector<1x8x24xf32>
    %252 = vector.shape_cast %251 : vector<1x8x24xf32> to vector<8x24xf32>
    %253 = vector.shape_cast %250 : vector<8x24xf32> to vector<1x8x24xf32>
    tpu.vector_store %arg7[%c0_100, %c0_101, %c456], %253 {strides = array<i32>} : memref<1x8x576xf32, #tpu.memory_space<vmem>>, vector<1x8x24xf32>,
    %254 = vector.extract_strided_slice %77 {offsets = [0, 868], sizes = [8, 24], strides = [1, 1]} : vector<8x1148xf32> to vector<8x24xf32>
    %c0_102 = arith.constant 0 : index
    %c0_103 = arith.constant 0 : index
    %c480 = arith.constant 480 : index
    %255 = vector.load %arg7[%c0_102, %c0_103, %c480] : memref<1x8x576xf32, #tpu.memory_space<vmem>>, vector<1x8x24xf32>
    %256 = vector.shape_cast %255 : vector<1x8x24xf32> to vector<8x24xf32>
    %257 = vector.shape_cast %254 : vector<8x24xf32> to vector<1x8x24xf32>
    tpu.vector_store %arg7[%c0_102, %c0_103, %c480], %257 {strides = array<i32>} : memref<1x8x576xf32, #tpu.memory_space<vmem>>, vector<1x8x24xf32>,
    %258 = vector.extract_strided_slice %77 {offsets = [0, 904], sizes = [8, 24], strides = [1, 1]} : vector<8x1148xf32> to vector<8x24xf32>
    %c0_104 = arith.constant 0 : index
    %c0_105 = arith.constant 0 : index
    %c504 = arith.constant 504 : index
    %259 = vector.load %arg7[%c0_104, %c0_105, %c504] : memref<1x8x576xf32, #tpu.memory_space<vmem>>, vector<1x8x24xf32>
    %260 = vector.shape_cast %259 : vector<1x8x24xf32> to vector<8x24xf32>
    %261 = vector.shape_cast %258 : vector<8x24xf32> to vector<1x8x24xf32>
    tpu.vector_store %arg7[%c0_104, %c0_105, %c504], %261 {strides = array<i32>} : memref<1x8x576xf32, #tpu.memory_space<vmem>>, vector<1x8x24xf32>,
    %262 = vector.extract_strided_slice %77 {offsets = [0, 940], sizes = [8, 24], strides = [1, 1]} : vector<8x1148xf32> to vector<8x24xf32>
    %c0_106 = arith.constant 0 : index
    %c0_107 = arith.constant 0 : index
    %c528 = arith.constant 528 : index
    %263 = vector.load %arg7[%c0_106, %c0_107, %c528] : memref<1x8x576xf32, #tpu.memory_space<vmem>>, vector<1x8x24xf32>
    %264 = vector.shape_cast %263 : vector<1x8x24xf32> to vector<8x24xf32>
    %265 = vector.shape_cast %262 : vector<8x24xf32> to vector<1x8x24xf32>
    tpu.vector_store %arg7[%c0_106, %c0_107, %c528], %265 {strides = array<i32>} : memref<1x8x576xf32, #tpu.memory_space<vmem>>, vector<1x8x24xf32>,
    %266 = vector.extract_strided_slice %77 {offsets = [0, 976], sizes = [8, 24], strides = [1, 1]} : vector<8x1148xf32> to vector<8x24xf32>
    %c0_108 = arith.constant 0 : index
    %c0_109 = arith.constant 0 : index
    %c552 = arith.constant 552 : index
    %267 = vector.load %arg7[%c0_108, %c0_109, %c552] : memref<1x8x576xf32, #tpu.memory_space<vmem>>, vector<1x8x24xf32>
    %268 = vector.shape_cast %267 : vector<1x8x24xf32> to vector<8x24xf32>
    %269 = vector.shape_cast %266 : vector<8x24xf32> to vector<1x8x24xf32>
    tpu.vector_store %arg7[%c0_108, %c0_109, %c552], %269 {strides = array<i32>} : memref<1x8x576xf32, #tpu.memory_space<vmem>>, vector<1x8x24xf32>,
    return
  }
  func.func @transform_0(%arg0: i32) -> (i32, i32, i32) {
    %c0_i32 = arith.constant 0 : i32
    %c0_i32_0 = arith.constant 0 : i32
    %c0_i32_1 = arith.constant 0 : i32
    return %arg0, %c0_i32, %c0_i32_0 : i32, i32, i32
  }
  func.func @transform_1(%arg0: i32) -> (i32, i32) {
    %c0_i32 = arith.constant 0 : i32
    %c0_i32_0 = arith.constant 0 : i32
    %c0_i32_1 = arith.constant 0 : i32
    return %c0_i32, %c0_i32_0 : i32, i32
  }
  func.func @transform_2(%arg0: i32) -> (i32, i32) {
    %c0_i32 = arith.constant 0 : i32
    %c0_i32_0 = arith.constant 0 : i32
    %c0_i32_1 = arith.constant 0 : i32
    return %c0_i32, %c0_i32_0 : i32, i32
  }
  func.func @transform_3(%arg0: i32) -> (i32, i32) {
    %c0_i32 = arith.constant 0 : i32
    %c0_i32_0 = arith.constant 0 : i32
    %c0_i32_1 = arith.constant 0 : i32
    return %c0_i32, %c0_i32_0 : i32, i32
  }
  func.func @transform_4(%arg0: i32) -> (i32, i32) {
    %c0_i32 = arith.constant 0 : i32
    %c0_i32_0 = arith.constant 0 : i32
    %c0_i32_1 = arith.constant 0 : i32
    return %c0_i32, %c0_i32_0 : i32, i32
  }
  func.func @transform_5(%arg0: i32) -> (i32, i32, i32, i32) {
    %c0_i32 = arith.constant 0 : i32
    %c0_i32_0 = arith.constant 0 : i32
    %c0_i32_1 = arith.constant 0 : i32
    %c0_i32_2 = arith.constant 0 : i32
    return %arg0, %c0_i32, %c0_i32_0, %c0_i32_1 : i32, i32, i32, i32
  }
  func.func @transform_6(%arg0: i32) -> (i32, i32, i32) {
    %c0_i32 = arith.constant 0 : i32
    %c0_i32_0 = arith.constant 0 : i32
    %c0_i32_1 = arith.constant 0 : i32
    return %arg0, %c0_i32, %c0_i32_0 : i32, i32, i32
  }
}

module attributes {stable_mosaic.version = 11 : i64} {
  func.func @_chain_b_kernel(%arg0: i32, %arg1: memref<1x8x256xf32, #tpu.memory_space<vmem>>, %arg2: memref<1x8x256xf32, #tpu.memory_space<vmem>>, %arg3: memref<16x72xf32, #tpu.memory_space<vmem>>, %arg4: memref<16x1xf32, #tpu.memory_space<vmem>>, %arg5: memref<16x144xf32, #tpu.memory_space<vmem>>, %arg6: memref<16x1xf32, #tpu.memory_space<vmem>>, %arg7: memref<64x16xf32, #tpu.memory_space<vmem>>, %arg8: memref<64x1xf32, #tpu.memory_space<vmem>>, %arg9: memref<1x64x256xf32, #tpu.memory_space<vmem>>) attributes {dimension_semantics = [#tpu.dimension_semantics<parallel>], iteration_bounds = array<i64: 2>, scalar_prefetch = 0 : i64, scratch_operands = 0 : i64, tpu.core_type = #tpu.core_type<tc>, window_params = [{transform_indices = @transform_0, window_bounds = array<i64: 1, 8, 256>}, {transform_indices = @transform_1, window_bounds = array<i64: 1, 8, 256>}, {pipeline_mode = #tpu.pipeline_mode<synchronous>, transform_indices = @transform_2, window_bounds = array<i64: 16, 72>}, {pipeline_mode = #tpu.pipeline_mode<synchronous>, transform_indices = @transform_3, window_bounds = array<i64: 16, 1>}, {pipeline_mode = #tpu.pipeline_mode<synchronous>, transform_indices = @transform_4, window_bounds = array<i64: 16, 144>}, {pipeline_mode = #tpu.pipeline_mode<synchronous>, transform_indices = @transform_5, window_bounds = array<i64: 16, 1>}, {pipeline_mode = #tpu.pipeline_mode<synchronous>, transform_indices = @transform_6, window_bounds = array<i64: 64, 16>}, {pipeline_mode = #tpu.pipeline_mode<synchronous>, transform_indices = @transform_7, window_bounds = array<i64: 64, 1>}, {transform_indices = @transform_8, window_bounds = array<i64: 1, 64, 256>}]} {
    %c0 = arith.constant 0 : index
    %c0_0 = arith.constant 0 : index
    %c0_1 = arith.constant 0 : index
    %0 = vector.load %arg1[%c0, %c0_0, %c0_1] : memref<1x8x256xf32, #tpu.memory_space<vmem>>, vector<1x8x256xf32>
    %1 = vector.shape_cast %0 : vector<1x8x256xf32> to vector<8x256xf32>
    %c0_2 = arith.constant 0 : index
    %c0_3 = arith.constant 0 : index
    %c0_4 = arith.constant 0 : index
    %2 = vector.load %arg2[%c0_2, %c0_3, %c0_4] : memref<1x8x256xf32, #tpu.memory_space<vmem>>, vector<1x8x256xf32>
    %3 = vector.shape_cast %2 : vector<1x8x256xf32> to vector<8x256xf32>
    %4 = arith.maximumf %1, %3 : vector<8x256xf32>
    %5 = vector.extract_strided_slice %4 {offsets = [0, 0], sizes = [8, 222], strides = [1, 1]} : vector<8x256xf32> to vector<8x222xf32>
    %6 = vector.extract_strided_slice %4 {offsets = [0, 1], sizes = [8, 222], strides = [1, 1]} : vector<8x256xf32> to vector<8x222xf32>
    %7 = vector.extract_strided_slice %4 {offsets = [0, 2], sizes = [8, 222], strides = [1, 1]} : vector<8x256xf32> to vector<8x222xf32>
    %8 = vector.extract_strided_slice %4 {offsets = [0, 16], sizes = [8, 222], strides = [1, 1]} : vector<8x256xf32> to vector<8x222xf32>
    %9 = vector.extract_strided_slice %4 {offsets = [0, 17], sizes = [8, 222], strides = [1, 1]} : vector<8x256xf32> to vector<8x222xf32>
    %10 = vector.extract_strided_slice %4 {offsets = [0, 18], sizes = [8, 222], strides = [1, 1]} : vector<8x256xf32> to vector<8x222xf32>
    %11 = vector.extract_strided_slice %4 {offsets = [0, 32], sizes = [8, 222], strides = [1, 1]} : vector<8x256xf32> to vector<8x222xf32>
    %12 = vector.extract_strided_slice %4 {offsets = [0, 33], sizes = [8, 222], strides = [1, 1]} : vector<8x256xf32> to vector<8x222xf32>
    %13 = vector.extract_strided_slice %4 {offsets = [0, 34], sizes = [8, 222], strides = [1, 1]} : vector<8x256xf32> to vector<8x222xf32>
    %14 = tpu.concatenate %5, %6, %7, %8, %9, %10, %11, %12, %13 in 0 : vector<8x222xf32>, vector<8x222xf32>, vector<8x222xf32>, vector<8x222xf32>, vector<8x222xf32>, vector<8x222xf32>, vector<8x222xf32>, vector<8x222xf32>, vector<8x222xf32> -> vector<72x222xf32>
    %c0_5 = arith.constant 0 : index
    %c0_6 = arith.constant 0 : index
    %15 = vector.load %arg3[%c0_5, %c0_6] : memref<16x72xf32, #tpu.memory_space<vmem>>, vector<16x72xf32>
    %cst = arith.constant dense<0.000000e+00> : vector<16x222xf32>
    %16 = tpu.matmul %15, %14, %cst {dimension_numbers = #tpu.dot_dimension_numbers<[1], [0], [0], [1], [0, 0, 1, 1], [], []>} : vector<16x72xf32>, vector<72x222xf32>, vector<16x222xf32> -> vector<16x222xf32>
    %c0_7 = arith.constant 0 : index
    %c0_8 = arith.constant 0 : index
    %17 = vector.load %arg4[%c0_7, %c0_8] : memref<16x1xf32, #tpu.memory_space<vmem>>, vector<16x1xf32>
    %18 = vector.broadcast %17 : vector<16x1xf32> to vector<16x222xf32>
    %19 = arith.addf %16, %18 : vector<16x222xf32>
    %cst_9 = arith.constant 0.000000e+00 : f32
    %20 = vector.broadcast %cst_9 : f32 to vector<16x222xf32>
    %21 = arith.maximumf %19, %20 : vector<16x222xf32>
    %22 = vector.extract_strided_slice %21 {offsets = [0, 0], sizes = [16, 188], strides = [1, 1]} : vector<16x222xf32> to vector<16x188xf32>
    %23 = vector.extract_strided_slice %21 {offsets = [0, 1], sizes = [16, 188], strides = [1, 1]} : vector<16x222xf32> to vector<16x188xf32>
    %24 = vector.extract_strided_slice %21 {offsets = [0, 2], sizes = [16, 188], strides = [1, 1]} : vector<16x222xf32> to vector<16x188xf32>
    %25 = vector.extract_strided_slice %21 {offsets = [0, 16], sizes = [16, 188], strides = [1, 1]} : vector<16x222xf32> to vector<16x188xf32>
    %26 = vector.extract_strided_slice %21 {offsets = [0, 17], sizes = [16, 188], strides = [1, 1]} : vector<16x222xf32> to vector<16x188xf32>
    %27 = vector.extract_strided_slice %21 {offsets = [0, 18], sizes = [16, 188], strides = [1, 1]} : vector<16x222xf32> to vector<16x188xf32>
    %28 = vector.extract_strided_slice %21 {offsets = [0, 32], sizes = [16, 188], strides = [1, 1]} : vector<16x222xf32> to vector<16x188xf32>
    %29 = vector.extract_strided_slice %21 {offsets = [0, 33], sizes = [16, 188], strides = [1, 1]} : vector<16x222xf32> to vector<16x188xf32>
    %30 = vector.extract_strided_slice %21 {offsets = [0, 34], sizes = [16, 188], strides = [1, 1]} : vector<16x222xf32> to vector<16x188xf32>
    %31 = tpu.concatenate %22, %23, %24, %25, %26, %27, %28, %29, %30 in 0 : vector<16x188xf32>, vector<16x188xf32>, vector<16x188xf32>, vector<16x188xf32>, vector<16x188xf32>, vector<16x188xf32>, vector<16x188xf32>, vector<16x188xf32>, vector<16x188xf32> -> vector<144x188xf32>
    %c0_10 = arith.constant 0 : index
    %c0_11 = arith.constant 0 : index
    %32 = vector.load %arg5[%c0_10, %c0_11] : memref<16x144xf32, #tpu.memory_space<vmem>>, vector<16x144xf32>
    %cst_12 = arith.constant dense<0.000000e+00> : vector<16x188xf32>
    %33 = tpu.matmul %32, %31, %cst_12 {dimension_numbers = #tpu.dot_dimension_numbers<[1], [0], [0], [1], [0, 0, 1, 1], [], []>} : vector<16x144xf32>, vector<144x188xf32>, vector<16x188xf32> -> vector<16x188xf32>
    %c0_13 = arith.constant 0 : index
    %c0_14 = arith.constant 0 : index
    %34 = vector.load %arg6[%c0_13, %c0_14] : memref<16x1xf32, #tpu.memory_space<vmem>>, vector<16x1xf32>
    %35 = vector.broadcast %34 : vector<16x1xf32> to vector<16x188xf32>
    %36 = arith.addf %33, %35 : vector<16x188xf32>
    %cst_15 = arith.constant 0.000000e+00 : f32
    %37 = vector.broadcast %cst_15 : f32 to vector<16x188xf32>
    %38 = arith.maximumf %36, %37 : vector<16x188xf32>
    %c0_16 = arith.constant 0 : index
    %c0_17 = arith.constant 0 : index
    %39 = vector.load %arg7[%c0_16, %c0_17] : memref<64x16xf32, #tpu.memory_space<vmem>>, vector<64x16xf32>
    %cst_18 = arith.constant dense<0.000000e+00> : vector<64x188xf32>
    %40 = tpu.matmul %39, %38, %cst_18 {dimension_numbers = #tpu.dot_dimension_numbers<[1], [0], [0], [1], [0, 0, 1, 1], [], []>} : vector<64x16xf32>, vector<16x188xf32>, vector<64x188xf32> -> vector<64x188xf32>
    %c0_19 = arith.constant 0 : index
    %c0_20 = arith.constant 0 : index
    %41 = vector.load %arg8[%c0_19, %c0_20] : memref<64x1xf32, #tpu.memory_space<vmem>>, vector<64x1xf32>
    %42 = vector.broadcast %41 : vector<64x1xf32> to vector<64x188xf32>
    %43 = arith.addf %40, %42 : vector<64x188xf32>
    %cst_21 = arith.constant 0.000000e+00 : f32
    %44 = vector.broadcast %cst_21 : f32 to vector<64x68xf32>
    %45 = tpu.concatenate %43, %44 in 1 : vector<64x188xf32>, vector<64x68xf32> -> vector<64x256xf32>
    %c0_22 = arith.constant 0 : index
    %c0_23 = arith.constant 0 : index
    %c0_24 = arith.constant 0 : index
    %46 = vector.load %arg9[%c0_22, %c0_23, %c0_24] : memref<1x64x256xf32, #tpu.memory_space<vmem>>, vector<1x64x256xf32>
    %47 = vector.shape_cast %46 : vector<1x64x256xf32> to vector<64x256xf32>
    %48 = vector.shape_cast %45 : vector<64x256xf32> to vector<1x64x256xf32>
    tpu.vector_store %arg9[%c0_22, %c0_23, %c0_24], %48 {strides = array<i32>} : memref<1x64x256xf32, #tpu.memory_space<vmem>>, vector<1x64x256xf32>,
    return
  }
  func.func @transform_0(%arg0: i32) -> (i32, i32, i32) {
    %c0_i32 = arith.constant 0 : i32
    %c0_i32_0 = arith.constant 0 : i32
    %c0_i32_1 = arith.constant 0 : i32
    return %arg0, %c0_i32, %c0_i32_0 : i32, i32, i32
  }
  func.func @transform_1(%arg0: i32) -> (i32, i32, i32) {
    %c0_i32 = arith.constant 0 : i32
    %c0_i32_0 = arith.constant 0 : i32
    %c0_i32_1 = arith.constant 0 : i32
    return %arg0, %c0_i32, %c0_i32_0 : i32, i32, i32
  }
  func.func @transform_2(%arg0: i32) -> (i32, i32) {
    %c0_i32 = arith.constant 0 : i32
    %c0_i32_0 = arith.constant 0 : i32
    %c0_i32_1 = arith.constant 0 : i32
    return %c0_i32, %c0_i32_0 : i32, i32
  }
  func.func @transform_3(%arg0: i32) -> (i32, i32) {
    %c0_i32 = arith.constant 0 : i32
    %c0_i32_0 = arith.constant 0 : i32
    %c0_i32_1 = arith.constant 0 : i32
    return %c0_i32, %c0_i32_0 : i32, i32
  }
  func.func @transform_4(%arg0: i32) -> (i32, i32) {
    %c0_i32 = arith.constant 0 : i32
    %c0_i32_0 = arith.constant 0 : i32
    %c0_i32_1 = arith.constant 0 : i32
    return %c0_i32, %c0_i32_0 : i32, i32
  }
  func.func @transform_5(%arg0: i32) -> (i32, i32) {
    %c0_i32 = arith.constant 0 : i32
    %c0_i32_0 = arith.constant 0 : i32
    %c0_i32_1 = arith.constant 0 : i32
    return %c0_i32, %c0_i32_0 : i32, i32
  }
  func.func @transform_6(%arg0: i32) -> (i32, i32) {
    %c0_i32 = arith.constant 0 : i32
    %c0_i32_0 = arith.constant 0 : i32
    %c0_i32_1 = arith.constant 0 : i32
    return %c0_i32, %c0_i32_0 : i32, i32
  }
  func.func @transform_7(%arg0: i32) -> (i32, i32) {
    %c0_i32 = arith.constant 0 : i32
    %c0_i32_0 = arith.constant 0 : i32
    %c0_i32_1 = arith.constant 0 : i32
    return %c0_i32, %c0_i32_0 : i32, i32
  }
  func.func @transform_8(%arg0: i32) -> (i32, i32, i32) {
    %c0_i32 = arith.constant 0 : i32
    %c0_i32_0 = arith.constant 0 : i32
    %c0_i32_1 = arith.constant 0 : i32
    return %arg0, %c0_i32, %c0_i32_0 : i32, i32, i32
  }
}

module attributes {stable_mosaic.version = 11 : i64} {
  func.func @_chain_c_kernel(%arg0: i32, %arg1: memref<1x8x576xf32, #tpu.memory_space<vmem>>, %arg2: memref<1x16x576xf32, #tpu.memory_space<vmem>>, %arg3: memref<8x72xf32, #tpu.memory_space<vmem>>, %arg4: memref<8x144xf32, #tpu.memory_space<vmem>>, %arg5: memref<8x1xf32, #tpu.memory_space<vmem>>, %arg6: memref<8x72xf32, #tpu.memory_space<vmem>>, %arg7: memref<8x1xf32, #tpu.memory_space<vmem>>, %arg8: memref<8x8xf32, #tpu.memory_space<vmem>>, %arg9: memref<8x1xf32, #tpu.memory_space<vmem>>, %arg10: memref<1x8x512xf32, #tpu.memory_space<vmem>>) attributes {dimension_semantics = [#tpu.dimension_semantics<parallel>], iteration_bounds = array<i64: 2>, scalar_prefetch = 0 : i64, scratch_operands = 0 : i64, tpu.core_type = #tpu.core_type<tc>, window_params = [{transform_indices = @transform_0, window_bounds = array<i64: 1, 8, 576>}, {transform_indices = @transform_1, window_bounds = array<i64: 1, 16, 576>}, {pipeline_mode = #tpu.pipeline_mode<synchronous>, transform_indices = @transform_2, window_bounds = array<i64: 8, 72>}, {pipeline_mode = #tpu.pipeline_mode<synchronous>, transform_indices = @transform_3, window_bounds = array<i64: 8, 144>}, {pipeline_mode = #tpu.pipeline_mode<synchronous>, transform_indices = @transform_4, window_bounds = array<i64: 8, 1>}, {pipeline_mode = #tpu.pipeline_mode<synchronous>, transform_indices = @transform_5, window_bounds = array<i64: 8, 72>}, {pipeline_mode = #tpu.pipeline_mode<synchronous>, transform_indices = @transform_6, window_bounds = array<i64: 8, 1>}, {pipeline_mode = #tpu.pipeline_mode<synchronous>, transform_indices = @transform_7, window_bounds = array<i64: 8, 8>}, {pipeline_mode = #tpu.pipeline_mode<synchronous>, transform_indices = @transform_8, window_bounds = array<i64: 8, 1>}, {transform_indices = @transform_9, window_bounds = array<i64: 1, 8, 512>}]} {
    %c0 = arith.constant 0 : index
    %c0_0 = arith.constant 0 : index
    %c0_1 = arith.constant 0 : index
    %0 = vector.load %arg1[%c0, %c0_0, %c0_1] : memref<1x8x576xf32, #tpu.memory_space<vmem>>, vector<1x8x576xf32>
    %1 = vector.shape_cast %0 : vector<1x8x576xf32> to vector<8x576xf32>
    %c0_2 = arith.constant 0 : index
    %c0_3 = arith.constant 0 : index
    %c0_4 = arith.constant 0 : index
    %2 = vector.load %arg2[%c0_2, %c0_3, %c0_4] : memref<1x16x576xf32, #tpu.memory_space<vmem>>, vector<1x16x576xf32>
    %3 = vector.shape_cast %2 : vector<1x16x576xf32> to vector<16x576xf32>
    %c0_5 = arith.constant 0 : index
    %c0_6 = arith.constant 0 : index
    %4 = vector.load %arg3[%c0_5, %c0_6] : memref<8x72xf32, #tpu.memory_space<vmem>>, vector<8x72xf32>
    %5 = vector.extract_strided_slice %1 {offsets = [0, 0], sizes = [8, 526], strides = [1, 1]} : vector<8x576xf32> to vector<8x526xf32>
    %6 = vector.extract_strided_slice %1 {offsets = [0, 1], sizes = [8, 526], strides = [1, 1]} : vector<8x576xf32> to vector<8x526xf32>
    %7 = vector.extract_strided_slice %1 {offsets = [0, 2], sizes = [8, 526], strides = [1, 1]} : vector<8x576xf32> to vector<8x526xf32>
    %8 = vector.extract_strided_slice %1 {offsets = [0, 24], sizes = [8, 526], strides = [1, 1]} : vector<8x576xf32> to vector<8x526xf32>
    %9 = vector.extract_strided_slice %1 {offsets = [0, 25], sizes = [8, 526], strides = [1, 1]} : vector<8x576xf32> to vector<8x526xf32>
    %10 = vector.extract_strided_slice %1 {offsets = [0, 26], sizes = [8, 526], strides = [1, 1]} : vector<8x576xf32> to vector<8x526xf32>
    %11 = vector.extract_strided_slice %1 {offsets = [0, 48], sizes = [8, 526], strides = [1, 1]} : vector<8x576xf32> to vector<8x526xf32>
    %12 = vector.extract_strided_slice %1 {offsets = [0, 49], sizes = [8, 526], strides = [1, 1]} : vector<8x576xf32> to vector<8x526xf32>
    %13 = vector.extract_strided_slice %1 {offsets = [0, 50], sizes = [8, 526], strides = [1, 1]} : vector<8x576xf32> to vector<8x526xf32>
    %14 = tpu.concatenate %5, %6, %7, %8, %9, %10, %11, %12, %13 in 0 : vector<8x526xf32>, vector<8x526xf32>, vector<8x526xf32>, vector<8x526xf32>, vector<8x526xf32>, vector<8x526xf32>, vector<8x526xf32>, vector<8x526xf32>, vector<8x526xf32> -> vector<72x526xf32>
    %cst = arith.constant dense<0.000000e+00> : vector<8x526xf32>
    %15 = tpu.matmul %4, %14, %cst {dimension_numbers = #tpu.dot_dimension_numbers<[1], [0], [0], [1], [0, 0, 1, 1], [], []>} : vector<8x72xf32>, vector<72x526xf32>, vector<8x526xf32> -> vector<8x526xf32>
    %c0_7 = arith.constant 0 : index
    %c0_8 = arith.constant 0 : index
    %16 = vector.load %arg4[%c0_7, %c0_8] : memref<8x144xf32, #tpu.memory_space<vmem>>, vector<8x144xf32>
    %17 = vector.extract_strided_slice %3 {offsets = [0, 0], sizes = [16, 526], strides = [1, 1]} : vector<16x576xf32> to vector<16x526xf32>
    %18 = vector.extract_strided_slice %3 {offsets = [0, 1], sizes = [16, 526], strides = [1, 1]} : vector<16x576xf32> to vector<16x526xf32>
    %19 = vector.extract_strided_slice %3 {offsets = [0, 2], sizes = [16, 526], strides = [1, 1]} : vector<16x576xf32> to vector<16x526xf32>
    %20 = vector.extract_strided_slice %3 {offsets = [0, 24], sizes = [16, 526], strides = [1, 1]} : vector<16x576xf32> to vector<16x526xf32>
    %21 = vector.extract_strided_slice %3 {offsets = [0, 25], sizes = [16, 526], strides = [1, 1]} : vector<16x576xf32> to vector<16x526xf32>
    %22 = vector.extract_strided_slice %3 {offsets = [0, 26], sizes = [16, 526], strides = [1, 1]} : vector<16x576xf32> to vector<16x526xf32>
    %23 = vector.extract_strided_slice %3 {offsets = [0, 48], sizes = [16, 526], strides = [1, 1]} : vector<16x576xf32> to vector<16x526xf32>
    %24 = vector.extract_strided_slice %3 {offsets = [0, 49], sizes = [16, 526], strides = [1, 1]} : vector<16x576xf32> to vector<16x526xf32>
    %25 = vector.extract_strided_slice %3 {offsets = [0, 50], sizes = [16, 526], strides = [1, 1]} : vector<16x576xf32> to vector<16x526xf32>
    %26 = tpu.concatenate %17, %18, %19, %20, %21, %22, %23, %24, %25 in 0 : vector<16x526xf32>, vector<16x526xf32>, vector<16x526xf32>, vector<16x526xf32>, vector<16x526xf32>, vector<16x526xf32>, vector<16x526xf32>, vector<16x526xf32>, vector<16x526xf32> -> vector<144x526xf32>
    %cst_9 = arith.constant dense<0.000000e+00> : vector<8x526xf32>
    %27 = tpu.matmul %16, %26, %cst_9 {dimension_numbers = #tpu.dot_dimension_numbers<[1], [0], [0], [1], [0, 0, 1, 1], [], []>} : vector<8x144xf32>, vector<144x526xf32>, vector<8x526xf32> -> vector<8x526xf32>
    %28 = arith.addf %15, %27 : vector<8x526xf32>
    %c0_10 = arith.constant 0 : index
    %c0_11 = arith.constant 0 : index
    %29 = vector.load %arg5[%c0_10, %c0_11] : memref<8x1xf32, #tpu.memory_space<vmem>>, vector<8x1xf32>
    %30 = vector.broadcast %29 : vector<8x1xf32> to vector<8x526xf32>
    %31 = arith.addf %28, %30 : vector<8x526xf32>
    %cst_12 = arith.constant 0.000000e+00 : f32
    %32 = vector.broadcast %cst_12 : f32 to vector<8x526xf32>
    %33 = arith.maximumf %31, %32 : vector<8x526xf32>
    %34 = vector.extract_strided_slice %33 {offsets = [0, 0], sizes = [8, 476], strides = [1, 1]} : vector<8x526xf32> to vector<8x476xf32>
    %35 = vector.extract_strided_slice %33 {offsets = [0, 1], sizes = [8, 476], strides = [1, 1]} : vector<8x526xf32> to vector<8x476xf32>
    %36 = vector.extract_strided_slice %33 {offsets = [0, 2], sizes = [8, 476], strides = [1, 1]} : vector<8x526xf32> to vector<8x476xf32>
    %37 = vector.extract_strided_slice %33 {offsets = [0, 24], sizes = [8, 476], strides = [1, 1]} : vector<8x526xf32> to vector<8x476xf32>
    %38 = vector.extract_strided_slice %33 {offsets = [0, 25], sizes = [8, 476], strides = [1, 1]} : vector<8x526xf32> to vector<8x476xf32>
    %39 = vector.extract_strided_slice %33 {offsets = [0, 26], sizes = [8, 476], strides = [1, 1]} : vector<8x526xf32> to vector<8x476xf32>
    %40 = vector.extract_strided_slice %33 {offsets = [0, 48], sizes = [8, 476], strides = [1, 1]} : vector<8x526xf32> to vector<8x476xf32>
    %41 = vector.extract_strided_slice %33 {offsets = [0, 49], sizes = [8, 476], strides = [1, 1]} : vector<8x526xf32> to vector<8x476xf32>
    %42 = vector.extract_strided_slice %33 {offsets = [0, 50], sizes = [8, 476], strides = [1, 1]} : vector<8x526xf32> to vector<8x476xf32>
    %43 = tpu.concatenate %34, %35, %36, %37, %38, %39, %40, %41, %42 in 0 : vector<8x476xf32>, vector<8x476xf32>, vector<8x476xf32>, vector<8x476xf32>, vector<8x476xf32>, vector<8x476xf32>, vector<8x476xf32>, vector<8x476xf32>, vector<8x476xf32> -> vector<72x476xf32>
    %c0_13 = arith.constant 0 : index
    %c0_14 = arith.constant 0 : index
    %44 = vector.load %arg6[%c0_13, %c0_14] : memref<8x72xf32, #tpu.memory_space<vmem>>, vector<8x72xf32>
    %cst_15 = arith.constant dense<0.000000e+00> : vector<8x476xf32>
    %45 = tpu.matmul %44, %43, %cst_15 {dimension_numbers = #tpu.dot_dimension_numbers<[1], [0], [0], [1], [0, 0, 1, 1], [], []>} : vector<8x72xf32>, vector<72x476xf32>, vector<8x476xf32> -> vector<8x476xf32>
    %c0_16 = arith.constant 0 : index
    %c0_17 = arith.constant 0 : index
    %46 = vector.load %arg7[%c0_16, %c0_17] : memref<8x1xf32, #tpu.memory_space<vmem>>, vector<8x1xf32>
    %47 = vector.broadcast %46 : vector<8x1xf32> to vector<8x476xf32>
    %48 = arith.addf %45, %47 : vector<8x476xf32>
    %cst_18 = arith.constant 0.000000e+00 : f32
    %49 = vector.broadcast %cst_18 : f32 to vector<8x476xf32>
    %50 = arith.maximumf %48, %49 : vector<8x476xf32>
    %c0_19 = arith.constant 0 : index
    %c0_20 = arith.constant 0 : index
    %51 = vector.load %arg8[%c0_19, %c0_20] : memref<8x8xf32, #tpu.memory_space<vmem>>, vector<8x8xf32>
    %cst_21 = arith.constant dense<0.000000e+00> : vector<8x476xf32>
    %52 = tpu.matmul %51, %50, %cst_21 {dimension_numbers = #tpu.dot_dimension_numbers<[1], [0], [0], [1], [0, 0, 1, 1], [], []>} : vector<8x8xf32>, vector<8x476xf32>, vector<8x476xf32> -> vector<8x476xf32>
    %c0_22 = arith.constant 0 : index
    %c0_23 = arith.constant 0 : index
    %53 = vector.load %arg9[%c0_22, %c0_23] : memref<8x1xf32, #tpu.memory_space<vmem>>, vector<8x1xf32>
    %54 = vector.broadcast %53 : vector<8x1xf32> to vector<8x476xf32>
    %55 = arith.addf %52, %54 : vector<8x476xf32>
    %56 = math.tanh %55 : vector<8x476xf32>
    %cst_24 = arith.constant 0.000000e+00 : f32
    %57 = vector.broadcast %cst_24 : f32 to vector<8x36xf32>
    %58 = tpu.concatenate %56, %57 in 1 : vector<8x476xf32>, vector<8x36xf32> -> vector<8x512xf32>
    %c0_25 = arith.constant 0 : index
    %c0_26 = arith.constant 0 : index
    %c0_27 = arith.constant 0 : index
    %59 = vector.load %arg10[%c0_25, %c0_26, %c0_27] : memref<1x8x512xf32, #tpu.memory_space<vmem>>, vector<1x8x512xf32>
    %60 = vector.shape_cast %59 : vector<1x8x512xf32> to vector<8x512xf32>
    %61 = vector.shape_cast %58 : vector<8x512xf32> to vector<1x8x512xf32>
    tpu.vector_store %arg10[%c0_25, %c0_26, %c0_27], %61 {strides = array<i32>} : memref<1x8x512xf32, #tpu.memory_space<vmem>>, vector<1x8x512xf32>,
    return
  }
  func.func @transform_0(%arg0: i32) -> (i32, i32, i32) {
    %c0_i32 = arith.constant 0 : i32
    %c0_i32_0 = arith.constant 0 : i32
    %c0_i32_1 = arith.constant 0 : i32
    return %arg0, %c0_i32, %c0_i32_0 : i32, i32, i32
  }
  func.func @transform_1(%arg0: i32) -> (i32, i32, i32) {
    %c0_i32 = arith.constant 0 : i32
    %c0_i32_0 = arith.constant 0 : i32
    %c0_i32_1 = arith.constant 0 : i32
    return %arg0, %c0_i32, %c0_i32_0 : i32, i32, i32
  }
  func.func @transform_2(%arg0: i32) -> (i32, i32) {
    %c0_i32 = arith.constant 0 : i32
    %c0_i32_0 = arith.constant 0 : i32
    %c0_i32_1 = arith.constant 0 : i32
    return %c0_i32, %c0_i32_0 : i32, i32
  }
  func.func @transform_3(%arg0: i32) -> (i32, i32) {
    %c0_i32 = arith.constant 0 : i32
    %c0_i32_0 = arith.constant 0 : i32
    %c0_i32_1 = arith.constant 0 : i32
    return %c0_i32, %c0_i32_0 : i32, i32
  }
  func.func @transform_4(%arg0: i32) -> (i32, i32) {
    %c0_i32 = arith.constant 0 : i32
    %c0_i32_0 = arith.constant 0 : i32
    %c0_i32_1 = arith.constant 0 : i32
    return %c0_i32, %c0_i32_0 : i32, i32
  }
  func.func @transform_5(%arg0: i32) -> (i32, i32) {
    %c0_i32 = arith.constant 0 : i32
    %c0_i32_0 = arith.constant 0 : i32
    %c0_i32_1 = arith.constant 0 : i32
    return %c0_i32, %c0_i32_0 : i32, i32
  }
  func.func @transform_6(%arg0: i32) -> (i32, i32) {
    %c0_i32 = arith.constant 0 : i32
    %c0_i32_0 = arith.constant 0 : i32
    %c0_i32_1 = arith.constant 0 : i32
    return %c0_i32, %c0_i32_0 : i32, i32
  }
  func.func @transform_7(%arg0: i32) -> (i32, i32) {
    %c0_i32 = arith.constant 0 : i32
    %c0_i32_0 = arith.constant 0 : i32
    %c0_i32_1 = arith.constant 0 : i32
    return %c0_i32, %c0_i32_0 : i32, i32
  }
  func.func @transform_8(%arg0: i32) -> (i32, i32) {
    %c0_i32 = arith.constant 0 : i32
    %c0_i32_0 = arith.constant 0 : i32
    %c0_i32_1 = arith.constant 0 : i32
    return %c0_i32, %c0_i32_0 : i32, i32
  }
  func.func @transform_9(%arg0: i32) -> (i32, i32, i32) {
    %c0_i32 = arith.constant 0 : i32
    %c0_i32_0 = arith.constant 0 : i32
    %c0_i32_1 = arith.constant 0 : i32
    return %arg0, %c0_i32, %c0_i32_0 : i32, i32, i32
  }
}

</mosaic_0001>

<llo_original>
// kernel: unet_model_forward.4
$region0: #{unet_model_forward.4}
  #allocation0 [shape = 'u32[]', space=smem, size = 0x4, offset = 0x4, fixed_abs, tag = 'smem constant byte address 0x4 - core index']
  #allocation1 [shape = 'u32[72,128]{1,0:T(1,128)}', space=vmem, size = 0x9000, scoped, tag = 'internal scratch']
  %s0 = inlined_call_operand.vmem [shape: f32[2,8,256], index: 0, kind: input, shape index: {}]
  %s1 = inlined_call_operand.vmem [shape: f32[2,8,256], index: 1, kind: input, shape index: {}]
  %s2 = inlined_call_operand.vmem [shape: f32[16,72], index: 2, kind: input, shape index: {}]
  %s3 = inlined_call_operand.vmem [shape: f32[16,1], index: 3, kind: input, shape index: {}]
  %s4 = inlined_call_operand.vmem [shape: f32[16,144], index: 4, kind: input, shape index: {}]
  %s5 = inlined_call_operand.vmem [shape: f32[16,1], index: 5, kind: input, shape index: {}]
  %s6 = inlined_call_operand.vmem [shape: f32[64,16], index: 6, kind: input, shape index: {}]
  %s7 = inlined_call_operand.vmem [shape: f32[64,1], index: 7, kind: input, shape index: {}]
  %s8 = inlined_call_operand.vmem [shape: f32[2,64,256], index: 8, kind: output, shape index: {}]
  %s9 = sld [smem:[#allocation0]]
  $region65: #{unet_model_forward.4} parent=0
    _
  %s11 = ssub.s32 1, %s9
  %s12 = scalar_select 0, %s11, %s9
  loop: start=0, step=1, limit=4
  $region2: #{unet_model_forward.4} parent=0 // loop_pre_header
    _
  $region3: #{unet_model_forward.4} parent=0 // loop_header
    %s14 = sphi 0, %s18
    %p15 = scmp.ge.s32.totalorder %s14, 4
    %s24 = sphi 0, %s26
    %s27 = sphi 0, %s24
    %s28 = sphi 0, %s27
    %s44 = sphi 0, %s28
    %s50 = sphi 0, %s52
    %s53 = sphi 0, %s50
    %s54 = sphi 0, %s53
    %s70 = sphi 0, %s54
    %s74 = sphi 0, %s74
    %s76 = sphi 0, %s74
    %s77 = sphi 0, %s76
    %s91 = sphi 0, %s77
    %s95 = sphi 0, %s95
    %s97 = sphi 0, %s95
    %s98 = sphi 0, %s97
    %s112 = sphi 0, %s98
    %s116 = sphi 0, %s116
    %s118 = sphi 0, %s116
    %s119 = sphi 0, %s118
    %s133 = sphi 0, %s119
    %s137 = sphi 0, %s137
    %s139 = sphi 0, %s137
    %s140 = sphi 0, %s139
    %s154 = sphi 0, %s140
    %s158 = sphi 0, %s158
    %s160 = sphi 0, %s158
    %s161 = sphi 0, %s160
    %s175 = sphi 0, %s161
    %s179 = sphi 0, %s179
    %s181 = sphi 0, %s179
    %s182 = sphi 0, %s181
    %s196 = sphi 0, %s182
    %s202 = sphi 0, %s204
    %s205 = sphi 0, %s202
    %s206 = sphi 0, %s205
    %s222 = sphi 0, %s206
  $region4: #{unet_model_forward.4} parent=0 // loop_header_branch
    %17 = sbr.rel (%p15) target = $region8
  $region5: #{unet_model_forward.4} parent=0 // loop_body
    %s19 = ssub.s32 %s14, 1
    %s20 = ssub.s32 %s14, 2
    %s21 = sadd.s32 %s14, 1
    %s22 = ssub.s32 %s14, %s21
    %p23 = scmp.eq.s32.totalorder %s22, 0
    %s25 = sadd.s32 %s24, 1
    %s26 = scalar_select %p23, %s24, %s25
    %p29 = pneg %p23
    %p30 = scmp.eq.s32.totalorder %s14, 1
    %p31 = por %p29, %p30
    %p32 = scmp.ne.s32.totalorder %s24, %s27
    %p33 = scmp.eq.s32.totalorder %s14, 0
    %p34 = por %p32, %p33
    %p35 = scmp.ne.s32.totalorder %s24, %s27
    %p36 = scmp.eq.s32.totalorder %s19, 1
    %p37 = por %p35, %p36
    %p38 = scmp.ne.s32.totalorder %s27, %s28
    %p39 = scmp.eq.s32.totalorder %s19, 0
    %p40 = por %p38, %p39
    %p41 = scmp.ne.s32.totalorder %s27, %s28
    %p42 = scmp.eq.s32.totalorder %s20, 1
    %p43 = por %p41, %p42
    %p45 = scmp.ne.s32.totalorder %s28, %s44
    %p46 = scmp.eq.s32.totalorder %s20, 0
    %p47 = por %p45, %p46
    %s48 = ssub.s32 %s14, %s21
    %p49 = scmp.eq.s32.totalorder %s48, 0
    %s51 = sadd.s32 %s50, 1
    %s52 = scalar_select %p49, %s50, %s51
    %p55 = pneg %p49
    %p56 = scmp.eq.s32.totalorder %s14, 1
    %p57 = por %p55, %p56
    %p58 = scmp.ne.s32.totalorder %s50, %s53
    %p59 = scmp.eq.s32.totalorder %s14, 0
    %p60 = por %p58, %p59
    %p61 = scmp.ne.s32.totalorder %s50, %s53
    %p62 = scmp.eq.s32.totalorder %s19, 1
    %p63 = por %p61, %p62
    %p64 = scmp.ne.s32.totalorder %s53, %s54
    %p65 = scmp.eq.s32.totalorder %s19, 0
    %p66 = por %p64, %p65
    %p67 = scmp.ne.s32.totalorder %s53, %s54
    %p68 = scmp.eq.s32.totalorder %s20, 1
    %p69 = por %p67, %p68
    %p71 = scmp.ne.s32.totalorder %s54, %s70
    %p72 = scmp.eq.s32.totalorder %s20, 0
    %p73 = por %p71, %p72
    %s75 = sadd.s32 %s74, 1
    %p78 = scmp.eq.s32.totalorder %s14, 1
    %p79 = scmp.ne.s32.totalorder %s74, %s76
    %p80 = scmp.eq.s32.totalorder %s14, 0
    %p81 = por %p79, %p80
    %p82 = scmp.ne.s32.totalorder %s74, %s76
    %p83 = scmp.eq.s32.totalorder %s19, 1
    %p84 = por %p82, %p83
    %p85 = scmp.ne.s32.totalorder %s76, %s77
    %p86 = scmp.eq.s32.totalorder %s19, 0
    %p87 = por %p85, %p86
    %p88 = scmp.ne.s32.totalorder %s76, %s77
    %p89 = scmp.eq.s32.totalorder %s20, 1
    %p90 = por %p88, %p89
    %p92 = scmp.ne.s32.totalorder %s77, %s91
    %p93 = scmp.eq.s32.totalorder %s20, 0
    %p94 = por %p92, %p93
    %s96 = sadd.s32 %s95, 1
    %p99 = scmp.eq.s32.totalorder %s14, 1
    %p100 = scmp.ne.s32.totalorder %s95, %s97
    %p101 = scmp.eq.s32.totalorder %s14, 0
    %p102 = por %p100, %p101
    %p103 = scmp.ne.s32.totalorder %s95, %s97
    %p104 = scmp.eq.s32.totalorder %s19, 1
    %p105 = por %p103, %p104
    %p106 = scmp.ne.s32.totalorder %s97, %s98
    %p107 = scmp.eq.s32.totalorder %s19, 0
    %p108 = por %p106, %p107
    %p109 = scmp.ne.s32.totalorder %s97, %s98
    %p110 = scmp.eq.s32.totalorder %s20, 1
    %p111 = por %p109, %p110
    %p113 = scmp.ne.s32.totalorder %s98, %s112
    %p114 = scmp.eq.s32.totalorder %s20, 0
    %p115 = por %p113, %p114
    %s117 = sadd.s32 %s116, 1
    %p120 = scmp.eq.s32.totalorder %s14, 1
    %p121 = scmp.ne.s32.totalorder %s116, %s118
    %p122 = scmp.eq.s32.totalorder %s14, 0
    %p123 = por %p121, %p122
    %p124 = scmp.ne.s32.totalorder %s116, %s118
    %p125 = scmp.eq.s32.totalorder %s19, 1
    %p126 = por %p124, %p125
    %p127 = scmp.ne.s32.totalorder %s118, %s119
    %p128 = scmp.eq.s32.totalorder %s19, 0
    %p129 = por %p127, %p128
    %p130 = scmp.ne.s32.totalorder %s118, %s119
    %p131 = scmp.eq.s32.totalorder %s20, 1
    %p132 = por %p130, %p131
    %p134 = scmp.ne.s32.totalorder %s119, %s133
    %p135 = scmp.eq.s32.totalorder %s20, 0
    %p136 = por %p134, %p135
    %s138 = sadd.s32 %s137, 1
    %p141 = scmp.eq.s32.totalorder %s14, 1
    %p142 = scmp.ne.s32.totalorder %s137, %s139
    %p143 = scmp.eq.s32.totalorder %s14, 0
    %p144 = por %p142, %p143
    %p145 = scmp.ne.s32.totalorder %s137, %s139
    %p146 = scmp.eq.s32.totalorder %s19, 1
    %p147 = por %p145, %p146
    %p148 = scmp.ne.s32.totalorder %s139, %s140
    %p149 = scmp.eq.s32.totalorder %s19, 0
    %p150 = por %p148, %p149
    %p151 = scmp.ne.s32.totalorder %s139, %s140
    %p152 = scmp.eq.s32.totalorder %s20, 1
    %p153 = por %p151, %p152
    %p155 = scmp.ne.s32.totalorder %s140, %s154
    %p156 = scmp.eq.s32.totalorder %s20, 0
    %p157 = por %p155, %p156
    %s159 = sadd.s32 %s158, 1
    %p162 = scmp.eq.s32.totalorder %s14, 1
    %p163 = scmp.ne.s32.totalorder %s158, %s160
    %p164 = scmp.eq.s32.totalorder %s14, 0
    %p165 = por %p163, %p164
    %p166 = scmp.ne.s32.totalorder %s158, %s160
    %p167 = scmp.eq.s32.totalorder %s19, 1
    %p168 = por %p166, %p167
    %p169 = scmp.ne.s32.totalorder %s160, %s161
    %p170 = scmp.eq.s32.totalorder %s19, 0
    %p171 = por %p169, %p170
    %p172 = scmp.ne.s32.totalorder %s160, %s161
    %p173 = scmp.eq.s32.totalorder %s20, 1
    %p174 = por %p172, %p173
    %p176 = scmp.ne.s32.totalorder %s161, %s175
    %p177 = scmp.eq.s32.totalorder %s20, 0
    %p178 = por %p176, %p177
    %s180 = sadd.s32 %s179, 1
    %p183 = scmp.eq.s32.totalorder %s14, 1
    %p184 = scmp.ne.s32.totalorder %s179, %s181
    %p185 = scmp.eq.s32.totalorder %s14, 0
    %p186 = por %p184, %p185
    %p187 = scmp.ne.s32.totalorder %s179, %s181
    %p188 = scmp.eq.s32.totalorder %s19, 1
    %p189 = por %p187, %p188
    %p190 = scmp.ne.s32.totalorder %s181, %s182
    %p191 = scmp.eq.s32.totalorder %s19, 0
    %p192 = por %p190, %p191
    %p193 = scmp.ne.s32.totalorder %s181, %s182
    %p194 = scmp.eq.s32.totalorder %s20, 1
    %p195 = por %p193, %p194
    %p197 = scmp.ne.s32.totalorder %s182, %s196
    %p198 = scmp.eq.s32.totalorder %s20, 0
    %p199 = por %p197, %p198
    %s200 = ssub.s32 %s14, %s21
    %p201 = scmp.eq.s32.totalorder %s200, 0
    %s203 = sadd.s32 %s202, 1
    %s204 = scalar_select %p201, %s202, %s203
    %p207 = pneg %p201
    %p208 = scmp.eq.s32.totalorder %s14, 1
    %p209 = por %p207, %p208
    %p210 = scmp.ne.s32.totalorder %s202, %s205
    %p211 = scmp.eq.s32.totalorder %s14, 0
    %p212 = por %p210, %p211
    %p213 = scmp.ne.s32.totalorder %s202, %s205
    %p214 = scmp.eq.s32.totalorder %s19, 1
    %p215 = por %p213, %p214
    %p216 = scmp.ne.s32.totalorder %s205, %s206
    %p217 = scmp.eq.s32.totalorder %s19, 0
    %p218 = por %p216, %p217
    %p219 = scmp.ne.s32.totalorder %s205, %s206
    %p220 = scmp.eq.s32.totalorder %s20, 1
    %p221 = por %p219, %p220
    %p223 = scmp.ne.s32.totalorder %s206, %s222
    %p224 = scmp.eq.s32.totalorder %s20, 0
    %p225 = por %p223, %p224
    %p226 = scmp.le.s32.totalorder 1, %s14
    %p227 = scmp.lt.s32.totalorder %s14, 3
    %p228 = pnand %p226, %p227
    %p229 = pneg %p228
    // Predicated region
    $region9: #{unet_model_forward.4} parent=5 // pred_check
      _
    $region10: #{unet_model_forward.4} parent=5 // pred_check_branch
      %231 = sbr.rel (%p228) target = $region12
    $region11: #{unet_model_forward.4} parent=5 // pred_region
      %s232 = ssub.s32 %s14, 1
      // Predicated region
      $region13: #{unet_model_forward.4} parent=11 // pred_check
        %p233 = pneg %p87
      $region14: #{unet_model_forward.4} parent=11 // pred_check_branch
        %235 = sbr.rel (%p233) target = $region16
      $region15: #{unet_model_forward.4} parent=11 // pred_region
        _
      $region16: #{unet_model_forward.4} parent=11 // pred_fallthru
        _
      // Predicated region
      $region17: #{unet_model_forward.4} parent=11 // pred_check
        %p236 = pneg %p108
      $region18: #{unet_model_forward.4} parent=11 // pred_check_branch
        %238 = sbr.rel (%p236) target = $region20
      $region19: #{unet_model_forward.4} parent=11 // pred_region
        _
      $region20: #{unet_model_forward.4} parent=11 // pred_fallthru
        _
      // Predicated region
      $region21: #{unet_model_forward.4} parent=11 // pred_check
        %p239 = pneg %p129
      $region22: #{unet_model_forward.4} parent=11 // pred_check_branch
        %241 = sbr.rel (%p239) target = $region24
      $region23: #{unet_model_forward.4} parent=11 // pred_region
        _
      $region24: #{unet_model_forward.4} parent=11 // pred_fallthru
        _
      // Predicated region
      $region25: #{unet_model_forward.4} parent=11 // pred_check
        %p242 = pneg %p150
      $region26: #{unet_model_forward.4} parent=11 // pred_check_branch
        %244 = sbr.rel (%p242) target = $region28
      $region27: #{unet_model_forward.4} parent=11 // pred_region
        _
      $region28: #{unet_model_forward.4} parent=11 // pred_fallthru
        _
      // Predicated region
      $region29: #{unet_model_forward.4} parent=11 // pred_check
        %p245 = pneg %p171
      $region30: #{unet_model_forward.4} parent=11 // pred_check_branch
        %247 = sbr.rel (%p245) target = $region32
      $region31: #{unet_model_forward.4} parent=11 // pred_region
        _
      $region32: #{unet_model_forward.4} parent=11 // pred_fallthru
        _
      // Predicated region
      $region33: #{unet_model_forward.4} parent=11 // pred_check
        %p248 = pneg %p192
      $region34: #{unet_model_forward.4} parent=11 // pred_check_branch
        %250 = sbr.rel (%p248) target = $region36
      $region35: #{unet_model_forward.4} parent=11 // pred_region
        _
      $region36: #{unet_model_forward.4} parent=11 // pred_fallthru
        _
    $region12: #{unet_model_forward.4} parent=5 // pred_fallthru
      _
    %p251 = scmp.lt.s32.totalorder %s14, 2
    // Predicated region
    $region37: #{unet_model_forward.4} parent=5 // pred_check
      %p252 = pneg %p251
    $region38: #{unet_model_forward.4} parent=5 // pred_check_branch
      %254 = sbr.rel (%p252) target = $region40
    $region39: #{unet_model_forward.4} parent=5 // pred_region
      // Predicated region
      $region41: #{unet_model_forward.4} parent=39 // pred_check
        %p255 = pneg %p34
      $region42: #{unet_model_forward.4} parent=39 // pred_check_branch
        %257 = sbr.rel (%p255) target = $region44
      $region43: #{unet_model_forward.4} parent=39 // pred_region
        %p258 = scmp.lt.s32.totalorder %s14, 1
        %s259 = scalar_select %p258, %s14, 1
        %s260 = smul.addr %s259, 2
        %s261 = smul.addr %s260, 8
        %s262 = scalar_lea.vmem %s0, %s261
      $region44: #{unet_model_forward.4} parent=39 // pred_fallthru
        _
      // Predicated region
      $region45: #{unet_model_forward.4} parent=39 // pred_check
        %p263 = pneg %p60
      $region46: #{unet_model_forward.4} parent=39 // pred_check_branch
        %265 = sbr.rel (%p263) target = $region48
      $region47: #{unet_model_forward.4} parent=39 // pred_region
        %p266 = scmp.lt.s32.totalorder %s14, 1
        %s267 = scalar_select %p266, %s14, 1
        %s268 = smul.addr %s267, 2
        %s269 = smul.addr %s268, 8
        %s270 = scalar_lea.vmem %s1, %s269
      $region48: #{unet_model_forward.4} parent=39 // pred_fallthru
        _
    $region40: #{unet_model_forward.4} parent=5 // pred_fallthru
      _
    %p271 = scmp.le.s32.totalorder 1, %s14
    %p272 = scmp.lt.s32.totalorder %s14, 3
    %p273 = pnand %p271, %p272
    %p274 = pneg %p273
    // Predicated region
    $region49: #{unet_model_forward.4} parent=5 // pred_check
      _
    $region50: #{unet_model_forward.4} parent=5 // pred_check_branch
      %276 = sbr.rel (%p273) target = $region52
    $region51: #{unet_model_forward.4} parent=5 // pred_region
      %s277 = ssub.s32 %s14, 1
      %p278 = scmp.lt.s32.totalorder %s19, 1
      %s279 = scalar_select %p278, %s19, 1
      %s280 = smul.addr %s279, 2
      %s281 = smul.addr %s280, 8
      %s282 = scalar_lea.vmem %s0, %s281
      %p283 = pneg %p40
      %p284 = pneg %p37
      %p285 = scmp.lt.s32.totalorder %s19, 1
      %s286 = scalar_select %p285, %s19, 1
      %s287 = smul.addr %s286, 2
      %s288 = smul.addr %s287, 8
      %s289 = scalar_lea.vmem %s1, %s288
      %p290 = pneg %p66
      %p291 = pneg %p63
      %p292 = pneg %p87
      %p293 = pneg %p84
      %p294 = pneg %p108
      %p295 = pneg %p105
      %p296 = pneg %p129
      %p297 = pneg %p126
      %p298 = pneg %p150
      %p299 = pneg %p147
      %p300 = pneg %p171
      %p301 = pneg %p168
      %p302 = pneg %p192
      %p303 = pneg %p189
      %p304 = pneg %p218
      %p305 = pneg %p215
      %p306 = scmp.lt.s32.totalorder %s19, 1
      %s307 = scalar_select %p306, %s19, 1
      %s308 = smul.addr %s307, 16
      %s309 = smul.addr %s308, 8
      %s310 = scalar_lea.vmem %s8, %s309
      %p311 = scmp.lt.s32.totalorder %s19, 1
      %s312 = scalar_select %p311, %s19, 1
      %s313 = smul.addr %s312, 2
      %s314 = smul.addr %s313, 8
      %s315 = scalar_lea.vmem %s0, %s314
      %p316 = scmp.lt.s32.totalorder %s19, 1
      %s317 = scalar_select %p316, %s19, 1
      %s318 = smul.addr %s317, 2
      %s319 = smul.addr %s318, 8
      %s320 = scalar_lea.vmem %s1, %s319
      %p321 = scmp.lt.s32.totalorder %s19, 1
      %s322 = scalar_select %p321, %s19, 1
      %s323 = smul.addr %s322, 16
      %s324 = smul.addr %s323, 8
      %s325 = scalar_lea.vmem %s8, %s324
      %v326 = vld [vmem:[%s315] sm:$0xff]
      %v327 = vld [vmem:[%s315 + $0x8] sm:$0xff]
      %v328 = vld [vmem:[%s320] sm:$0xff]
      %v329 = vld [vmem:[%s320 + $0x8] sm:$0xff]
      %v330 = vmax.f32 %v326, %v328
      %v331 = vmax.f32 %v327, %v329
      %334 = vrot.lane.b32.xlu0 %v330, 127
      %v335 = vpop.permute.xlu0 %334
      %336 = vrot.lane.b32.xlu0 %v331, 127
      %v337 = vpop.permute.xlu0 %336
      %vm338 = vcmask 1039360
      %v339 = vsel %vm338, %v335, %v337
      %342 = vrot.lane.b32.xlu0 %v330, 126
      %v343 = vpop.permute.xlu0 %342
      %344 = vrot.lane.b32.xlu0 %v331, 126
      %v345 = vpop.permute.xlu0 %344
      %vm346 = vcmask 1031168
      %v347 = vsel %vm346, %v343, %v345
      %350 = vrot.lane.b32.xlu0 %v330, 112
      %v351 = vpop.permute.xlu0 %350
      %352 = vrot.lane.b32.xlu0 %v331, 112
      %v353 = vpop.permute.xlu0 %352
      %vm354 = vcmask 916480
      %v355 = vsel %vm354, %v351, %v353
      %358 = vrot.lane.b32.xlu0 %v330, 111
      %v359 = vpop.permute.xlu0 %358
      %360 = vrot.lane.b32.xlu0 %v331, 111
      %v361 = vpop.permute.xlu0 %360
      %vm362 = vcmask 908288
      %v363 = vsel %vm362, %v359, %v361
      %366 = vrot.lane.b32.xlu0 %v330, 110
      %v367 = vpop.permute.xlu0 %366
      %368 = vrot.lane.b32.xlu0 %v331, 110
      %v369 = vpop.permute.xlu0 %368
      %vm370 = vcmask 900096
      %v371 = vsel %vm370, %v367, %v369
      %374 = vrot.lane.b32.xlu0 %v330, 96
      %v375 = vpop.permute.xlu0 %374
      %376 = vrot.lane.b32.xlu0 %v331, 96
      %v377 = vpop.permute.xlu0 %376
      %vm378 = vcmask 785408
      %v379 = vsel %vm378, %v375, %v377
      %382 = vrot.lane.b32.xlu0 %v330, 95
      %v383 = vpop.permute.xlu0 %382
      %384 = vrot.lane.b32.xlu0 %v331, 95
      %v385 = vpop.permute.xlu0 %384
      %vm386 = vcmask 777216
      %v387 = vsel %vm386, %v383, %v385
      %390 = vrot.lane.b32.xlu0 %v330, 94
      %v391 = vpop.permute.xlu0 %390
      %392 = vrot.lane.b32.xlu0 %v331, 94
      %v393 = vpop.permute.xlu0 %392
      %vm394 = vcmask 769024
      %v395 = vsel %vm394, %v391, %v393
      %v398 = vld [vmem:[%s2] sm:$0xff]
      %v399 = vld [vmem:[%s2 + $0x8] sm:$0xff]
      %v400 = vld [vmem:[%s3] sm:$0xff]
      %v401 = vld [vmem:[%s3 + $0x8] sm:$0xff]
      %403 = vset.pattern.permute.xlu0 0
      %404 = vperm.xlu0 %403, %v400
      %v405 = vpop.permute.xlu0 %404
      %408 = vset.pattern.permute.xlu0 0
      %409 = vperm.xlu0 %408, %v401
      %v410 = vpop.permute.xlu0 %409
      %vm412 = vcmask 588800
      %v414 = vsel %vm412, %v398, 0
      %v417 = vsel %vm412, %v399, 0
      %419 = vmatpush.msra.mxu0 0.0
      %420 = vmatpush.msra.mxu0 0.0
      %421 = vmatpush.msra.mxu0 0.0
      %422 = vmatpush.msra.mxu0 0.0
      %423 = vmatpush.msra.mxu0 0.0
      %424 = vmatpush.msra.mxu0 0.0
      %425 = vmatpush.msra.mxu0 0.0
      %426 = vmatpush.msra.mxu0 %v395
      %427 = vmatpush.msra.mxu0 %v387
      %428 = vmatpush.msra.mxu0 %v379
      %429 = vmatpush.msra.mxu0 %v371
      %430 = vmatpush.msra.mxu0 %v363
      %431 = vmatpush.msra.mxu0 %v355
      %432 = vmatpush.msra.mxu0 %v347
      %433 = vmatpush.msra.mxu0 %v339
      %434 = vmatpush.msra.mxu0 %v330
      %435 = vmatmul.f32.gmra.mxu0 %v414
      %v436 = vpop.f32.mrf.mxu0
      %v437 = vadd.f32 %v405, %v436
      %438 = vmatmul.f32.gmra.mxu0 %v417
      %v439 = vpop.f32.mrf.mxu0
      %v440 = vadd.f32 %v410, %v439
      %441 = vdwg.mxu0
      %442 = vmatpush.msra.mxu0 0.0
      %443 = vmatpush.msra.mxu0 0.0
      %444 = vmatpush.msra.mxu0 0.0
      %445 = vmatpush.msra.mxu0 0.0
      %446 = vmatpush.msra.mxu0 0.0
      %447 = vmatpush.msra.mxu0 0.0
      %448 = vmatpush.msra.mxu0 0.0
      %449 = vmatpush.msra.mxu0 %v393
      %450 = vmatpush.msra.mxu0 %v385
      %451 = vmatpush.msra.mxu0 %v377
      %452 = vmatpush.msra.mxu0 %v369
      %453 = vmatpush.msra.mxu0 %v361
      %454 = vmatpush.msra.mxu0 %v353
      %455 = vmatpush.msra.mxu0 %v345
      %456 = vmatpush.msra.mxu0 %v337
      %457 = vmatpush.msra.mxu0 %v331
      %458 = vmatmul.f32.gmra.mxu0 %v414
      %v459 = vpop.f32.mrf.mxu0
      %v460 = vadd.f32 %v405, %v459
      %461 = vmatmul.f32.gmra.mxu0 %v417
      %v462 = vpop.f32.mrf.mxu0
      %v463 = vadd.f32 %v410, %v462
      %464 = vdwg.mxu0
      %v465 = vmax.f32 %v437, 0.0
      %v466 = vmax.f32 %v460, 0.0
      %v467 = vmax.f32 %v440, 0.0
      %v468 = vmax.f32 %v463, 0.0
      %473 = vrot.lane.b32.xlu0 %v465, 127
      %v474 = vpop.permute.xlu0 %473
      %475 = vrot.lane.b32.xlu0 %v466, 127
      %v476 = vpop.permute.xlu0 %475
      %477 = vrot.lane.b32.xlu0 %v467, 127
      %v478 = vpop.permute.xlu0 %477
      %479 = vrot.lane.b32.xlu0 %v468, 127
      %v480 = vpop.permute.xlu0 %479
      %v481 = vsel %vm338, %v474, %v476
      %v482 = vsel %vm338, %v478, %v480
      %487 = vrot.lane.b32.xlu0 %v465, 126
      %v488 = vpop.permute.xlu0 %487
      %489 = vrot.lane.b32.xlu0 %v466, 126
      %v490 = vpop.permute.xlu0 %489
      %491 = vrot.lane.b32.xlu0 %v467, 126
      %v492 = vpop.permute.xlu0 %491
      %493 = vrot.lane.b32.xlu0 %v468, 126
      %v494 = vpop.permute.xlu0 %493
      %v495 = vsel %vm346, %v488, %v490
      %v496 = vsel %vm346, %v492, %v494
      %501 = vrot.lane.b32.xlu0 %v465, 112
      %v502 = vpop.permute.xlu0 %501
      %503 = vrot.lane.b32.xlu0 %v466, 112
      %v504 = vpop.permute.xlu0 %503
      %505 = vrot.lane.b32.xlu0 %v467, 112
      %v506 = vpop.permute.xlu0 %505
      %507 = vrot.lane.b32.xlu0 %v468, 112
      %v508 = vpop.permute.xlu0 %507
      %v509 = vsel %vm354, %v502, %v504
      %v510 = vsel %vm354, %v506, %v508
      %515 = vrot.lane.b32.xlu0 %v465, 111
      %v516 = vpop.permute.xlu0 %515
      %517 = vrot.lane.b32.xlu0 %v466, 111
      %v518 = vpop.permute.xlu0 %517
      %519 = vrot.lane.b32.xlu0 %v467, 111
      %v520 = vpop.permute.xlu0 %519
      %521 = vrot.lane.b32.xlu0 %v468, 111
      %v522 = vpop.permute.xlu0 %521
      %v523 = vsel %vm362, %v516, %v518
      %v524 = vsel %vm362, %v520, %v522
      %529 = vrot.lane.b32.xlu0 %v465, 110
      %v530 = vpop.permute.xlu0 %529
      %531 = vrot.lane.b32.xlu0 %v466, 110
      %v532 = vpop.permute.xlu0 %531
      %533 = vrot.lane.b32.xlu0 %v467, 110
      %v534 = vpop.permute.xlu0 %533
      %535 = vrot.lane.b32.xlu0 %v468, 110
      %v536 = vpop.permute.xlu0 %535
      %v537 = vsel %vm370, %v530, %v532
      %v538 = vsel %vm370, %v534, %v536
      %543 = vrot.lane.b32.xlu0 %v465, 96
      %v544 = vpop.permute.xlu0 %543
      %545 = vrot.lane.b32.xlu0 %v466, 96
      %v546 = vpop.permute.xlu0 %545
      %547 = vrot.lane.b32.xlu0 %v467, 96
      %v548 = vpop.permute.xlu0 %547
      %549 = vrot.lane.b32.xlu0 %v468, 96
      %v550 = vpop.permute.xlu0 %549
      %v551 = vsel %vm378, %v544, %v546
      %v552 = vsel %vm378, %v548, %v550
      %557 = vrot.lane.b32.xlu0 %v465, 95
      %v558 = vpop.permute.xlu0 %557
      %559 = vrot.lane.b32.xlu0 %v466, 95
      %v560 = vpop.permute.xlu0 %559
      %561 = vrot.lane.b32.xlu0 %v467, 95
      %v562 = vpop.permute.xlu0 %561
      %563 = vrot.lane.b32.xlu0 %v468, 95
      %v564 = vpop.permute.xlu0 %563
      %v565 = vsel %vm386, %v558, %v560
      %v566 = vsel %vm386, %v562, %v564
      %571 = vrot.lane.b32.xlu0 %v465, 94
      %v572 = vpop.permute.xlu0 %571
      %573 = vrot.lane.b32.xlu0 %v466, 94
      %v574 = vpop.permute.xlu0 %573
      %575 = vrot.lane.b32.xlu0 %v467, 94
      %v576 = vpop.permute.xlu0 %575
      %577 = vrot.lane.b32.xlu0 %v468, 94
      %v578 = vpop.permute.xlu0 %577
      %v579 = vsel %vm394, %v572, %v574
      %v580 = vsel %vm394, %v576, %v578
      %v585 = vld [vmem:[%s4] sm:$0xff]
      %v586 = vld [vmem:[%s4 + $0x8] sm:$0xff]
      %v587 = vld [vmem:[%s4 + $0x10] sm:$0xff]
      %v588 = vld [vmem:[%s4 + $0x18] sm:$0xff]
      %v589 = vld [vmem:[%s5] sm:$0xff]
      %v590 = vld [vmem:[%s5 + $0x8] sm:$0xff]
      %592 = vset.pattern.permute.xlu0 0
      %593 = vperm.xlu0 %592, %v589
      %v594 = vpop.permute.xlu0 %593
      %597 = vset.pattern.permute.xlu0 0
      %598 = vperm.xlu0 %597, %v590
      %v599 = vpop.permute.xlu0 %598
      %vm601 = vcmask 130048
      %v603 = vsel %vm601, %v586, 0
      %v606 = vsel %vm601, %v588, 0
      %608 = vmatpush.msra.mxu0 %v566
      %609 = vmatpush.msra.mxu0 %v565
      %610 = vmatpush.msra.mxu0 %v552
      %611 = vmatpush.msra.mxu0 %v551
      %612 = vmatpush.msra.mxu0 %v538
      %613 = vmatpush.msra.mxu0 %v537
      %614 = vmatpush.msra.mxu0 %v524
      %615 = vmatpush.msra.mxu0 %v523
      %616 = vmatpush.msra.mxu0 %v510
      %617 = vmatpush.msra.mxu0 %v509
      %618 = vmatpush.msra.mxu0 %v496
      %619 = vmatpush.msra.mxu0 %v495
      %620 = vmatpush.msra.mxu0 %v482
      %621 = vmatpush.msra.mxu0 %v481
      %622 = vmatpush.msra.mxu0 %v467
      %623 = vmatpush.msra.mxu0 %v465
      %624 = vmatmul.f32.gmra.mxu0 %v585
      %v625 = vpop.f32.mrf.mxu0
      %v626 = vadd.f32 %v594, %v625
      %627 = vmatmul.f32.gmra.mxu0 %v587
      %v628 = vpop.f32.mrf.mxu0
      %v629 = vadd.f32 %v599, %v628
      %630 = vdwg.mxu0
      %631 = vmatpush.msra.mxu0 0.0
      %632 = vmatpush.msra.mxu0 0.0
      %633 = vmatpush.msra.mxu0 0.0
      %634 = vmatpush.msra.mxu0 0.0
      %635 = vmatpush.msra.mxu0 0.0
      %636 = vmatpush.msra.mxu0 0.0
      %637 = vmatpush.msra.mxu0 0.0
      %638 = vmatpush.msra.mxu0 0.0
      %639 = vmatpush.msra.mxu0 0.0
      %640 = vmatpush.msra.mxu0 0.0
      %641 = vmatpush.msra.mxu0 0.0
      %642 = vmatpush.msra.mxu0 0.0
      %643 = vmatpush.msra.mxu0 0.0
      %644 = vmatpush.msra.mxu0 0.0
      %645 = vmatpush.msra.mxu0 %v580
      %646 = vmatpush.msra.mxu0 %v579
      %647 = vmatmul.f32.gmra.mxu0 %v603
      %v648 = vpop.f32.mrf.mxu0
      %v649 = vadd.f32 %v626, %v648
      %650 = vmatmul.f32.gmra.mxu0 %v606
      %v651 = vpop.f32.mrf.mxu0
      %v652 = vadd.f32 %v629, %v651
      %653 = vdwg.mxu0
      %654 = vmatpush.msra.mxu0 %v564
      %655 = vmatpush.msra.mxu0 %v560
      %656 = vmatpush.msra.mxu0 %v550
      %657 = vmatpush.msra.mxu0 %v546
      %658 = vmatpush.msra.mxu0 %v536
      %659 = vmatpush.msra.mxu0 %v532
      %660 = vmatpush.msra.mxu0 %v522
      %661 = vmatpush.msra.mxu0 %v518
      %662 = vmatpush.msra.mxu0 %v508
      %663 = vmatpush.msra.mxu0 %v504
      %664 = vmatpush.msra.mxu0 %v494
      %665 = vmatpush.msra.mxu0 %v490
      %666 = vmatpush.msra.mxu0 %v480
      %667 = vmatpush.msra.mxu0 %v476
      %668 = vmatpush.msra.mxu0 %v468
      %669 = vmatpush.msra.mxu0 %v466
      %670 = vmatmul.f32.gmra.mxu0 %v585
      %v671 = vpop.f32.mrf.mxu0
      %v672 = vadd.f32 %v594, %v671
      %673 = vmatmul.f32.gmra.mxu0 %v587
      %v674 = vpop.f32.mrf.mxu0
      %v675 = vadd.f32 %v599, %v674
      %676 = vdwg.mxu0
      %677 = vmatpush.msra.mxu0 0.0
      %678 = vmatpush.msra.mxu0 0.0
      %679 = vmatpush.msra.mxu0 0.0
      %680 = vmatpush.msra.mxu0 0.0
      %681 = vmatpush.msra.mxu0 0.0
      %682 = vmatpush.msra.mxu0 0.0
      %683 = vmatpush.msra.mxu0 0.0
      %684 = vmatpush.msra.mxu0 0.0
      %685 = vmatpush.msra.mxu0 0.0
      %686 = vmatpush.msra.mxu0 0.0
      %687 = vmatpush.msra.mxu0 0.0
      %688 = vmatpush.msra.mxu0 0.0
      %689 = vmatpush.msra.mxu0 0.0
      %690 = vmatpush.msra.mxu0 0.0
      %691 = vmatpush.msra.mxu0 %v578
      %692 = vmatpush.msra.mxu0 %v574
      %693 = vmatmul.f32.gmra.mxu0 %v603
      %v694 = vpop.f32.mrf.mxu0
      %v695 = vadd.f32 %v672, %v694
      %696 = vmatmul.f32.gmra.mxu0 %v606
      %v697 = vpop.f32.mrf.mxu0
      %v698 = vadd.f32 %v675, %v697
      %699 = vdwg.mxu0
      %v700 = vmax.f32 %v649, 0.0
      %v701 = vmax.f32 %v695, 0.0
      %v702 = vmax.f32 %v652, 0.0
      %v703 = vmax.f32 %v698, 0.0
      %v704 = vld [vmem:[%s6] sm:$0xff]
      %v705 = vld [vmem:[%s6 + $0x8] sm:$0xff]
      %v706 = vld [vmem:[%s6 + $0x10] sm:$0xff]
      %v707 = vld [vmem:[%s6 + $0x18] sm:$0xff]
      %v708 = vld [vmem:[%s6 + $0x20] sm:$0xff]
      %v709 = vld [vmem:[%s6 + $0x28] sm:$0xff]
      %v710 = vld [vmem:[%s6 + $0x30] sm:$0xff]
      %v711 = vld [vmem:[%s6 + $0x38] sm:$0xff]
      %v712 = vld [vmem:[%s7] sm:$0xff]
      %v713 = vld [vmem:[%s7 + $0x8] sm:$0xff]
      %v714 = vld [vmem:[%s7 + $0x10] sm:$0xff]
      %v715 = vld [vmem:[%s7 + $0x18] sm:$0xff]
      %v716 = vld [vmem:[%s7 + $0x20] sm:$0xff]
      %v717 = vld [vmem:[%s7 + $0x28] sm:$0xff]
      %v718 = vld [vmem:[%s7 + $0x30] sm:$0xff]
      %v719 = vld [vmem:[%s7 + $0x38] sm:$0xff]
      %721 = vset.pattern.permute.xlu0 0
      %722 = vperm.xlu0 %721, %v712
      %v723 = vpop.permute.xlu0 %722
      %726 = vset.pattern.permute.xlu0 0
      %727 = vperm.xlu0 %726, %v713
      %v728 = vpop.permute.xlu0 %727
      %731 = vset.pattern.permute.xlu0 0
      %732 = vperm.xlu0 %731, %v714
      %v733 = vpop.permute.xlu0 %732
      %736 = vset.pattern.permute.xlu0 0
      %737 = vperm.xlu0 %736, %v715
      %v738 = vpop.permute.xlu0 %737
      %741 = vset.pattern.permute.xlu0 0
      %742 = vperm.xlu0 %741, %v716
      %v743 = vpop.permute.xlu0 %742
      %746 = vset.pattern.permute.xlu0 0
      %747 = vperm.xlu0 %746, %v717
      %v748 = vpop.permute.xlu0 %747
      %751 = vset.pattern.permute.xlu0 0
      %752 = vperm.xlu0 %751, %v718
      %v753 = vpop.permute.xlu0 %752
      %756 = vset.pattern.permute.xlu0 0
      %757 = vperm.xlu0 %756, %v719
      %v758 = vpop.permute.xlu0 %757
      %v761 = vsel %vm601, %v704, 0
      %v764 = vsel %vm601, %v705, 0
      %v767 = vsel %vm601, %v706, 0
      %v770 = vsel %vm601, %v707, 0
      %v773 = vsel %vm601, %v708, 0
      %v776 = vsel %vm601, %v709, 0
      %v779 = vsel %vm601, %v710, 0
      %v782 = vsel %vm601, %v711, 0
      %784 = vmatpush.msra.mxu0 0.0
      %785 = vmatpush.msra.mxu0 0.0
      %786 = vmatpush.msra.mxu0 0.0
      %787 = vmatpush.msra.mxu0 0.0
      %788 = vmatpush.msra.mxu0 0.0
      %789 = vmatpush.msra.mxu0 0.0
      %790 = vmatpush.msra.mxu0 0.0
      %791 = vmatpush.msra.mxu0 0.0
      %792 = vmatpush.msra.mxu0 0.0
      %793 = vmatpush.msra.mxu0 0.0
      %794 = vmatpush.msra.mxu0 0.0
      %795 = vmatpush.msra.mxu0 0.0
      %796 = vmatpush.msra.mxu0 0.0
      %797 = vmatpush.msra.mxu0 0.0
      %798 = vmatpush.msra.mxu0 %v702
      %799 = vmatpush.msra.mxu0 %v700
      %800 = vmatmul.f32.gmra.mxu0 %v761
      %v801 = vpop.f32.mrf.mxu0
      %v802 = vadd.f32 %v723, %v801
      %803 = vmatmul.f32.gmra.mxu0 %v764
      %v804 = vpop.f32.mrf.mxu0
      %v805 = vadd.f32 %v728, %v804
      %806 = vmatmul.f32.gmra.mxu0 %v767
      %v807 = vpop.f32.mrf.mxu0
      %v808 = vadd.f32 %v733, %v807
      %809 = vmatmul.f32.gmra.mxu0 %v770
      %v810 = vpop.f32.mrf.mxu0
      %v811 = vadd.f32 %v738, %v810
      %812 = vmatmul.f32.gmra.mxu0 %v773
      %v813 = vpop.f32.mrf.mxu0
      %v814 = vadd.f32 %v743, %v813
      %815 = vmatmul.f32.gmra.mxu0 %v776
      %v816 = vpop.f32.mrf.mxu0
      %v817 = vadd.f32 %v748, %v816
      %818 = vmatmul.f32.gmra.mxu0 %v779
      %v819 = vpop.f32.mrf.mxu0
      %v820 = vadd.f32 %v753, %v819
      %821 = vmatmul.f32.gmra.mxu0 %v782
      %v822 = vpop.f32.mrf.mxu0
      %v823 = vadd.f32 %v758, %v822
      %824 = vdwg.mxu0
      %825 = vmatpush.msra.mxu0 0.0
      %826 = vmatpush.msra.mxu0 0.0
      %827 = vmatpush.msra.mxu0 0.0
      %828 = vmatpush.msra.mxu0 0.0
      %829 = vmatpush.msra.mxu0 0.0
      %830 = vmatpush.msra.mxu0 0.0
      %831 = vmatpush.msra.mxu0 0.0
      %832 = vmatpush.msra.mxu0 0.0
      %833 = vmatpush.msra.mxu0 0.0
      %834 = vmatpush.msra.mxu0 0.0
      %835 = vmatpush.msra.mxu0 0.0
      %836 = vmatpush.msra.mxu0 0.0
      %837 = vmatpush.msra.mxu0 0.0
      %838 = vmatpush.msra.mxu0 0.0
      %839 = vmatpush.msra.mxu0 %v703
      %840 = vmatpush.msra.mxu0 %v701
      %841 = vmatmul.f32.gmra.mxu0 %v761
      %v842 = vpop.f32.mrf.mxu0
      %v843 = vadd.f32 %v723, %v842
      %844 = vmatmul.f32.gmra.mxu0 %v764
      %v845 = vpop.f32.mrf.mxu0
      %v846 = vadd.f32 %v728, %v845
      %847 = vmatmul.f32.gmra.mxu0 %v767
      %v848 = vpop.f32.mrf.mxu0
      %v849 = vadd.f32 %v733, %v848
      %850 = vmatmul.f32.gmra.mxu0 %v770
      %v851 = vpop.f32.mrf.mxu0
      %v852 = vadd.f32 %v738, %v851
      %853 = vmatmul.f32.gmra.mxu0 %v773
      %v854 = vpop.f32.mrf.mxu0
      %v855 = vadd.f32 %v743, %v854
      %856 = vmatmul.f32.gmra.mxu0 %v776
      %v857 = vpop.f32.mrf.mxu0
      %v858 = vadd.f32 %v748, %v857
      %859 = vmatmul.f32.gmra.mxu0 %v779
      %v860 = vpop.f32.mrf.mxu0
      %v861 = vadd.f32 %v753, %v860
      %862 = vmatmul.f32.gmra.mxu0 %v782
      %v863 = vpop.f32.mrf.mxu0
      %v864 = vadd.f32 %v758, %v863
      %865 = vdwg.mxu0
      %vm866 = vcmask 490496
      %v867 = vsel %vm866, %v843, 0.0
      %v868 = vsel %vm866, %v846, 0.0
      %v869 = vsel %vm866, %v849, 0.0
      %v870 = vsel %vm866, %v852, 0.0
      %v871 = vsel %vm866, %v855, 0.0
      %v872 = vsel %vm866, %v858, 0.0
      %v873 = vsel %vm866, %v861, 0.0
      %v874 = vsel %vm866, %v864, 0.0
      %875 = vst [vmem:[%s325] sm:$0xff] %v802
      %876 = vst [vmem:[%s325 + $0x8] sm:$0xff] %v867
      %877 = vst [vmem:[%s325 + $0x10] sm:$0xff] %v805
      %878 = vst [vmem:[%s325 + $0x18] sm:$0xff] %v868
      %879 = vst [vmem:[%s325 + $0x20] sm:$0xff] %v808
      %880 = vst [vmem:[%s325 + $0x28] sm:$0xff] %v869
      %881 = vst [vmem:[%s325 + $0x30] sm:$0xff] %v811
      %882 = vst [vmem:[%s325 + $0x38] sm:$0xff] %v870
      %883 = vst [vmem:[%s325 + $0x40] sm:$0xff] %v814
      %884 = vst [vmem:[%s325 + $0x48] sm:$0xff] %v871
      %885 = vst [vmem:[%s325 + $0x50] sm:$0xff] %v817
      %886 = vst [vmem:[%s325 + $0x58] sm:$0xff] %v872
      %887 = vst [vmem:[%s325 + $0x60] sm:$0xff] %v820
      %888 = vst [vmem:[%s325 + $0x68] sm:$0xff] %v873
      %889 = vst [vmem:[%s325 + $0x70] sm:$0xff] %v823
      %890 = vst [vmem:[%s325 + $0x78] sm:$0xff] %v874
      %p891 = scmp.lt.s32.totalorder %s19, 1
      %s892 = scalar_select %p891, %s19, 1
      %s893 = smul.addr %s892, 16
      %s894 = smul.addr %s893, 8
      %s895 = scalar_lea.vmem %s8, %s894
      // Predicated region
      $region53: #{unet_model_forward.4} parent=51 // pred_check
        %p896 = pneg %p215
      $region54: #{unet_model_forward.4} parent=51 // pred_check_branch
        %898 = sbr.rel (%p896) target = $region56
      $region55: #{unet_model_forward.4} parent=51 // pred_region
        _
      $region56: #{unet_model_forward.4} parent=51 // pred_fallthru
        _
    $region52: #{unet_model_forward.4} parent=5 // pred_fallthru
      _
    %p899 = scmp.le.s32.totalorder 2, %s14
    // Predicated region
    $region57: #{unet_model_forward.4} parent=5 // pred_check
      %p900 = pneg %p899
    $region58: #{unet_model_forward.4} parent=5 // pred_check_branch
      %902 = sbr.rel (%p900) target = $region60
    $region59: #{unet_model_forward.4} parent=5 // pred_region
      %s903 = ssub.s32 %s14, 2
      // Predicated region
      $region61: #{unet_model_forward.4} parent=59 // pred_check
        %p904 = pneg %p221
      $region62: #{unet_model_forward.4} parent=59 // pred_check_branch
        %906 = sbr.rel (%p904) target = $region64
      $region63: #{unet_model_forward.4} parent=59 // pred_region
        %p907 = scmp.lt.s32.totalorder %s20, 1
        %s908 = scalar_select %p907, %s20, 1
        %s909 = smul.addr %s908, 16
        %s910 = smul.addr %s909, 8
        %s911 = scalar_lea.vmem %s8, %s910
      $region64: #{unet_model_forward.4} parent=59 // pred_fallthru
        _
    $region60: #{unet_model_forward.4} parent=5 // pred_fallthru
      _
  $region6: #{unet_model_forward.4} parent=0 // loop_footer
    %s18 = sadd.s32 1, %s14
  $region7: #{unet_model_forward.4} parent=0 // loop_footer_branch
    %13 = sbr.rel target = $region3
  $region8: #{unet_model_forward.4} parent=0 // loop_exit
    _

// kernel: unet_model_forward.3
$region0: #{unet_model_forward.3}
  #allocation0 [shape = 'u32[]', space=smem, size = 0x4, offset = 0x4, fixed_abs, tag = 'smem constant byte address 0x4 - core index']
  #allocation1 [shape = 'u32[72,128]{1,0:T(1,128)}', space=vmem, size = 0x9000, scoped, tag = 'internal scratch']
  %s0 = inlined_call_operand.vmem [shape: f32[2,1,1296], index: 0, kind: input, shape index: {}]
  %s1 = inlined_call_operand.vmem [shape: f32[8,9], index: 1, kind: input, shape index: {}]
  %s2 = inlined_call_operand.vmem [shape: f32[8,1], index: 2, kind: input, shape index: {}]
  %s3 = inlined_call_operand.vmem [shape: f32[8,72], index: 3, kind: input, shape index: {}]
  %s4 = inlined_call_operand.vmem [shape: f32[8,1], index: 4, kind: input, shape index: {}]
  %s5 = inlined_call_operand.vmem [shape: f32[2,8,16,32], index: 5, kind: output, shape index: {0}]
  %s6 = inlined_call_operand.vmem [shape: f32[2,8,576], index: 6, kind: output, shape index: {1}]
  %7 = xla_tuple %s5, %s6
  %s8 = sld [smem:[#allocation0]]
  $region61: #{unet_model_forward.3} parent=0
    _
  %s10 = ssub.s32 1, %s8
  %s11 = scalar_select 0, %s10, %s8
  loop: start=0, step=1, limit=4
  $region2: #{unet_model_forward.3} parent=0 // loop_pre_header
    _
  $region3: #{unet_model_forward.3} parent=0 // loop_header
    %s13 = sphi 0, %s17
    %p14 = scmp.ge.s32.totalorder %s13, 4
    %s23 = sphi 0, %s25
    %s26 = sphi 0, %s23
    %s27 = sphi 0, %s26
    %s43 = sphi 0, %s27
    %s47 = sphi 0, %s47
    %s49 = sphi 0, %s47
    %s50 = sphi 0, %s49
    %s64 = sphi 0, %s50
    %s68 = sphi 0, %s68
    %s70 = sphi 0, %s68
    %s71 = sphi 0, %s70
    %s85 = sphi 0, %s71
    %s89 = sphi 0, %s89
    %s91 = sphi 0, %s89
    %s92 = sphi 0, %s91
    %s106 = sphi 0, %s92
    %s110 = sphi 0, %s110
    %s112 = sphi 0, %s110
    %s113 = sphi 0, %s112
    %s127 = sphi 0, %s113
    %s133 = sphi 0, %s135
    %s136 = sphi 0, %s133
    %s137 = sphi 0, %s136
    %s153 = sphi 0, %s137
    %s159 = sphi 0, %s161
    %s162 = sphi 0, %s159
    %s163 = sphi 0, %s162
    %s179 = sphi 0, %s163
  $region4: #{unet_model_forward.3} parent=0 // loop_header_branch
    %16 = sbr.rel (%p14) target = $region8
  $region5: #{unet_model_forward.3} parent=0 // loop_body
    %s18 = ssub.s32 %s13, 1
    %s19 = ssub.s32 %s13, 2
    %s20 = sadd.s32 %s13, 1
    %s21 = ssub.s32 %s13, %s20
    %p22 = scmp.eq.s32.totalorder %s21, 0
    %s24 = sadd.s32 %s23, 1
    %s25 = scalar_select %p22, %s23, %s24
    %p28 = pneg %p22
    %p29 = scmp.eq.s32.totalorder %s13, 1
    %p30 = por %p28, %p29
    %p31 = scmp.ne.s32.totalorder %s23, %s26
    %p32 = scmp.eq.s32.totalorder %s13, 0
    %p33 = por %p31, %p32
    %p34 = scmp.ne.s32.totalorder %s23, %s26
    %p35 = scmp.eq.s32.totalorder %s18, 1
    %p36 = por %p34, %p35
    %p37 = scmp.ne.s32.totalorder %s26, %s27
    %p38 = scmp.eq.s32.totalorder %s18, 0
    %p39 = por %p37, %p38
    %p40 = scmp.ne.s32.totalorder %s26, %s27
    %p41 = scmp.eq.s32.totalorder %s19, 1
    %p42 = por %p40, %p41
    %p44 = scmp.ne.s32.totalorder %s27, %s43
    %p45 = scmp.eq.s32.totalorder %s19, 0
    %p46 = por %p44, %p45
    %s48 = sadd.s32 %s47, 1
    %p51 = scmp.eq.s32.totalorder %s13, 1
    %p52 = scmp.ne.s32.totalorder %s47, %s49
    %p53 = scmp.eq.s32.totalorder %s13, 0
    %p54 = por %p52, %p53
    %p55 = scmp.ne.s32.totalorder %s47, %s49
    %p56 = scmp.eq.s32.totalorder %s18, 1
    %p57 = por %p55, %p56
    %p58 = scmp.ne.s32.totalorder %s49, %s50
    %p59 = scmp.eq.s32.totalorder %s18, 0
    %p60 = por %p58, %p59
    %p61 = scmp.ne.s32.totalorder %s49, %s50
    %p62 = scmp.eq.s32.totalorder %s19, 1
    %p63 = por %p61, %p62
    %p65 = scmp.ne.s32.totalorder %s50, %s64
    %p66 = scmp.eq.s32.totalorder %s19, 0
    %p67 = por %p65, %p66
    %s69 = sadd.s32 %s68, 1
    %p72 = scmp.eq.s32.totalorder %s13, 1
    %p73 = scmp.ne.s32.totalorder %s68, %s70
    %p74 = scmp.eq.s32.totalorder %s13, 0
    %p75 = por %p73, %p74
    %p76 = scmp.ne.s32.totalorder %s68, %s70
    %p77 = scmp.eq.s32.totalorder %s18, 1
    %p78 = por %p76, %p77
    %p79 = scmp.ne.s32.totalorder %s70, %s71
    %p80 = scmp.eq.s32.totalorder %s18, 0
    %p81 = por %p79, %p80
    %p82 = scmp.ne.s32.totalorder %s70, %s71
    %p83 = scmp.eq.s32.totalorder %s19, 1
    %p84 = por %p82, %p83
    %p86 = scmp.ne.s32.totalorder %s71, %s85
    %p87 = scmp.eq.s32.totalorder %s19, 0
    %p88 = por %p86, %p87
    %s90 = sadd.s32 %s89, 1
    %p93 = scmp.eq.s32.totalorder %s13, 1
    %p94 = scmp.ne.s32.totalorder %s89, %s91
    %p95 = scmp.eq.s32.totalorder %s13, 0
    %p96 = por %p94, %p95
    %p97 = scmp.ne.s32.totalorder %s89, %s91
    %p98 = scmp.eq.s32.totalorder %s18, 1
    %p99 = por %p97, %p98
    %p100 = scmp.ne.s32.totalorder %s91, %s92
    %p101 = scmp.eq.s32.totalorder %s18, 0
    %p102 = por %p100, %p101
    %p103 = scmp.ne.s32.totalorder %s91, %s92
    %p104 = scmp.eq.s32.totalorder %s19, 1
    %p105 = por %p103, %p104
    %p107 = scmp.ne.s32.totalorder %s92, %s106
    %p108 = scmp.eq.s32.totalorder %s19, 0
    %p109 = por %p107, %p108
    %s111 = sadd.s32 %s110, 1
    %p114 = scmp.eq.s32.totalorder %s13, 1
    %p115 = scmp.ne.s32.totalorder %s110, %s112
    %p116 = scmp.eq.s32.totalorder %s13, 0
    %p117 = por %p115, %p116
    %p118 = scmp.ne.s32.totalorder %s110, %s112
    %p119 = scmp.eq.s32.totalorder %s18, 1
    %p120 = por %p118, %p119
    %p121 = scmp.ne.s32.totalorder %s112, %s113
    %p122 = scmp.eq.s32.totalorder %s18, 0
    %p123 = por %p121, %p122
    %p124 = scmp.ne.s32.totalorder %s112, %s113
    %p125 = scmp.eq.s32.totalorder %s19, 1
    %p126 = por %p124, %p125
    %p128 = scmp.ne.s32.totalorder %s113, %s127
    %p129 = scmp.eq.s32.totalorder %s19, 0
    %p130 = por %p128, %p129
    %s131 = ssub.s32 %s13, %s20
    %p132 = scmp.eq.s32.totalorder %s131, 0
    %s134 = sadd.s32 %s133, 1
    %s135 = scalar_select %p132, %s133, %s134
    %p138 = pneg %p132
    %p139 = scmp.eq.s32.totalorder %s13, 1
    %p140 = por %p138, %p139
    %p141 = scmp.ne.s32.totalorder %s133, %s136
    %p142 = scmp.eq.s32.totalorder %s13, 0
    %p143 = por %p141, %p142
    %p144 = scmp.ne.s32.totalorder %s133, %s136
    %p145 = scmp.eq.s32.totalorder %s18, 1
    %p146 = por %p144, %p145
    %p147 = scmp.ne.s32.totalorder %s136, %s137
    %p148 = scmp.eq.s32.totalorder %s18, 0
    %p149 = por %p147, %p148
    %p150 = scmp.ne.s32.totalorder %s136, %s137
    %p151 = scmp.eq.s32.totalorder %s19, 1
    %p152 = por %p150, %p151
    %p154 = scmp.ne.s32.totalorder %s137, %s153
    %p155 = scmp.eq.s32.totalorder %s19, 0
    %p156 = por %p154, %p155
    %s157 = ssub.s32 %s13, %s20
    %p158 = scmp.eq.s32.totalorder %s157, 0
    %s160 = sadd.s32 %s159, 1
    %s161 = scalar_select %p158, %s159, %s160
    %p164 = pneg %p158
    %p165 = scmp.eq.s32.totalorder %s13, 1
    %p166 = por %p164, %p165
    %p167 = scmp.ne.s32.totalorder %s159, %s162
    %p168 = scmp.eq.s32.totalorder %s13, 0
    %p169 = por %p167, %p168
    %p170 = scmp.ne.s32.totalorder %s159, %s162
    %p171 = scmp.eq.s32.totalorder %s18, 1
    %p172 = por %p170, %p171
    %p173 = scmp.ne.s32.totalorder %s162, %s163
    %p174 = scmp.eq.s32.totalorder %s18, 0
    %p175 = por %p173, %p174
    %p176 = scmp.ne.s32.totalorder %s162, %s163
    %p177 = scmp.eq.s32.totalorder %s19, 1
    %p178 = por %p176, %p177
    %p180 = scmp.ne.s32.totalorder %s163, %s179
    %p181 = scmp.eq.s32.totalorder %s19, 0
    %p182 = por %p180, %p181
    %p183 = scmp.le.s32.totalorder 1, %s13
    %p184 = scmp.lt.s32.totalorder %s13, 3
    %p185 = pnand %p183, %p184
    %p186 = pneg %p185
    // Predicated region
    $region9: #{unet_model_forward.3} parent=5 // pred_check
      _
    $region10: #{unet_model_forward.3} parent=5 // pred_check_branch
      %188 = sbr.rel (%p185) target = $region12
    $region11: #{unet_model_forward.3} parent=5 // pred_region
      %s189 = ssub.s32 %s13, 1
      // Predicated region
      $region13: #{unet_model_forward.3} parent=11 // pred_check
        %p190 = pneg %p60
      $region14: #{unet_model_forward.3} parent=11 // pred_check_branch
        %192 = sbr.rel (%p190) target = $region16
      $region15: #{unet_model_forward.3} parent=11 // pred_region
        _
      $region16: #{unet_model_forward.3} parent=11 // pred_fallthru
        _
      // Predicated region
      $region17: #{unet_model_forward.3} parent=11 // pred_check
        %p193 = pneg %p81
      $region18: #{unet_model_forward.3} parent=11 // pred_check_branch
        %195 = sbr.rel (%p193) target = $region20
      $region19: #{unet_model_forward.3} parent=11 // pred_region
        _
      $region20: #{unet_model_forward.3} parent=11 // pred_fallthru
        _
      // Predicated region
      $region21: #{unet_model_forward.3} parent=11 // pred_check
        %p196 = pneg %p102
      $region22: #{unet_model_forward.3} parent=11 // pred_check_branch
        %198 = sbr.rel (%p196) target = $region24
      $region23: #{unet_model_forward.3} parent=11 // pred_region
        _
      $region24: #{unet_model_forward.3} parent=11 // pred_fallthru
        _
      // Predicated region
      $region25: #{unet_model_forward.3} parent=11 // pred_check
        %p199 = pneg %p123
      $region26: #{unet_model_forward.3} parent=11 // pred_check_branch
        %201 = sbr.rel (%p199) target = $region28
      $region27: #{unet_model_forward.3} parent=11 // pred_region
        _
      $region28: #{unet_model_forward.3} parent=11 // pred_fallthru
        _
    $region12: #{unet_model_forward.3} parent=5 // pred_fallthru
      _
    %p202 = scmp.lt.s32.totalorder %s13, 2
    // Predicated region
    $region29: #{unet_model_forward.3} parent=5 // pred_check
      %p203 = pneg %p202
    $region30: #{unet_model_forward.3} parent=5 // pred_check_branch
      %205 = sbr.rel (%p203) target = $region32
    $region31: #{unet_model_forward.3} parent=5 // pred_region
      // Predicated region
      $region33: #{unet_model_forward.3} parent=31 // pred_check
        %p206 = pneg %p33
      $region34: #{unet_model_forward.3} parent=31 // pred_check_branch
        %208 = sbr.rel (%p206) target = $region36
      $region35: #{unet_model_forward.3} parent=31 // pred_region
        %p209 = scmp.lt.s32.totalorder %s13, 1
        %s210 = scalar_select %p209, %s13, 1
        %s211 = smul.addr %s210, 11
        %s212 = scalar_lea.vmem %s0, %s211
      $region36: #{unet_model_forward.3} parent=31 // pred_fallthru
        _
    $region32: #{unet_model_forward.3} parent=5 // pred_fallthru
      _
    %p213 = scmp.le.s32.totalorder 1, %s13
    %p214 = scmp.lt.s32.totalorder %s13, 3
    %p215 = pnand %p213, %p214
    %p216 = pneg %p215
    // Predicated region
    $region37: #{unet_model_forward.3} parent=5 // pred_check
      _
    $region38: #{unet_model_forward.3} parent=5 // pred_check_branch
      %218 = sbr.rel (%p215) target = $region40
    $region39: #{unet_model_forward.3} parent=5 // pred_region
      %s219 = ssub.s32 %s13, 1
      %p220 = scmp.lt.s32.totalorder %s18, 1
      %s221 = scalar_select %p220, %s18, 1
      %s222 = smul.addr %s221, 11
      %s223 = scalar_lea.vmem %s0, %s222
      %p224 = pneg %p39
      %p225 = pneg %p36
      %p226 = pneg %p60
      %p227 = pneg %p57
      %p228 = pneg %p81
      %p229 = pneg %p78
      %p230 = pneg %p102
      %p231 = pneg %p99
      %p232 = pneg %p123
      %p233 = pneg %p120
      %p234 = pneg %p149
      %p235 = pneg %p146
      %p236 = scmp.lt.s32.totalorder %s18, 1
      %s237 = scalar_select %p236, %s18, 1
      %s238 = smul.addr %s237, 16
      %s239 = smul.addr %s238, 8
      %s240 = scalar_lea.vmem %s5, %s239
      %p241 = pneg %p175
      %p242 = pneg %p172
      %p243 = scmp.lt.s32.totalorder %s18, 1
      %s244 = scalar_select %p243, %s18, 1
      %s245 = smul.addr %s244, 5
      %s246 = smul.addr %s245, 8
      %s247 = scalar_lea.vmem %s6, %s246
      %p248 = scmp.lt.s32.totalorder %s18, 1
      %s249 = scalar_select %p248, %s18, 1
      %s250 = smul.addr %s249, 11
      %s251 = scalar_lea.vmem %s0, %s250
      %p252 = scmp.lt.s32.totalorder %s18, 1
      %s253 = scalar_select %p252, %s18, 1
      %s254 = smul.addr %s253, 16
      %s255 = smul.addr %s254, 8
      %s256 = scalar_lea.vmem %s5, %s255
      %p257 = scmp.lt.s32.totalorder %s18, 1
      %s258 = scalar_select %p257, %s18, 1
      %s259 = smul.addr %s258, 5
      %s260 = smul.addr %s259, 8
      %s261 = scalar_lea.vmem %s6, %s260
      %v262 = vld [vmem:[%s251] sm:$0xff]
      %v263 = vld [vmem:[%s251 + $0x8] sm:$0x7]
      %v264 = vld [vmem:[%s1] sm:$0xff]
      %266 = vset.pattern.permute.xlu0 0
      %267 = vperm.xlu0 %266, %v264
      %v268 = vpop.permute.xlu0 %267
      %v272 = vperm.slane %v262, 0
      %v273 = vperm.slane %v262, 1
      %v274 = vperm.slane %v262, 2
      %v275 = vperm.slane %v262, 3
      %v276 = vperm.slane %v262, 4
      %v277 = vperm.slane %v262, 5
      %v278 = vperm.slane %v262, 6
      %v279 = vperm.slane %v262, 7
      %v280 = vperm.slane %v263, 0
      %v281 = vperm.slane %v263, 1
      %v292 = vmul.f32 %v268, %v272
      %v293 = vmul.f32 %v268, %v273
      %v294 = vmul.f32 %v268, %v274
      %v295 = vmul.f32 %v268, %v275
      %v296 = vmul.f32 %v268, %v276
      %v297 = vmul.f32 %v268, %v277
      %v298 = vmul.f32 %v268, %v278
      %v299 = vmul.f32 %v268, %v279
      %v300 = vmul.f32 %v268, %v280
      %v301 = vmul.f32 %v268, %v281
      %302 = vset.pattern.permute.xlu0 1
      %303 = vperm.xlu0 %302, %v264
      %v304 = vpop.permute.xlu0 %303
      %v306 = vmul.f32 %v304, %v272
      %v307 = vmul.f32 %v304, %v273
      %v308 = vmul.f32 %v304, %v274
      %v309 = vmul.f32 %v304, %v275
      %v310 = vmul.f32 %v304, %v276
      %v311 = vmul.f32 %v304, %v277
      %v312 = vmul.f32 %v304, %v278
      %v313 = vmul.f32 %v304, %v279
      %v314 = vmul.f32 %v304, %v280
      %v315 = vmul.f32 %v304, %v281
      %326 = vrot.lane.b32.xlu0 %v306, 127
      %v327 = vpop.permute.xlu0 %326
      %328 = vrot.lane.b32.xlu0 %v307, 127
      %v329 = vpop.permute.xlu0 %328
      %330 = vrot.lane.b32.xlu0 %v308, 127
      %v331 = vpop.permute.xlu0 %330
      %332 = vrot.lane.b32.xlu0 %v309, 127
      %v333 = vpop.permute.xlu0 %332
      %334 = vrot.lane.b32.xlu0 %v310, 127
      %v335 = vpop.permute.xlu0 %334
      %336 = vrot.lane.b32.xlu0 %v311, 127
      %v337 = vpop.permute.xlu0 %336
      %338 = vrot.lane.b32.xlu0 %v312, 127
      %v339 = vpop.permute.xlu0 %338
      %340 = vrot.lane.b32.xlu0 %v313, 127
      %v341 = vpop.permute.xlu0 %340
      %342 = vrot.lane.b32.xlu0 %v314, 127
      %v343 = vpop.permute.xlu0 %342
      %344 = vrot.lane.b32.xlu0 %v315, 127
      %v345 = vpop.permute.xlu0 %344
      %vm346 = vcmask 1039360
      %v347 = vsel %vm346, %v327, %v329
      %v348 = vsel %vm346, %v329, %v331
      %v349 = vsel %vm346, %v331, %v333
      %v350 = vsel %vm346, %v333, %v335
      %v351 = vsel %vm346, %v335, %v337
      %v352 = vsel %vm346, %v337, %v339
      %v353 = vsel %vm346, %v339, %v341
      %v354 = vsel %vm346, %v341, %v343
      %v355 = vsel %vm346, %v343, %v345
      %v366 = vadd.f32 %v292, %v347
      %v367 = vadd.f32 %v293, %v348
      %v368 = vadd.f32 %v294, %v349
      %v369 = vadd.f32 %v295, %v350
      %v370 = vadd.f32 %v296, %v351
      %v371 = vadd.f32 %v297, %v352
      %v372 = vadd.f32 %v298, %v353
      %v373 = vadd.f32 %v299, %v354
      %v374 = vadd.f32 %v300, %v355
      %v375 = vadd.f32 %v301, %v345
      %376 = vset.pattern.permute.xlu0 2
      %377 = vperm.xlu0 %376, %v264
      %v378 = vpop.permute.xlu0 %377
      %v380 = vmul.f32 %v378, %v272
      %v381 = vmul.f32 %v378, %v273
      %v382 = vmul.f32 %v378, %v274
      %v383 = vmul.f32 %v378, %v275
      %v384 = vmul.f32 %v378, %v276
      %v385 = vmul.f32 %v378, %v277
      %v386 = vmul.f32 %v378, %v278
      %v387 = vmul.f32 %v378, %v279
      %v388 = vmul.f32 %v378, %v280
      %v389 = vmul.f32 %v378, %v281
      %400 = vrot.lane.b32.xlu0 %v380, 126
      %v401 = vpop.permute.xlu0 %400
      %402 = vrot.lane.b32.xlu0 %v381, 126
      %v403 = vpop.permute.xlu0 %402
      %404 = vrot.lane.b32.xlu0 %v382, 126
      %v405 = vpop.permute.xlu0 %404
      %406 = vrot.lane.b32.xlu0 %v383, 126
      %v407 = vpop.permute.xlu0 %406
      %408 = vrot.lane.b32.xlu0 %v384, 126
      %v409 = vpop.permute.xlu0 %408
      %410 = vrot.lane.b32.xlu0 %v385, 126
      %v411 = vpop.permute.xlu0 %410
      %412 = vrot.lane.b32.xlu0 %v386, 126
      %v413 = vpop.permute.xlu0 %412
      %414 = vrot.lane.b32.xlu0 %v387, 126
      %v415 = vpop.permute.xlu0 %414
      %416 = vrot.lane.b32.xlu0 %v388, 126
      %v417 = vpop.permute.xlu0 %416
      %418 = vrot.lane.b32.xlu0 %v389, 126
      %v419 = vpop.permute.xlu0 %418
      %vm420 = vcmask 1031168
      %v421 = vsel %vm420, %v401, %v403
      %v422 = vsel %vm420, %v403, %v405
      %v423 = vsel %vm420, %v405, %v407
      %v424 = vsel %vm420, %v407, %v409
      %v425 = vsel %vm420, %v409, %v411
      %v426 = vsel %vm420, %v411, %v413
      %v427 = vsel %vm420, %v413, %v415
      %v428 = vsel %vm420, %v415, %v417
      %v429 = vsel %vm420, %v417, %v419
      %v440 = vadd.f32 %v366, %v421
      %v441 = vadd.f32 %v367, %v422
      %v442 = vadd.f32 %v368, %v423
      %v443 = vadd.f32 %v369, %v424
      %v444 = vadd.f32 %v370, %v425
      %v445 = vadd.f32 %v371, %v426
      %v446 = vadd.f32 %v372, %v427
      %v447 = vadd.f32 %v373, %v428
      %v448 = vadd.f32 %v374, %v429
      %v449 = vadd.f32 %v375, %v419
      %450 = vset.pattern.permute.xlu0 3
      %451 = vperm.xlu0 %450, %v264
      %v452 = vpop.permute.xlu0 %451
      %v454 = vmul.f32 %v452, %v272
      %v455 = vmul.f32 %v452, %v273
      %v456 = vmul.f32 %v452, %v274
      %v457 = vmul.f32 %v452, %v275
      %v458 = vmul.f32 %v452, %v276
      %v459 = vmul.f32 %v452, %v277
      %v460 = vmul.f32 %v452, %v278
      %v461 = vmul.f32 %v452, %v279
      %v462 = vmul.f32 %v452, %v280
      %v463 = vmul.f32 %v452, %v281
      %474 = vrot.lane.b32.xlu0 %v454, 92
      %v475 = vpop.permute.xlu0 %474
      %476 = vrot.lane.b32.xlu0 %v455, 92
      %v477 = vpop.permute.xlu0 %476
      %478 = vrot.lane.b32.xlu0 %v456, 92
      %v479 = vpop.permute.xlu0 %478
      %480 = vrot.lane.b32.xlu0 %v457, 92
      %v481 = vpop.permute.xlu0 %480
      %482 = vrot.lane.b32.xlu0 %v458, 92
      %v483 = vpop.permute.xlu0 %482
      %484 = vrot.lane.b32.xlu0 %v459, 92
      %v485 = vpop.permute.xlu0 %484
      %486 = vrot.lane.b32.xlu0 %v460, 92
      %v487 = vpop.permute.xlu0 %486
      %488 = vrot.lane.b32.xlu0 %v461, 92
      %v489 = vpop.permute.xlu0 %488
      %490 = vrot.lane.b32.xlu0 %v462, 92
      %v491 = vpop.permute.xlu0 %490
      %492 = vrot.lane.b32.xlu0 %v463, 92
      %v493 = vpop.permute.xlu0 %492
      %vm494 = vcmask 752640
      %v495 = vsel %vm494, %v475, %v477
      %v496 = vsel %vm494, %v477, %v479
      %v497 = vsel %vm494, %v479, %v481
      %v498 = vsel %vm494, %v481, %v483
      %v499 = vsel %vm494, %v483, %v485
      %v500 = vsel %vm494, %v485, %v487
      %v501 = vsel %vm494, %v487, %v489
      %v502 = vsel %vm494, %v489, %v491
      %v503 = vsel %vm494, %v491, %v493
      %v514 = vadd.f32 %v440, %v495
      %v515 = vadd.f32 %v441, %v496
      %v516 = vadd.f32 %v442, %v497
      %v517 = vadd.f32 %v443, %v498
      %v518 = vadd.f32 %v444, %v499
      %v519 = vadd.f32 %v445, %v500
      %v520 = vadd.f32 %v446, %v501
      %v521 = vadd.f32 %v447, %v502
      %v522 = vadd.f32 %v448, %v503
      %v523 = vadd.f32 %v449, %v493
      %524 = vset.pattern.permute.xlu0 4
      %525 = vperm.xlu0 %524, %v264
      %v526 = vpop.permute.xlu0 %525
      %v528 = vmul.f32 %v526, %v272
      %v529 = vmul.f32 %v526, %v273
      %v530 = vmul.f32 %v526, %v274
      %v531 = vmul.f32 %v526, %v275
      %v532 = vmul.f32 %v526, %v276
      %v533 = vmul.f32 %v526, %v277
      %v534 = vmul.f32 %v526, %v278
      %v535 = vmul.f32 %v526, %v279
      %v536 = vmul.f32 %v526, %v280
      %v537 = vmul.f32 %v526, %v281
      %548 = vrot.lane.b32.xlu0 %v528, 91
      %v549 = vpop.permute.xlu0 %548
      %550 = vrot.lane.b32.xlu0 %v529, 91
      %v551 = vpop.permute.xlu0 %550
      %552 = vrot.lane.b32.xlu0 %v530, 91
      %v553 = vpop.permute.xlu0 %552
      %554 = vrot.lane.b32.xlu0 %v531, 91
      %v555 = vpop.permute.xlu0 %554
      %556 = vrot.lane.b32.xlu0 %v532, 91
      %v557 = vpop.permute.xlu0 %556
      %558 = vrot.lane.b32.xlu0 %v533, 91
      %v559 = vpop.permute.xlu0 %558
      %560 = vrot.lane.b32.xlu0 %v534, 91
      %v561 = vpop.permute.xlu0 %560
      %562 = vrot.lane.b32.xlu0 %v535, 91
      %v563 = vpop.permute.xlu0 %562
      %564 = vrot.lane.b32.xlu0 %v536, 91
      %v565 = vpop.permute.xlu0 %564
      %566 = vrot.lane.b32.xlu0 %v537, 91
      %v567 = vpop.permute.xlu0 %566
      %vm568 = vcmask 744448
      %v569 = vsel %vm568, %v549, %v551
      %v570 = vsel %vm568, %v551, %v553
      %v571 = vsel %vm568, %v553, %v555
      %v572 = vsel %vm568, %v555, %v557
      %v573 = vsel %vm568, %v557, %v559
      %v574 = vsel %vm568, %v559, %v561
      %v575 = vsel %vm568, %v561, %v563
      %v576 = vsel %vm568, %v563, %v565
      %v577 = vsel %vm568, %v565, %v567
      %v588 = vadd.f32 %v514, %v569
      %v589 = vadd.f32 %v515, %v570
      %v590 = vadd.f32 %v516, %v571
      %v591 = vadd.f32 %v517, %v572
      %v592 = vadd.f32 %v518, %v573
      %v593 = vadd.f32 %v519, %v574
      %v594 = vadd.f32 %v520, %v575
      %v595 = vadd.f32 %v521, %v576
      %v596 = vadd.f32 %v522, %v577
      %v597 = vadd.f32 %v523, %v567
      %598 = vset.pattern.permute.xlu0 5
      %599 = vperm.xlu0 %598, %v264
      %v600 = vpop.permute.xlu0 %599
      %v602 = vmul.f32 %v600, %v272
      %v603 = vmul.f32 %v600, %v273
      %v604 = vmul.f32 %v600, %v274
      %v605 = vmul.f32 %v600, %v275
      %v606 = vmul.f32 %v600, %v276
      %v607 = vmul.f32 %v600, %v277
      %v608 = vmul.f32 %v600, %v278
      %v609 = vmul.f32 %v600, %v279
      %v610 = vmul.f32 %v600, %v280
      %v611 = vmul.f32 %v600, %v281
      %622 = vrot.lane.b32.xlu0 %v602, 90
      %v623 = vpop.permute.xlu0 %622
      %624 = vrot.lane.b32.xlu0 %v603, 90
      %v625 = vpop.permute.xlu0 %624
      %626 = vrot.lane.b32.xlu0 %v604, 90
      %v627 = vpop.permute.xlu0 %626
      %628 = vrot.lane.b32.xlu0 %v605, 90
      %v629 = vpop.permute.xlu0 %628
      %630 = vrot.lane.b32.xlu0 %v606, 90
      %v631 = vpop.permute.xlu0 %630
      %632 = vrot.lane.b32.xlu0 %v607, 90
      %v633 = vpop.permute.xlu0 %632
      %634 = vrot.lane.b32.xlu0 %v608, 90
      %v635 = vpop.permute.xlu0 %634
      %636 = vrot.lane.b32.xlu0 %v609, 90
      %v637 = vpop.permute.xlu0 %636
      %638 = vrot.lane.b32.xlu0 %v610, 90
      %v639 = vpop.permute.xlu0 %638
      %640 = vrot.lane.b32.xlu0 %v611, 90
      %v641 = vpop.permute.xlu0 %640
      %vm642 = vcmask 736256
      %v643 = vsel %vm642, %v623, %v625
      %v644 = vsel %vm642, %v625, %v627
      %v645 = vsel %vm642, %v627, %v629
      %v646 = vsel %vm642, %v629, %v631
      %v647 = vsel %vm642, %v631, %v633
      %v648 = vsel %vm642, %v633, %v635
      %v649 = vsel %vm642, %v635, %v637
      %v650 = vsel %vm642, %v637, %v639
      %v651 = vsel %vm642, %v639, %v641
      %v662 = vadd.f32 %v588, %v643
      %v663 = vadd.f32 %v589, %v644
      %v664 = vadd.f32 %v590, %v645
      %v665 = vadd.f32 %v591, %v646
      %v666 = vadd.f32 %v592, %v647
      %v667 = vadd.f32 %v593, %v648
      %v668 = vadd.f32 %v594, %v649
      %v669 = vadd.f32 %v595, %v650
      %v670 = vadd.f32 %v596, %v651
      %v671 = vadd.f32 %v597, %v641
      %672 = vset.pattern.permute.xlu0 6
      %673 = vperm.xlu0 %672, %v264
      %v674 = vpop.permute.xlu0 %673
      %v676 = vperm.slane %v263, 2
      %v678 = vmul.f32 %v674, %v272
      %v679 = vmul.f32 %v674, %v273
      %v680 = vmul.f32 %v674, %v274
      %v681 = vmul.f32 %v674, %v275
      %v682 = vmul.f32 %v674, %v276
      %v683 = vmul.f32 %v674, %v277
      %v684 = vmul.f32 %v674, %v278
      %v685 = vmul.f32 %v674, %v279
      %v686 = vmul.f32 %v674, %v280
      %v687 = vmul.f32 %v674, %v281
      %v688 = vmul.f32 %v674, %v676
      %700 = vrot.lane.b32.xlu0 %v678, 56
      %v701 = vpop.permute.xlu0 %700
      %702 = vrot.lane.b32.xlu0 %v679, 56
      %v703 = vpop.permute.xlu0 %702
      %704 = vrot.lane.b32.xlu0 %v680, 56
      %v705 = vpop.permute.xlu0 %704
      %706 = vrot.lane.b32.xlu0 %v681, 56
      %v707 = vpop.permute.xlu0 %706
      %708 = vrot.lane.b32.xlu0 %v682, 56
      %v709 = vpop.permute.xlu0 %708
      %710 = vrot.lane.b32.xlu0 %v683, 56
      %v711 = vpop.permute.xlu0 %710
      %712 = vrot.lane.b32.xlu0 %v684, 56
      %v713 = vpop.permute.xlu0 %712
      %714 = vrot.lane.b32.xlu0 %v685, 56
      %v715 = vpop.permute.xlu0 %714
      %716 = vrot.lane.b32.xlu0 %v686, 56
      %v717 = vpop.permute.xlu0 %716
      %718 = vrot.lane.b32.xlu0 %v687, 56
      %v719 = vpop.permute.xlu0 %718
      %720 = vrot.lane.b32.xlu0 %v688, 56
      %v721 = vpop.permute.xlu0 %720
      %vm722 = vcmask 457728
      %v723 = vsel %vm722, %v701, %v703
      %v724 = vsel %vm722, %v703, %v705
      %v725 = vsel %vm722, %v705, %v707
      %v726 = vsel %vm722, %v707, %v709
      %v727 = vsel %vm722, %v709, %v711
      %v728 = vsel %vm722, %v711, %v713
      %v729 = vsel %vm722, %v713, %v715
      %v730 = vsel %vm722, %v715, %v717
      %v731 = vsel %vm722, %v717, %v719
      %v732 = vsel %vm722, %v719, %v721
      %v743 = vadd.f32 %v662, %v723
      %v744 = vadd.f32 %v663, %v724
      %v745 = vadd.f32 %v664, %v725
      %v746 = vadd.f32 %v665, %v726
      %v747 = vadd.f32 %v666, %v727
      %v748 = vadd.f32 %v667, %v728
      %v749 = vadd.f32 %v668, %v729
      %v750 = vadd.f32 %v669, %v730
      %v751 = vadd.f32 %v670, %v731
      %v752 = vadd.f32 %v671, %v732
      %753 = vset.pattern.permute.xlu0 7
      %754 = vperm.xlu0 %753, %v264
      %v755 = vpop.permute.xlu0 %754
      %v757 = vmul.f32 %v755, %v272
      %v758 = vmul.f32 %v755, %v273
      %v759 = vmul.f32 %v755, %v274
      %v760 = vmul.f32 %v755, %v275
      %v761 = vmul.f32 %v755, %v276
      %v762 = vmul.f32 %v755, %v277
      %v763 = vmul.f32 %v755, %v278
      %v764 = vmul.f32 %v755, %v279
      %v765 = vmul.f32 %v755, %v280
      %v766 = vmul.f32 %v755, %v281
      %v767 = vmul.f32 %v755, %v676
      %779 = vrot.lane.b32.xlu0 %v757, 55
      %v780 = vpop.permute.xlu0 %779
      %781 = vrot.lane.b32.xlu0 %v758, 55
      %v782 = vpop.permute.xlu0 %781
      %783 = vrot.lane.b32.xlu0 %v759, 55
      %v784 = vpop.permute.xlu0 %783
      %785 = vrot.lane.b32.xlu0 %v760, 55
      %v786 = vpop.permute.xlu0 %785
      %787 = vrot.lane.b32.xlu0 %v761, 55
      %v788 = vpop.permute.xlu0 %787
      %789 = vrot.lane.b32.xlu0 %v762, 55
      %v790 = vpop.permute.xlu0 %789
      %791 = vrot.lane.b32.xlu0 %v763, 55
      %v792 = vpop.permute.xlu0 %791
      %793 = vrot.lane.b32.xlu0 %v764, 55
      %v794 = vpop.permute.xlu0 %793
      %795 = vrot.lane.b32.xlu0 %v765, 55
      %v796 = vpop.permute.xlu0 %795
      %797 = vrot.lane.b32.xlu0 %v766, 55
      %v798 = vpop.permute.xlu0 %797
      %799 = vrot.lane.b32.xlu0 %v767, 55
      %v800 = vpop.permute.xlu0 %799
      %vm801 = vcmask 449536
      %v802 = vsel %vm801, %v780, %v782
      %v803 = vsel %vm801, %v782, %v784
      %v804 = vsel %vm801, %v784, %v786
      %v805 = vsel %vm801, %v786, %v788
      %v806 = vsel %vm801, %v788, %v790
      %v807 = vsel %vm801, %v790, %v792
      %v808 = vsel %vm801, %v792, %v794
      %v809 = vsel %vm801, %v794, %v796
      %v810 = vsel %vm801, %v796, %v798
      %v811 = vsel %vm801, %v798, %v800
      %v822 = vadd.f32 %v743, %v802
      %v823 = vadd.f32 %v744, %v803
      %v824 = vadd.f32 %v745, %v804
      %v825 = vadd.f32 %v746, %v805
      %v826 = vadd.f32 %v747, %v806
      %v827 = vadd.f32 %v748, %v807
      %v828 = vadd.f32 %v749, %v808
      %v829 = vadd.f32 %v750, %v809
      %v830 = vadd.f32 %v751, %v810
      %v831 = vadd.f32 %v752, %v811
      %832 = vset.pattern.permute.xlu0 8
      %833 = vperm.xlu0 %832, %v264
      %v834 = vpop.permute.xlu0 %833
      %v836 = vmul.f32 %v834, %v272
      %v837 = vmul.f32 %v834, %v273
      %v838 = vmul.f32 %v834, %v274
      %v839 = vmul.f32 %v834, %v275
      %v840 = vmul.f32 %v834, %v276
      %v841 = vmul.f32 %v834, %v277
      %v842 = vmul.f32 %v834, %v278
      %v843 = vmul.f32 %v834, %v279
      %v844 = vmul.f32 %v834, %v280
      %v845 = vmul.f32 %v834, %v281
      %v846 = vmul.f32 %v834, %v676
      %858 = vrot.lane.b32.xlu0 %v836, 54
      %v859 = vpop.permute.xlu0 %858
      %860 = vrot.lane.b32.xlu0 %v837, 54
      %v861 = vpop.permute.xlu0 %860
      %862 = vrot.lane.b32.xlu0 %v838, 54
      %v863 = vpop.permute.xlu0 %862
      %864 = vrot.lane.b32.xlu0 %v839, 54
      %v865 = vpop.permute.xlu0 %864
      %866 = vrot.lane.b32.xlu0 %v840, 54
      %v867 = vpop.permute.xlu0 %866
      %868 = vrot.lane.b32.xlu0 %v841, 54
      %v869 = vpop.permute.xlu0 %868
      %870 = vrot.lane.b32.xlu0 %v842, 54
      %v871 = vpop.permute.xlu0 %870
      %872 = vrot.lane.b32.xlu0 %v843, 54
      %v873 = vpop.permute.xlu0 %872
      %874 = vrot.lane.b32.xlu0 %v844, 54
      %v875 = vpop.permute.xlu0 %874
      %876 = vrot.lane.b32.xlu0 %v845, 54
      %v877 = vpop.permute.xlu0 %876
      %878 = vrot.lane.b32.xlu0 %v846, 54
      %v879 = vpop.permute.xlu0 %878
      %vm880 = vcmask 441344
      %v881 = vsel %vm880, %v859, %v861
      %v882 = vsel %vm880, %v861, %v863
      %v883 = vsel %vm880, %v863, %v865
      %v884 = vsel %vm880, %v865, %v867
      %v885 = vsel %vm880, %v867, %v869
      %v886 = vsel %vm880, %v869, %v871
      %v887 = vsel %vm880, %v871, %v873
      %v888 = vsel %vm880, %v873, %v875
      %v889 = vsel %vm880, %v875, %v877
      %v890 = vsel %vm880, %v877, %v879
      %v901 = vadd.f32 %v822, %v881
      %v902 = vadd.f32 %v823, %v882
      %v903 = vadd.f32 %v824, %v883
      %v904 = vadd.f32 %v825, %v884
      %v905 = vadd.f32 %v826, %v885
      %v906 = vadd.f32 %v827, %v886
      %v907 = vadd.f32 %v828, %v887
      %v908 = vadd.f32 %v829, %v888
      %v909 = vadd.f32 %v830, %v889
      %v910 = vadd.f32 %v831, %v890
      %v911 = vld [vmem:[%s2] sm:$0xff]
      %913 = vset.pattern.permute.xlu0 0
      %914 = vperm.xlu0 %913, %v911
      %v915 = vpop.permute.xlu0 %914
      %v917 = vadd.f32 %v901, %v915
      %v918 = vadd.f32 %v902, %v915
      %v919 = vadd.f32 %v903, %v915
      %v920 = vadd.f32 %v904, %v915
      %v921 = vadd.f32 %v905, %v915
      %v922 = vadd.f32 %v906, %v915
      %v923 = vadd.f32 %v907, %v915
      %v924 = vadd.f32 %v908, %v915
      %v925 = vadd.f32 %v909, %v915
      %v926 = vadd.f32 %v910, %v915
      %v927 = vmax.f32 %v917, 0.0
      %v928 = vmax.f32 %v918, 0.0
      %v929 = vmax.f32 %v919, 0.0
      %v930 = vmax.f32 %v920, 0.0
      %v931 = vmax.f32 %v921, 0.0
      %v932 = vmax.f32 %v922, 0.0
      %v933 = vmax.f32 %v923, 0.0
      %v934 = vmax.f32 %v924, 0.0
      %v935 = vmax.f32 %v925, 0.0
      %v936 = vmax.f32 %v926, 0.0
      %946 = vrot.lane.b32.xlu0 %v927, 127
      %v947 = vpop.permute.xlu0 %946
      %948 = vrot.lane.b32.xlu0 %v928, 127
      %v949 = vpop.permute.xlu0 %948
      %950 = vrot.lane.b32.xlu0 %v929, 127
      %v951 = vpop.permute.xlu0 %950
      %952 = vrot.lane.b32.xlu0 %v930, 127
      %v953 = vpop.permute.xlu0 %952
      %954 = vrot.lane.b32.xlu0 %v931, 127
      %v955 = vpop.permute.xlu0 %954
      %956 = vrot.lane.b32.xlu0 %v932, 127
      %v957 = vpop.permute.xlu0 %956
      %958 = vrot.lane.b32.xlu0 %v933, 127
      %v959 = vpop.permute.xlu0 %958
      %960 = vrot.lane.b32.xlu0 %v934, 127
      %v961 = vpop.permute.xlu0 %960
      %962 = vrot.lane.b32.xlu0 %v935, 127
      %v963 = vpop.permute.xlu0 %962
      %v964 = vsel %vm346, %v947, %v949
      %v965 = vsel %vm346, %v949, %v951
      %v966 = vsel %vm346, %v951, %v953
      %v967 = vsel %vm346, %v953, %v955
      %v968 = vsel %vm346, %v955, %v957
      %v969 = vsel %vm346, %v957, %v959
      %v970 = vsel %vm346, %v959, %v961
      %v971 = vsel %vm346, %v961, %v963
      %981 = vrot.lane.b32.xlu0 %v927, 126
      %v982 = vpop.permute.xlu0 %981
      %983 = vrot.lane.b32.xlu0 %v928, 126
      %v984 = vpop.permute.xlu0 %983
      %985 = vrot.lane.b32.xlu0 %v929, 126
      %v986 = vpop.permute.xlu0 %985
      %987 = vrot.lane.b32.xlu0 %v930, 126
      %v988 = vpop.permute.xlu0 %987
      %989 = vrot.lane.b32.xlu0 %v931, 126
      %v990 = vpop.permute.xlu0 %989
      %991 = vrot.lane.b32.xlu0 %v932, 126
      %v992 = vpop.permute.xlu0 %991
      %993 = vrot.lane.b32.xlu0 %v933, 126
      %v994 = vpop.permute.xlu0 %993
      %995 = vrot.lane.b32.xlu0 %v934, 126
      %v996 = vpop.permute.xlu0 %995
      %997 = vrot.lane.b32.xlu0 %v935, 126
      %v998 = vpop.permute.xlu0 %997
      %v999 = vsel %vm420, %v982, %v984
      %v1000 = vsel %vm420, %v984, %v986
      %v1001 = vsel %vm420, %v986, %v988
      %v1002 = vsel %vm420, %v988, %v990
      %v1003 = vsel %vm420, %v990, %v992
      %v1004 = vsel %vm420, %v992, %v994
      %v1005 = vsel %vm420, %v994, %v996
      %v1006 = vsel %vm420, %v996, %v998
      %1017 = vrot.lane.b32.xlu0 %v927, 92
      %v1018 = vpop.permute.xlu0 %1017
      %1019 = vrot.lane.b32.xlu0 %v928, 92
      %v1020 = vpop.permute.xlu0 %1019
      %1021 = vrot.lane.b32.xlu0 %v929, 92
      %v1022 = vpop.permute.xlu0 %1021
      %1023 = vrot.lane.b32.xlu0 %v930, 92
      %v1024 = vpop.permute.xlu0 %1023
      %1025 = vrot.lane.b32.xlu0 %v931, 92
      %v1026 = vpop.permute.xlu0 %1025
      %1027 = vrot.lane.b32.xlu0 %v932, 92
      %v1028 = vpop.permute.xlu0 %1027
      %1029 = vrot.lane.b32.xlu0 %v933, 92
      %v1030 = vpop.permute.xlu0 %1029
      %1031 = vrot.lane.b32.xlu0 %v934, 92
      %v1032 = vpop.permute.xlu0 %1031
      %1033 = vrot.lane.b32.xlu0 %v935, 92
      %v1034 = vpop.permute.xlu0 %1033
      %1035 = vrot.lane.b32.xlu0 %v936, 92
      %v1036 = vpop.permute.xlu0 %1035
      %v1037 = vsel %vm494, %v1018, %v1020
      %v1038 = vsel %vm494, %v1020, %v1022
      %v1039 = vsel %vm494, %v1022, %v1024
      %v1040 = vsel %vm494, %v1024, %v1026
      %v1041 = vsel %vm494, %v1026, %v1028
      %v1042 = vsel %vm494, %v1028, %v1030
      %v1043 = vsel %vm494, %v1030, %v1032
      %v1044 = vsel %vm494, %v1032, %v1034
      %v1045 = vsel %vm494, %v1034, %v1036
      %1055 = vrot.lane.b32.xlu0 %v927, 91
      %v1056 = vpop.permute.xlu0 %1055
      %1057 = vrot.lane.b32.xlu0 %v928, 91
      %v1058 = vpop.permute.xlu0 %1057
      %1059 = vrot.lane.b32.xlu0 %v929, 91
      %v1060 = vpop.permute.xlu0 %1059
      %1061 = vrot.lane.b32.xlu0 %v930, 91
      %v1062 = vpop.permute.xlu0 %1061
      %1063 = vrot.lane.b32.xlu0 %v931, 91
      %v1064 = vpop.permute.xlu0 %1063
      %1065 = vrot.lane.b32.xlu0 %v932, 91
      %v1066 = vpop.permute.xlu0 %1065
      %1067 = vrot.lane.b32.xlu0 %v933, 91
      %v1068 = vpop.permute.xlu0 %1067
      %1069 = vrot.lane.b32.xlu0 %v934, 91
      %v1070 = vpop.permute.xlu0 %1069
      %1071 = vrot.lane.b32.xlu0 %v935, 91
      %v1072 = vpop.permute.xlu0 %1071
      %1073 = vrot.lane.b32.xlu0 %v936, 91
      %v1074 = vpop.permute.xlu0 %1073
      %v1075 = vsel %vm568, %v1056, %v1058
      %v1076 = vsel %vm568, %v1058, %v1060
      %v1077 = vsel %vm568, %v1060, %v1062
      %v1078 = vsel %vm568, %v1062, %v1064
      %v1079 = vsel %vm568, %v1064, %v1066
      %v1080 = vsel %vm568, %v1066, %v1068
      %v1081 = vsel %vm568, %v1068, %v1070
      %v1082 = vsel %vm568, %v1070, %v1072
      %v1083 = vsel %vm568, %v1072, %v1074
      %1093 = vrot.lane.b32.xlu0 %v927, 90
      %v1094 = vpop.permute.xlu0 %1093
      %1095 = vrot.lane.b32.xlu0 %v928, 90
      %v1096 = vpop.permute.xlu0 %1095
      %1097 = vrot.lane.b32.xlu0 %v929, 90
      %v1098 = vpop.permute.xlu0 %1097
      %1099 = vrot.lane.b32.xlu0 %v930, 90
      %v1100 = vpop.permute.xlu0 %1099
      %1101 = vrot.lane.b32.xlu0 %v931, 90
      %v1102 = vpop.permute.xlu0 %1101
      %1103 = vrot.lane.b32.xlu0 %v932, 90
      %v1104 = vpop.permute.xlu0 %1103
      %1105 = vrot.lane.b32.xlu0 %v933, 90
      %v1106 = vpop.permute.xlu0 %1105
      %1107 = vrot.lane.b32.xlu0 %v934, 90
      %v1108 = vpop.permute.xlu0 %1107
      %1109 = vrot.lane.b32.xlu0 %v935, 90
      %v1110 = vpop.permute.xlu0 %1109
      %1111 = vrot.lane.b32.xlu0 %v936, 90
      %v1112 = vpop.permute.xlu0 %1111
      %v1113 = vsel %vm642, %v1094, %v1096
      %v1114 = vsel %vm642, %v1096, %v1098
      %v1115 = vsel %vm642, %v1098, %v1100
      %v1116 = vsel %vm642, %v1100, %v1102
      %v1117 = vsel %vm642, %v1102, %v1104
      %v1118 = vsel %vm642, %v1104, %v1106
      %v1119 = vsel %vm642, %v1106, %v1108
      %v1120 = vsel %vm642, %v1108, %v1110
      %v1121 = vsel %vm642, %v1110, %v1112
      %1131 = vrot.lane.b32.xlu0 %v927, 56
      %v1132 = vpop.permute.xlu0 %1131
      %1133 = vrot.lane.b32.xlu0 %v928, 56
      %v1134 = vpop.permute.xlu0 %1133
      %1135 = vrot.lane.b32.xlu0 %v929, 56
      %v1136 = vpop.permute.xlu0 %1135
      %1137 = vrot.lane.b32.xlu0 %v930, 56
      %v1138 = vpop.permute.xlu0 %1137
      %1139 = vrot.lane.b32.xlu0 %v931, 56
      %v1140 = vpop.permute.xlu0 %1139
      %1141 = vrot.lane.b32.xlu0 %v932, 56
      %v1142 = vpop.permute.xlu0 %1141
      %1143 = vrot.lane.b32.xlu0 %v933, 56
      %v1144 = vpop.permute.xlu0 %1143
      %1145 = vrot.lane.b32.xlu0 %v934, 56
      %v1146 = vpop.permute.xlu0 %1145
      %1147 = vrot.lane.b32.xlu0 %v935, 56
      %v1148 = vpop.permute.xlu0 %1147
      %1149 = vrot.lane.b32.xlu0 %v936, 56
      %v1150 = vpop.permute.xlu0 %1149
      %v1151 = vsel %vm722, %v1132, %v1134
      %v1152 = vsel %vm722, %v1134, %v1136
      %v1153 = vsel %vm722, %v1136, %v1138
      %v1154 = vsel %vm722, %v1138, %v1140
      %v1155 = vsel %vm722, %v1140, %v1142
      %v1156 = vsel %vm722, %v1142, %v1144
      %v1157 = vsel %vm722, %v1144, %v1146
      %v1158 = vsel %vm722, %v1146, %v1148
      %v1159 = vsel %vm722, %v1148, %v1150
      %1169 = vrot.lane.b32.xlu0 %v927, 55
      %v1170 = vpop.permute.xlu0 %1169
      %1171 = vrot.lane.b32.xlu0 %v928, 55
      %v1172 = vpop.permute.xlu0 %1171
      %1173 = vrot.lane.b32.xlu0 %v929, 55
      %v1174 = vpop.permute.xlu0 %1173
      %1175 = vrot.lane.b32.xlu0 %v930, 55
      %v1176 = vpop.permute.xlu0 %1175
      %1177 = vrot.lane.b32.xlu0 %v931, 55
      %v1178 = vpop.permute.xlu0 %1177
      %1179 = vrot.lane.b32.xlu0 %v932, 55
      %v1180 = vpop.permute.xlu0 %1179
      %1181 = vrot.lane.b32.xlu0 %v933, 55
      %v1182 = vpop.permute.xlu0 %1181
      %1183 = vrot.lane.b32.xlu0 %v934, 55
      %v1184 = vpop.permute.xlu0 %1183
      %1185 = vrot.lane.b32.xlu0 %v935, 55
      %v1186 = vpop.permute.xlu0 %1185
      %1187 = vrot.lane.b32.xlu0 %v936, 55
      %v1188 = vpop.permute.xlu0 %1187
      %v1189 = vsel %vm801, %v1170, %v1172
      %v1190 = vsel %vm801, %v1172, %v1174
      %v1191 = vsel %vm801, %v1174, %v1176
      %v1192 = vsel %vm801, %v1176, %v1178
      %v1193 = vsel %vm801, %v1178, %v1180
      %v1194 = vsel %vm801, %v1180, %v1182
      %v1195 = vsel %vm801, %v1182, %v1184
      %v1196 = vsel %vm801, %v1184, %v1186
      %v1197 = vsel %vm801, %v1186, %v1188
      %1207 = vrot.lane.b32.xlu0 %v927, 54
      %v1208 = vpop.permute.xlu0 %1207
      %1209 = vrot.lane.b32.xlu0 %v928, 54
      %v1210 = vpop.permute.xlu0 %1209
      %1211 = vrot.lane.b32.xlu0 %v929, 54
      %v1212 = vpop.permute.xlu0 %1211
      %1213 = vrot.lane.b32.xlu0 %v930, 54
      %v1214 = vpop.permute.xlu0 %1213
      %1215 = vrot.lane.b32.xlu0 %v931, 54
      %v1216 = vpop.permute.xlu0 %1215
      %1217 = vrot.lane.b32.xlu0 %v932, 54
      %v1218 = vpop.permute.xlu0 %1217
      %1219 = vrot.lane.b32.xlu0 %v933, 54
      %v1220 = vpop.permute.xlu0 %1219
      %1221 = vrot.lane.b32.xlu0 %v934, 54
      %v1222 = vpop.permute.xlu0 %1221
      %1223 = vrot.lane.b32.xlu0 %v935, 54
      %v1224 = vpop.permute.xlu0 %1223
      %1225 = vrot.lane.b32.xlu0 %v936, 54
      %v1226 = vpop.permute.xlu0 %1225
      %v1227 = vsel %vm880, %v1208, %v1210
      %v1228 = vsel %vm880, %v1210, %v1212
      %v1229 = vsel %vm880, %v1212, %v1214
      %v1230 = vsel %vm880, %v1214, %v1216
      %v1231 = vsel %vm880, %v1216, %v1218
      %v1232 = vsel %vm880, %v1218, %v1220
      %v1233 = vsel %vm880, %v1220, %v1222
      %v1234 = vsel %vm880, %v1222, %v1224
      %v1235 = vsel %vm880, %v1224, %v1226
      %v1245 = vld [vmem:[%s3] sm:$0xff]
      %v1246 = vld [vmem:[%s4] sm:$0xff]
      %1248 = vset.pattern.permute.xlu0 0
      %1249 = vperm.xlu0 %1248, %v1246
      %v1250 = vpop.permute.xlu0 %1249
      %vm1252 = vcmask 588800
      %v1254 = vsel %vm1252, %v1245, 0
      %1256 = vmatpush.msra.mxu0 0.0
      %1257 = vmatpush.msra.mxu0 0.0
      %1258 = vmatpush.msra.mxu0 0.0
      %1259 = vmatpush.msra.mxu0 0.0
      %1260 = vmatpush.msra.mxu0 0.0
      %1261 = vmatpush.msra.mxu0 0.0
      %1262 = vmatpush.msra.mxu0 0.0
      %1263 = vmatpush.msra.mxu0 %v1227
      %1264 = vmatpush.msra.mxu0 %v1189
      %1265 = vmatpush.msra.mxu0 %v1151
      %1266 = vmatpush.msra.mxu0 %v1113
      %1267 = vmatpush.msra.mxu0 %v1075
      %1268 = vmatpush.msra.mxu0 %v1037
      %1269 = vmatpush.msra.mxu0 %v999
      %1270 = vmatpush.msra.mxu0 %v964
      %1271 = vmatpush.msra.mxu0 %v927
      %1272 = vmatmul.f32.gmra.mxu0 %v1254
      %v1273 = vpop.f32.mrf.mxu0
      %v1274 = vadd.f32 %v1250, %v1273
      %1275 = vdwg.mxu0
      %1276 = vmatpush.msra.mxu0 0.0
      %1277 = vmatpush.msra.mxu0 0.0
      %1278 = vmatpush.msra.mxu0 0.0
      %1279 = vmatpush.msra.mxu0 0.0
      %1280 = vmatpush.msra.mxu0 0.0
      %1281 = vmatpush.msra.mxu0 0.0
      %1282 = vmatpush.msra.mxu0 0.0
      %1283 = vmatpush.msra.mxu0 %v1228
      %1284 = vmatpush.msra.mxu0 %v1190
      %1285 = vmatpush.msra.mxu0 %v1152
      %1286 = vmatpush.msra.mxu0 %v1114
      %1287 = vmatpush.msra.mxu0 %v1076
      %1288 = vmatpush.msra.mxu0 %v1038
      %1289 = vmatpush.msra.mxu0 %v1000
      %1290 = vmatpush.msra.mxu0 %v965
      %1291 = vmatpush.msra.mxu0 %v928
      %1292 = vmatmul.f32.gmra.mxu0 %v1254
      %v1293 = vpop.f32.mrf.mxu0
      %v1294 = vadd.f32 %v1250, %v1293
      %1295 = vdwg.mxu0
      %1296 = vmatpush.msra.mxu0 0.0
      %1297 = vmatpush.msra.mxu0 0.0
      %1298 = vmatpush.msra.mxu0 0.0
      %1299 = vmatpush.msra.mxu0 0.0
      %1300 = vmatpush.msra.mxu0 0.0
      %1301 = vmatpush.msra.mxu0 0.0
      %1302 = vmatpush.msra.mxu0 0.0
      %1303 = vmatpush.msra.mxu0 %v1229
      %1304 = vmatpush.msra.mxu0 %v1191
      %1305 = vmatpush.msra.mxu0 %v1153
      %1306 = vmatpush.msra.mxu0 %v1115
      %1307 = vmatpush.msra.mxu0 %v1077
      %1308 = vmatpush.msra.mxu0 %v1039
      %1309 = vmatpush.msra.mxu0 %v1001
      %1310 = vmatpush.msra.mxu0 %v966
      %1311 = vmatpush.msra.mxu0 %v929
      %1312 = vmatmul.f32.gmra.mxu0 %v1254
      %v1313 = vpop.f32.mrf.mxu0
      %v1314 = vadd.f32 %v1250, %v1313
      %1315 = vdwg.mxu0
      %1316 = vmatpush.msra.mxu0 0.0
      %1317 = vmatpush.msra.mxu0 0.0
      %1318 = vmatpush.msra.mxu0 0.0
      %1319 = vmatpush.msra.mxu0 0.0
      %1320 = vmatpush.msra.mxu0 0.0
      %1321 = vmatpush.msra.mxu0 0.0
      %1322 = vmatpush.msra.mxu0 0.0
      %1323 = vmatpush.msra.mxu0 %v1230
      %1324 = vmatpush.msra.mxu0 %v1192
      %1325 = vmatpush.msra.mxu0 %v1154
      %1326 = vmatpush.msra.mxu0 %v1116
      %1327 = vmatpush.msra.mxu0 %v1078
      %1328 = vmatpush.msra.mxu0 %v1040
      %1329 = vmatpush.msra.mxu0 %v1002
      %1330 = vmatpush.msra.mxu0 %v967
      %1331 = vmatpush.msra.mxu0 %v930
      %1332 = vmatmul.f32.gmra.mxu0 %v1254
      %v1333 = vpop.f32.mrf.mxu0
      %v1334 = vadd.f32 %v1250, %v1333
      %1335 = vdwg.mxu0
      %1336 = vmatpush.msra.mxu0 0.0
      %1337 = vmatpush.msra.mxu0 0.0
      %1338 = vmatpush.msra.mxu0 0.0
      %1339 = vmatpush.msra.mxu0 0.0
      %1340 = vmatpush.msra.mxu0 0.0
      %1341 = vmatpush.msra.mxu0 0.0
      %1342 = vmatpush.msra.mxu0 0.0
      %1343 = vmatpush.msra.mxu0 %v1231
      %1344 = vmatpush.msra.mxu0 %v1193
      %1345 = vmatpush.msra.mxu0 %v1155
      %1346 = vmatpush.msra.mxu0 %v1117
      %1347 = vmatpush.msra.mxu0 %v1079
      %1348 = vmatpush.msra.mxu0 %v1041
      %1349 = vmatpush.msra.mxu0 %v1003
      %1350 = vmatpush.msra.mxu0 %v968
      %1351 = vmatpush.msra.mxu0 %v931
      %1352 = vmatmul.f32.gmra.mxu0 %v1254
      %v1353 = vpop.f32.mrf.mxu0
      %v1354 = vadd.f32 %v1250, %v1353
      %1355 = vdwg.mxu0
      %1356 = vmatpush.msra.mxu0 0.0
      %1357 = vmatpush.msra.mxu0 0.0
      %1358 = vmatpush.msra.mxu0 0.0
      %1359 = vmatpush.msra.mxu0 0.0
      %1360 = vmatpush.msra.mxu0 0.0
      %1361 = vmatpush.msra.mxu0 0.0
      %1362 = vmatpush.msra.mxu0 0.0
      %1363 = vmatpush.msra.mxu0 %v1232
      %1364 = vmatpush.msra.mxu0 %v1194
      %1365 = vmatpush.msra.mxu0 %v1156
      %1366 = vmatpush.msra.mxu0 %v1118
      %1367 = vmatpush.msra.mxu0 %v1080
      %1368 = vmatpush.msra.mxu0 %v1042
      %1369 = vmatpush.msra.mxu0 %v1004
      %1370 = vmatpush.msra.mxu0 %v969
      %1371 = vmatpush.msra.mxu0 %v932
      %1372 = vmatmul.f32.gmra.mxu0 %v1254
      %v1373 = vpop.f32.mrf.mxu0
      %v1374 = vadd.f32 %v1250, %v1373
      %1375 = vdwg.mxu0
      %1376 = vmatpush.msra.mxu0 0.0
      %1377 = vmatpush.msra.mxu0 0.0
      %1378 = vmatpush.msra.mxu0 0.0
      %1379 = vmatpush.msra.mxu0 0.0
      %1380 = vmatpush.msra.mxu0 0.0
      %1381 = vmatpush.msra.mxu0 0.0
      %1382 = vmatpush.msra.mxu0 0.0
      %1383 = vmatpush.msra.mxu0 %v1233
      %1384 = vmatpush.msra.mxu0 %v1195
      %1385 = vmatpush.msra.mxu0 %v1157
      %1386 = vmatpush.msra.mxu0 %v1119
      %1387 = vmatpush.msra.mxu0 %v1081
      %1388 = vmatpush.msra.mxu0 %v1043
      %1389 = vmatpush.msra.mxu0 %v1005
      %1390 = vmatpush.msra.mxu0 %v970
      %1391 = vmatpush.msra.mxu0 %v933
      %1392 = vmatmul.f32.gmra.mxu0 %v1254
      %v1393 = vpop.f32.mrf.mxu0
      %v1394 = vadd.f32 %v1250, %v1393
      %1395 = vdwg.mxu0
      %1396 = vmatpush.msra.mxu0 0.0
      %1397 = vmatpush.msra.mxu0 0.0
      %1398 = vmatpush.msra.mxu0 0.0
      %1399 = vmatpush.msra.mxu0 0.0
      %1400 = vmatpush.msra.mxu0 0.0
      %1401 = vmatpush.msra.mxu0 0.0
      %1402 = vmatpush.msra.mxu0 0.0
      %1403 = vmatpush.msra.mxu0 %v1234
      %1404 = vmatpush.msra.mxu0 %v1196
      %1405 = vmatpush.msra.mxu0 %v1158
      %1406 = vmatpush.msra.mxu0 %v1120
      %1407 = vmatpush.msra.mxu0 %v1082
      %1408 = vmatpush.msra.mxu0 %v1044
      %1409 = vmatpush.msra.mxu0 %v1006
      %1410 = vmatpush.msra.mxu0 %v971
      %1411 = vmatpush.msra.mxu0 %v934
      %1412 = vmatmul.f32.gmra.mxu0 %v1254
      %v1413 = vpop.f32.mrf.mxu0
      %v1414 = vadd.f32 %v1250, %v1413
      %1415 = vdwg.mxu0
      %1416 = vmatpush.msra.mxu0 0.0
      %1417 = vmatpush.msra.mxu0 0.0
      %1418 = vmatpush.msra.mxu0 0.0
      %1419 = vmatpush.msra.mxu0 0.0
      %1420 = vmatpush.msra.mxu0 0.0
      %1421 = vmatpush.msra.mxu0 0.0
      %1422 = vmatpush.msra.mxu0 0.0
      %1423 = vmatpush.msra.mxu0 %v1235
      %1424 = vmatpush.msra.mxu0 %v1197
      %1425 = vmatpush.msra.mxu0 %v1159
      %1426 = vmatpush.msra.mxu0 %v1121
      %1427 = vmatpush.msra.mxu0 %v1083
      %1428 = vmatpush.msra.mxu0 %v1045
      %1429 = vmatpush.msra.mxu0 %v998
      %1430 = vmatpush.msra.mxu0 %v963
      %1431 = vmatpush.msra.mxu0 %v935
      %1432 = vmatmul.f32.gmra.mxu0 %v1254
      %v1433 = vpop.f32.mrf.mxu0
      %v1434 = vadd.f32 %v1250, %v1433
      %1435 = vdwg.mxu0
      %v1436 = vmax.f32 %v1274, 0.0
      %v1437 = vmax.f32 %v1294, 0.0
      %v1438 = vmax.f32 %v1314, 0.0
      %v1439 = vmax.f32 %v1334, 0.0
      %v1440 = vmax.f32 %v1354, 0.0
      %v1441 = vmax.f32 %v1374, 0.0
      %v1442 = vmax.f32 %v1394, 0.0
      %v1443 = vmax.f32 %v1414, 0.0
      %v1444 = vmax.f32 %v1434, 0.0
      %1446 = vrot.lane.b32.xlu0 %v1436, 92
      %v1447 = vpop.permute.xlu0 %1446
      %v1449 = vmax.f32 %v1436, %v1447
      %v1451 = vrot.slane %v1449, 1
      %v1452 = vrot.slane %v1449, 2
      %v1453 = vrot.slane %v1449, 3
      %v1454 = vrot.slane %v1449, 4
      %v1455 = vrot.slane %v1449, 5
      %v1456 = vrot.slane %v1449, 6
      %v1457 = vrot.slane %v1449, 7
      %vm1465 = vcmask 253952
      %1466 = vst.msk [vmem:[%s256] sm:$0x1] %vm1465, %v1449
      %1467 = vst.msk [vmem:[%s256 + $0x10] sm:$0x1] %vm1465, %v1451
      %1468 = vst.msk [vmem:[%s256 + $0x20] sm:$0x1] %vm1465, %v1452
      %1469 = vst.msk [vmem:[%s256 + $0x30] sm:$0x1] %vm1465, %v1453
      %1470 = vst.msk [vmem:[%s256 + $0x40] sm:$0x1] %vm1465, %v1454
      %1471 = vst.msk [vmem:[%s256 + $0x50] sm:$0x1] %vm1465, %v1455
      %1472 = vst.msk [vmem:[%s256 + $0x60] sm:$0x1] %vm1465, %v1456
      %1473 = vst.msk [vmem:[%s256 + $0x70] sm:$0x1] %vm1465, %v1457
      %1475 = vrot.lane.b32.xlu0 %v1437, 92
      %v1476 = vpop.permute.xlu0 %1475
      %v1477 = vsel %vm494, %v1447, %v1476
      %v1479 = vmax.f32 %v1436, %v1477
      %v1481 = vrot.slane %v1479, 1
      %v1482 = vrot.slane %v1479, 2
      %v1483 = vrot.slane %v1479, 3
      %v1484 = vrot.slane %v1479, 4
      %v1485 = vrot.slane %v1479, 5
      %v1486 = vrot.slane %v1479, 6
      %v1487 = vrot.slane %v1479, 7
      %v1488 = vperm.slane %v1479, 0
      %v1489 = vperm.slane %v1481, 0
      %v1490 = vperm.slane %v1482, 0
      %v1491 = vperm.slane %v1483, 0
      %v1492 = vperm.slane %v1484, 0
      %v1493 = vperm.slane %v1485, 0
      %v1494 = vperm.slane %v1486, 0
      %v1495 = vperm.slane %v1487, 0
      %1496 = vrot.lane.b32.xlu0 %v1488, 56
      %v1497 = vpop.permute.xlu0 %1496
      %1498 = vrot.lane.b32.xlu0 %v1489, 56
      %v1499 = vpop.permute.xlu0 %1498
      %1500 = vrot.lane.b32.xlu0 %v1490, 56
      %v1501 = vpop.permute.xlu0 %1500
      %1502 = vrot.lane.b32.xlu0 %v1491, 56
      %v1503 = vpop.permute.xlu0 %1502
      %1504 = vrot.lane.b32.xlu0 %v1492, 56
      %v1505 = vpop.permute.xlu0 %1504
      %1506 = vrot.lane.b32.xlu0 %v1493, 56
      %v1507 = vpop.permute.xlu0 %1506
      %1508 = vrot.lane.b32.xlu0 %v1494, 56
      %v1509 = vpop.permute.xlu0 %1508
      %1510 = vrot.lane.b32.xlu0 %v1495, 56
      %v1511 = vpop.permute.xlu0 %1510
      %1520 = vst.msk [vmem:[%s256 + $0x1] sm:$0x1] %vm1465, %v1497
      %1521 = vst.msk [vmem:[%s256 + $0x11] sm:$0x1] %vm1465, %v1499
      %1522 = vst.msk [vmem:[%s256 + $0x21] sm:$0x1] %vm1465, %v1501
      %1523 = vst.msk [vmem:[%s256 + $0x31] sm:$0x1] %vm1465, %v1503
      %1524 = vst.msk [vmem:[%s256 + $0x41] sm:$0x1] %vm1465, %v1505
      %1525 = vst.msk [vmem:[%s256 + $0x51] sm:$0x1] %vm1465, %v1507
      %1526 = vst.msk [vmem:[%s256 + $0x61] sm:$0x1] %vm1465, %v1509
      %1527 = vst.msk [vmem:[%s256 + $0x71] sm:$0x1] %vm1465, %v1511
      %v1529 = vmax.f32 %v1437, %v1476
      %v1531 = vrot.slane %v1529, 1
      %v1532 = vrot.slane %v1529, 2
      %v1533 = vrot.slane %v1529, 3
      %v1534 = vrot.slane %v1529, 4
      %v1535 = vrot.slane %v1529, 5
      %v1536 = vrot.slane %v1529, 6
      %v1537 = vrot.slane %v1529, 7
      %v1538 = vperm.slane %v1529, 0
      %v1539 = vperm.slane %v1531, 0
      %v1540 = vperm.slane %v1532, 0
      %v1541 = vperm.slane %v1533, 0
      %v1542 = vperm.slane %v1534, 0
      %v1543 = vperm.slane %v1535, 0
      %v1544 = vperm.slane %v1536, 0
      %v1545 = vperm.slane %v1537, 0
      %1546 = vrot.lane.b32.xlu0 %v1538, 112
      %v1547 = vpop.permute.xlu0 %1546
      %1548 = vrot.lane.b32.xlu0 %v1539, 112
      %v1549 = vpop.permute.xlu0 %1548
      %1550 = vrot.lane.b32.xlu0 %v1540, 112
      %v1551 = vpop.permute.xlu0 %1550
      %1552 = vrot.lane.b32.xlu0 %v1541, 112
      %v1553 = vpop.permute.xlu0 %1552
      %1554 = vrot.lane.b32.xlu0 %v1542, 112
      %v1555 = vpop.permute.xlu0 %1554
      %1556 = vrot.lane.b32.xlu0 %v1543, 112
      %v1557 = vpop.permute.xlu0 %1556
      %1558 = vrot.lane.b32.xlu0 %v1544, 112
      %v1559 = vpop.permute.xlu0 %1558
      %1560 = vrot.lane.b32.xlu0 %v1545, 112
      %v1561 = vpop.permute.xlu0 %1560
      %1570 = vst.msk [vmem:[%s256 + $0x2] sm:$0x1] %vm1465, %v1547
      %1571 = vst.msk [vmem:[%s256 + $0x12] sm:$0x1] %vm1465, %v1549
      %1572 = vst.msk [vmem:[%s256 + $0x22] sm:$0x1] %vm1465, %v1551
      %1573 = vst.msk [vmem:[%s256 + $0x32] sm:$0x1] %vm1465, %v1553
      %1574 = vst.msk [vmem:[%s256 + $0x42] sm:$0x1] %vm1465, %v1555
      %1575 = vst.msk [vmem:[%s256 + $0x52] sm:$0x1] %vm1465, %v1557
      %1576 = vst.msk [vmem:[%s256 + $0x62] sm:$0x1] %vm1465, %v1559
      %1577 = vst.msk [vmem:[%s256 + $0x72] sm:$0x1] %vm1465, %v1561
      %1579 = vrot.lane.b32.xlu0 %v1438, 92
      %v1580 = vpop.permute.xlu0 %1579
      %v1581 = vsel %vm494, %v1476, %v1580
      %v1583 = vmax.f32 %v1437, %v1581
      %v1585 = vrot.slane %v1583, 1
      %v1586 = vrot.slane %v1583, 2
      %v1587 = vrot.slane %v1583, 3
      %v1588 = vrot.slane %v1583, 4
      %v1589 = vrot.slane %v1583, 5
      %v1590 = vrot.slane %v1583, 6
      %v1591 = vrot.slane %v1583, 7
      %v1592 = vperm.slane %v1583, 0
      %v1593 = vperm.slane %v1585, 0
      %v1594 = vperm.slane %v1586, 0
      %v1595 = vperm.slane %v1587, 0
      %v1596 = vperm.slane %v1588, 0
      %v1597 = vperm.slane %v1589, 0
      %v1598 = vperm.slane %v1590, 0
      %v1599 = vperm.slane %v1591, 0
      %1600 = vrot.lane.b32.xlu0 %v1592, 40
      %v1601 = vpop.permute.xlu0 %1600
      %1602 = vrot.lane.b32.xlu0 %v1593, 40
      %v1603 = vpop.permute.xlu0 %1602
      %1604 = vrot.lane.b32.xlu0 %v1594, 40
      %v1605 = vpop.permute.xlu0 %1604
      %1606 = vrot.lane.b32.xlu0 %v1595, 40
      %v1607 = vpop.permute.xlu0 %1606
      %1608 = vrot.lane.b32.xlu0 %v1596, 40
      %v1609 = vpop.permute.xlu0 %1608
      %1610 = vrot.lane.b32.xlu0 %v1597, 40
      %v1611 = vpop.permute.xlu0 %1610
      %1612 = vrot.lane.b32.xlu0 %v1598, 40
      %v1613 = vpop.permute.xlu0 %1612
      %1614 = vrot.lane.b32.xlu0 %v1599, 40
      %v1615 = vpop.permute.xlu0 %1614
      %1624 = vst.msk [vmem:[%s256 + $0x3] sm:$0x1] %vm1465, %v1601
      %1625 = vst.msk [vmem:[%s256 + $0x13] sm:$0x1] %vm1465, %v1603
      %1626 = vst.msk [vmem:[%s256 + $0x23] sm:$0x1] %vm1465, %v1605
      %1627 = vst.msk [vmem:[%s256 + $0x33] sm:$0x1] %vm1465, %v1607
      %1628 = vst.msk [vmem:[%s256 + $0x43] sm:$0x1] %vm1465, %v1609
      %1629 = vst.msk [vmem:[%s256 + $0x53] sm:$0x1] %vm1465, %v1611
      %1630 = vst.msk [vmem:[%s256 + $0x63] sm:$0x1] %vm1465, %v1613
      %1631 = vst.msk [vmem:[%s256 + $0x73] sm:$0x1] %vm1465, %v1615
      %v1633 = vmax.f32 %v1438, %v1580
      %v1635 = vrot.slane %v1633, 1
      %v1636 = vrot.slane %v1633, 2
      %v1637 = vrot.slane %v1633, 3
      %v1638 = vrot.slane %v1633, 4
      %v1639 = vrot.slane %v1633, 5
      %v1640 = vrot.slane %v1633, 6
      %v1641 = vrot.slane %v1633, 7
      %v1642 = vperm.slane %v1633, 0
      %v1643 = vperm.slane %v1635, 0
      %v1644 = vperm.slane %v1636, 0
      %v1645 = vperm.slane %v1637, 0
      %v1646 = vperm.slane %v1638, 0
      %v1647 = vperm.slane %v1639, 0
      %v1648 = vperm.slane %v1640, 0
      %v1649 = vperm.slane %v1641, 0
      %1650 = vrot.lane.b32.xlu0 %v1642, 96
      %v1651 = vpop.permute.xlu0 %1650
      %1652 = vrot.lane.b32.xlu0 %v1643, 96
      %v1653 = vpop.permute.xlu0 %1652
      %1654 = vrot.lane.b32.xlu0 %v1644, 96
      %v1655 = vpop.permute.xlu0 %1654
      %1656 = vrot.lane.b32.xlu0 %v1645, 96
      %v1657 = vpop.permute.xlu0 %1656
      %1658 = vrot.lane.b32.xlu0 %v1646, 96
      %v1659 = vpop.permute.xlu0 %1658
      %1660 = vrot.lane.b32.xlu0 %v1647, 96
      %v1661 = vpop.permute.xlu0 %1660
      %1662 = vrot.lane.b32.xlu0 %v1648, 96
      %v1663 = vpop.permute.xlu0 %1662
      %1664 = vrot.lane.b32.xlu0 %v1649, 96
      %v1665 = vpop.permute.xlu0 %1664
      %1674 = vst.msk [vmem:[%s256 + $0x4] sm:$0x1] %vm1465, %v1651
      %1675 = vst.msk [vmem:[%s256 + $0x14] sm:$0x1] %vm1465, %v1653
      %1676 = vst.msk [vmem:[%s256 + $0x24] sm:$0x1] %vm1465, %v1655
      %1677 = vst.msk [vmem:[%s256 + $0x34] sm:$0x1] %vm1465, %v1657
      %1678 = vst.msk [vmem:[%s256 + $0x44] sm:$0x1] %vm1465, %v1659
      %1679 = vst.msk [vmem:[%s256 + $0x54] sm:$0x1] %vm1465, %v1661
      %1680 = vst.msk [vmem:[%s256 + $0x64] sm:$0x1] %vm1465, %v1663
      %1681 = vst.msk [vmem:[%s256 + $0x74] sm:$0x1] %vm1465, %v1665
      %1683 = vrot.lane.b32.xlu0 %v1439, 92
      %v1684 = vpop.permute.xlu0 %1683
      %v1686 = vmax.f32 %v1438, %v1684
      %v1687 = vmax.f32 %v1439, %v1684
      %v1690 = vrot.slane %v1687, 7
      %vm1691 = vcmask 1040384
      %v1692 = vsel %vm1691, %v1686, %v1690
      %vm1693 = vcmask 1041409
      %v1694 = vsel %vm1693, %v1686, %v1690
      %v1695 = vrot.slane %v1694, 1
      %vm1696 = vcmask 1042434
      %v1697 = vsel %vm1696, %v1686, %v1690
      %v1698 = vrot.slane %v1697, 2
      %vm1699 = vcmask 1043459
      %v1700 = vsel %vm1699, %v1686, %v1690
      %v1701 = vrot.slane %v1700, 3
      %vm1702 = vcmask 1044484
      %v1703 = vsel %vm1702, %v1686, %v1690
      %v1704 = vrot.slane %v1703, 4
      %vm1705 = vcmask 1045509
      %v1706 = vsel %vm1705, %v1686, %v1690
      %v1707 = vrot.slane %v1706, 5
      %vm1708 = vcmask 1046534
      %v1709 = vsel %vm1708, %v1686, %v1690
      %v1710 = vrot.slane %v1709, 6
      %vm1711 = vcmask 1046528
      %v1712 = vsel %vm1711, %v1690, %v1686
      %v1713 = vrot.slane %v1712, 7
      %v1714 = vperm.slane %v1692, 0
      %v1715 = vperm.slane %v1692, 1
      %v1716 = vperm.slane %v1695, 0
      %v1717 = vperm.slane %v1695, 1
      %v1718 = vperm.slane %v1698, 0
      %v1719 = vperm.slane %v1698, 1
      %v1720 = vperm.slane %v1701, 0
      %v1721 = vperm.slane %v1701, 1
      %v1722 = vperm.slane %v1704, 0
      %v1723 = vperm.slane %v1704, 1
      %v1724 = vperm.slane %v1707, 0
      %v1725 = vperm.slane %v1707, 1
      %v1726 = vperm.slane %v1710, 0
      %v1727 = vperm.slane %v1710, 1
      %v1728 = vperm.slane %v1713, 0
      %v1729 = vperm.slane %v1713, 1
      %1730 = vrot.lane.b32.xlu0 %v1714, 24
      %v1731 = vpop.permute.xlu0 %1730
      %1732 = vrot.lane.b32.xlu0 %v1715, 24
      %v1733 = vpop.permute.xlu0 %1732
      %1734 = vrot.lane.b32.xlu0 %v1716, 24
      %v1735 = vpop.permute.xlu0 %1734
      %1736 = vrot.lane.b32.xlu0 %v1717, 24
      %v1737 = vpop.permute.xlu0 %1736
      %1738 = vrot.lane.b32.xlu0 %v1718, 24
      %v1739 = vpop.permute.xlu0 %1738
      %1740 = vrot.lane.b32.xlu0 %v1719, 24
      %v1741 = vpop.permute.xlu0 %1740
      %1742 = vrot.lane.b32.xlu0 %v1720, 24
      %v1743 = vpop.permute.xlu0 %1742
      %1744 = vrot.lane.b32.xlu0 %v1721, 24
      %v1745 = vpop.permute.xlu0 %1744
      %1746 = vrot.lane.b32.xlu0 %v1722, 24
      %v1747 = vpop.permute.xlu0 %1746
      %1748 = vrot.lane.b32.xlu0 %v1723, 24
      %v1749 = vpop.permute.xlu0 %1748
      %1750 = vrot.lane.b32.xlu0 %v1724, 24
      %v1751 = vpop.permute.xlu0 %1750
      %1752 = vrot.lane.b32.xlu0 %v1725, 24
      %v1753 = vpop.permute.xlu0 %1752
      %1754 = vrot.lane.b32.xlu0 %v1726, 24
      %v1755 = vpop.permute.xlu0 %1754
      %1756 = vrot.lane.b32.xlu0 %v1727, 24
      %v1757 = vpop.permute.xlu0 %1756
      %1758 = vrot.lane.b32.xlu0 %v1728, 24
      %v1759 = vpop.permute.xlu0 %1758
      %1760 = vrot.lane.b32.xlu0 %v1729, 24
      %v1761 = vpop.permute.xlu0 %1760
      %vm1762 = vcmask 195584
      %v1763 = vsel %vm1762, %v1731, %v1733
      %v1764 = vsel %vm1762, %v1735, %v1737
      %v1765 = vsel %vm1762, %v1739, %v1741
      %v1766 = vsel %vm1762, %v1743, %v1745
      %v1767 = vsel %vm1762, %v1747, %v1749
      %v1768 = vsel %vm1762, %v1751, %v1753
      %v1769 = vsel %vm1762, %v1755, %v1757
      %v1770 = vsel %vm1762, %v1759, %v1761
      %1779 = vst.msk [vmem:[%s256 + $0x5] sm:$0x1] %vm1465, %v1763
      %1780 = vst.msk [vmem:[%s256 + $0x15] sm:$0x1] %vm1465, %v1764
      %1781 = vst.msk [vmem:[%s256 + $0x25] sm:$0x1] %vm1465, %v1765
      %1782 = vst.msk [vmem:[%s256 + $0x35] sm:$0x1] %vm1465, %v1766
      %1783 = vst.msk [vmem:[%s256 + $0x45] sm:$0x1] %vm1465, %v1767
      %1784 = vst.msk [vmem:[%s256 + $0x55] sm:$0x1] %vm1465, %v1768
      %1785 = vst.msk [vmem:[%s256 + $0x65] sm:$0x1] %vm1465, %v1769
      %1786 = vst.msk [vmem:[%s256 + $0x75] sm:$0x1] %vm1465, %v1770
      %v1787 = vrot.slane %v1687, 1
      %v1788 = vrot.slane %v1687, 2
      %v1789 = vrot.slane %v1687, 3
      %v1790 = vrot.slane %v1687, 4
      %v1791 = vrot.slane %v1687, 5
      %v1792 = vrot.slane %v1687, 6
      %v1793 = vperm.slane %v1687, 0
      %v1794 = vperm.slane %v1787, 0
      %v1795 = vperm.slane %v1788, 0
      %v1796 = vperm.slane %v1789, 0
      %v1797 = vperm.slane %v1790, 0
      %v1798 = vperm.slane %v1791, 0
      %v1799 = vperm.slane %v1792, 0
      %v1800 = vperm.slane %v1690, 0
      %1801 = vrot.lane.b32.xlu0 %v1793, 80
      %v1802 = vpop.permute.xlu0 %1801
      %1803 = vrot.lane.b32.xlu0 %v1794, 80
      %v1804 = vpop.permute.xlu0 %1803
      %1805 = vrot.lane.b32.xlu0 %v1795, 80
      %v1806 = vpop.permute.xlu0 %1805
      %1807 = vrot.lane.b32.xlu0 %v1796, 80
      %v1808 = vpop.permute.xlu0 %1807
      %1809 = vrot.lane.b32.xlu0 %v1797, 80
      %v1810 = vpop.permute.xlu0 %1809
      %1811 = vrot.lane.b32.xlu0 %v1798, 80
      %v1812 = vpop.permute.xlu0 %1811
      %1813 = vrot.lane.b32.xlu0 %v1799, 80
      %v1814 = vpop.permute.xlu0 %1813
      %1815 = vrot.lane.b32.xlu0 %v1800, 80
      %v1816 = vpop.permute.xlu0 %1815
      %1825 = vst.msk [vmem:[%s256 + $0x6] sm:$0x1] %vm1465, %v1802
      %1826 = vst.msk [vmem:[%s256 + $0x16] sm:$0x1] %vm1465, %v1804
      %1827 = vst.msk [vmem:[%s256 + $0x26] sm:$0x1] %vm1465, %v1806
      %1828 = vst.msk [vmem:[%s256 + $0x36] sm:$0x1] %vm1465, %v1808
      %1829 = vst.msk [vmem:[%s256 + $0x46] sm:$0x1] %vm1465, %v1810
      %1830 = vst.msk [vmem:[%s256 + $0x56] sm:$0x1] %vm1465, %v1812
      %1831 = vst.msk [vmem:[%s256 + $0x66] sm:$0x1] %vm1465, %v1814
      %1832 = vst.msk [vmem:[%s256 + $0x76] sm:$0x1] %vm1465, %v1816
      %1834 = vrot.lane.b32.xlu0 %v1440, 92
      %v1835 = vpop.permute.xlu0 %1834
      %v1837 = vmax.f32 %v1439, %v1835
      %v1838 = vmax.f32 %v1440, %v1835
      %v1841 = vrot.slane %v1838, 7
      %v1842 = vsel %vm1691, %v1837, %v1841
      %v1843 = vsel %vm1693, %v1837, %v1841
      %v1844 = vrot.slane %v1843, 1
      %v1845 = vsel %vm1696, %v1837, %v1841
      %v1846 = vrot.slane %v1845, 2
      %v1847 = vsel %vm1699, %v1837, %v1841
      %v1848 = vrot.slane %v1847, 3
      %v1849 = vsel %vm1702, %v1837, %v1841
      %v1850 = vrot.slane %v1849, 4
      %v1851 = vsel %vm1705, %v1837, %v1841
      %v1852 = vrot.slane %v1851, 5
      %v1853 = vsel %vm1708, %v1837, %v1841
      %v1854 = vrot.slane %v1853, 6
      %v1855 = vsel %vm1711, %v1841, %v1837
      %v1856 = vrot.slane %v1855, 7
      %v1857 = vperm.slane %v1842, 0
      %v1858 = vperm.slane %v1842, 1
      %v1859 = vperm.slane %v1844, 0
      %v1860 = vperm.slane %v1844, 1
      %v1861 = vperm.slane %v1846, 0
      %v1862 = vperm.slane %v1846, 1
      %v1863 = vperm.slane %v1848, 0
      %v1864 = vperm.slane %v1848, 1
      %v1865 = vperm.slane %v1850, 0
      %v1866 = vperm.slane %v1850, 1
      %v1867 = vperm.slane %v1852, 0
      %v1868 = vperm.slane %v1852, 1
      %v1869 = vperm.slane %v1854, 0
      %v1870 = vperm.slane %v1854, 1
      %v1871 = vperm.slane %v1856, 0
      %v1872 = vperm.slane %v1856, 1
      %1873 = vrot.lane.b32.xlu0 %v1857, 8
      %v1874 = vpop.permute.xlu0 %1873
      %1875 = vrot.lane.b32.xlu0 %v1858, 8
      %v1876 = vpop.permute.xlu0 %1875
      %1877 = vrot.lane.b32.xlu0 %v1859, 8
      %v1878 = vpop.permute.xlu0 %1877
      %1879 = vrot.lane.b32.xlu0 %v1860, 8
      %v1880 = vpop.permute.xlu0 %1879
      %1881 = vrot.lane.b32.xlu0 %v1861, 8
      %v1882 = vpop.permute.xlu0 %1881
      %1883 = vrot.lane.b32.xlu0 %v1862, 8
      %v1884 = vpop.permute.xlu0 %1883
      %1885 = vrot.lane.b32.xlu0 %v1863, 8
      %v1886 = vpop.permute.xlu0 %1885
      %1887 = vrot.lane.b32.xlu0 %v1864, 8
      %v1888 = vpop.permute.xlu0 %1887
      %1889 = vrot.lane.b32.xlu0 %v1865, 8
      %v1890 = vpop.permute.xlu0 %1889
      %1891 = vrot.lane.b32.xlu0 %v1866, 8
      %v1892 = vpop.permute.xlu0 %1891
      %1893 = vrot.lane.b32.xlu0 %v1867, 8
      %v1894 = vpop.permute.xlu0 %1893
      %1895 = vrot.lane.b32.xlu0 %v1868, 8
      %v1896 = vpop.permute.xlu0 %1895
      %1897 = vrot.lane.b32.xlu0 %v1869, 8
      %v1898 = vpop.permute.xlu0 %1897
      %1899 = vrot.lane.b32.xlu0 %v1870, 8
      %v1900 = vpop.permute.xlu0 %1899
      %1901 = vrot.lane.b32.xlu0 %v1871, 8
      %v1902 = vpop.permute.xlu0 %1901
      %1903 = vrot.lane.b32.xlu0 %v1872, 8
      %v1904 = vpop.permute.xlu0 %1903
      %vm1905 = vcmask 64512
      %v1906 = vsel %vm1905, %v1874, %v1876
      %v1907 = vsel %vm1905, %v1878, %v1880
      %v1908 = vsel %vm1905, %v1882, %v1884
      %v1909 = vsel %vm1905, %v1886, %v1888
      %v1910 = vsel %vm1905, %v1890, %v1892
      %v1911 = vsel %vm1905, %v1894, %v1896
      %v1912 = vsel %vm1905, %v1898, %v1900
      %v1913 = vsel %vm1905, %v1902, %v1904
      %1922 = vst.msk [vmem:[%s256 + $0x7] sm:$0x1] %vm1465, %v1906
      %1923 = vst.msk [vmem:[%s256 + $0x17] sm:$0x1] %vm1465, %v1907
      %1924 = vst.msk [vmem:[%s256 + $0x27] sm:$0x1] %vm1465, %v1908
      %1925 = vst.msk [vmem:[%s256 + $0x37] sm:$0x1] %vm1465, %v1909
      %1926 = vst.msk [vmem:[%s256 + $0x47] sm:$0x1] %vm1465, %v1910
      %1927 = vst.msk [vmem:[%s256 + $0x57] sm:$0x1] %vm1465, %v1911
      %1928 = vst.msk [vmem:[%s256 + $0x67] sm:$0x1] %vm1465, %v1912
      %1929 = vst.msk [vmem:[%s256 + $0x77] sm:$0x1] %vm1465, %v1913
      %1931 = vrot.lane.b32.xlu0 %v1441, 92
      %v1932 = vpop.permute.xlu0 %1931
      %v1933 = vsel %vm494, %v1835, %v1932
      %v1935 = vmax.f32 %v1440, %v1933
      %v1937 = vrot.slane %v1935, 1
      %v1938 = vrot.slane %v1935, 2
      %v1939 = vrot.slane %v1935, 3
      %v1940 = vrot.slane %v1935, 4
      %v1941 = vrot.slane %v1935, 5
      %v1942 = vrot.slane %v1935, 6
      %v1943 = vrot.slane %v1935, 7
      %v1944 = vperm.slane %v1935, 0
      %v1945 = vperm.slane %v1937, 0
      %v1946 = vperm.slane %v1938, 0
      %v1947 = vperm.slane %v1939, 0
      %v1948 = vperm.slane %v1940, 0
      %v1949 = vperm.slane %v1941, 0
      %v1950 = vperm.slane %v1942, 0
      %v1951 = vperm.slane %v1943, 0
      %1952 = vrot.lane.b32.xlu0 %v1944, 64
      %v1953 = vpop.permute.xlu0 %1952
      %1954 = vrot.lane.b32.xlu0 %v1945, 64
      %v1955 = vpop.permute.xlu0 %1954
      %1956 = vrot.lane.b32.xlu0 %v1946, 64
      %v1957 = vpop.permute.xlu0 %1956
      %1958 = vrot.lane.b32.xlu0 %v1947, 64
      %v1959 = vpop.permute.xlu0 %1958
      %1960 = vrot.lane.b32.xlu0 %v1948, 64
      %v1961 = vpop.permute.xlu0 %1960
      %1962 = vrot.lane.b32.xlu0 %v1949, 64
      %v1963 = vpop.permute.xlu0 %1962
      %1964 = vrot.lane.b32.xlu0 %v1950, 64
      %v1965 = vpop.permute.xlu0 %1964
      %1966 = vrot.lane.b32.xlu0 %v1951, 64
      %v1967 = vpop.permute.xlu0 %1966
      %1976 = vst.msk [vmem:[%s256 + $0x8] sm:$0x1] %vm1465, %v1953
      %1977 = vst.msk [vmem:[%s256 + $0x18] sm:$0x1] %vm1465, %v1955
      %1978 = vst.msk [vmem:[%s256 + $0x28] sm:$0x1] %vm1465, %v1957
      %1979 = vst.msk [vmem:[%s256 + $0x38] sm:$0x1] %vm1465, %v1959
      %1980 = vst.msk [vmem:[%s256 + $0x48] sm:$0x1] %vm1465, %v1961
      %1981 = vst.msk [vmem:[%s256 + $0x58] sm:$0x1] %vm1465, %v1963
      %1982 = vst.msk [vmem:[%s256 + $0x68] sm:$0x1] %vm1465, %v1965
      %1983 = vst.msk [vmem:[%s256 + $0x78] sm:$0x1] %vm1465, %v1967
      %v1985 = vmax.f32 %v1441, %v1932
      %v1987 = vrot.slane %v1985, 1
      %v1988 = vrot.slane %v1985, 2
      %v1989 = vrot.slane %v1985, 3
      %v1990 = vrot.slane %v1985, 4
      %v1991 = vrot.slane %v1985, 5
      %v1992 = vrot.slane %v1985, 6
      %v1993 = vrot.slane %v1985, 7
      %v1994 = vperm.slane %v1985, 0
      %v1995 = vperm.slane %v1987, 0
      %v1996 = vperm.slane %v1988, 0
      %v1997 = vperm.slane %v1989, 0
      %v1998 = vperm.slane %v1990, 0
      %v1999 = vperm.slane %v1991, 0
      %v2000 = vperm.slane %v1992, 0
      %v2001 = vperm.slane %v1993, 0
      %2002 = vrot.lane.b32.xlu0 %v1994, 120
      %v2003 = vpop.permute.xlu0 %2002
      %2004 = vrot.lane.b32.xlu0 %v1995, 120
      %v2005 = vpop.permute.xlu0 %2004
      %2006 = vrot.lane.b32.xlu0 %v1996, 120
      %v2007 = vpop.permute.xlu0 %2006
      %2008 = vrot.lane.b32.xlu0 %v1997, 120
      %v2009 = vpop.permute.xlu0 %2008
      %2010 = vrot.lane.b32.xlu0 %v1998, 120
      %v2011 = vpop.permute.xlu0 %2010
      %2012 = vrot.lane.b32.xlu0 %v1999, 120
      %v2013 = vpop.permute.xlu0 %2012
      %2014 = vrot.lane.b32.xlu0 %v2000, 120
      %v2015 = vpop.permute.xlu0 %2014
      %2016 = vrot.lane.b32.xlu0 %v2001, 120
      %v2017 = vpop.permute.xlu0 %2016
      %2026 = vst.msk [vmem:[%s256 + $0x9] sm:$0x1] %vm1465, %v2003
      %2027 = vst.msk [vmem:[%s256 + $0x19] sm:$0x1] %vm1465, %v2005
      %2028 = vst.msk [vmem:[%s256 + $0x29] sm:$0x1] %vm1465, %v2007
      %2029 = vst.msk [vmem:[%s256 + $0x39] sm:$0x1] %vm1465, %v2009
      %2030 = vst.msk [vmem:[%s256 + $0x49] sm:$0x1] %vm1465, %v2011
      %2031 = vst.msk [vmem:[%s256 + $0x59] sm:$0x1] %vm1465, %v2013
      %2032 = vst.msk [vmem:[%s256 + $0x69] sm:$0x1] %vm1465, %v2015
      %2033 = vst.msk [vmem:[%s256 + $0x79] sm:$0x1] %vm1465, %v2017
      %2035 = vrot.lane.b32.xlu0 %v1442, 92
      %v2036 = vpop.permute.xlu0 %2035
      %v2037 = vsel %vm494, %v1932, %v2036
      %v2039 = vmax.f32 %v1441, %v2037
      %v2041 = vrot.slane %v2039, 1
      %v2042 = vrot.slane %v2039, 2
      %v2043 = vrot.slane %v2039, 3
      %v2044 = vrot.slane %v2039, 4
      %v2045 = vrot.slane %v2039, 5
      %v2046 = vrot.slane %v2039, 6
      %v2047 = vrot.slane %v2039, 7
      %v2048 = vperm.slane %v2039, 0
      %v2049 = vperm.slane %v2041, 0
      %v2050 = vperm.slane %v2042, 0
      %v2051 = vperm.slane %v2043, 0
      %v2052 = vperm.slane %v2044, 0
      %v2053 = vperm.slane %v2045, 0
      %v2054 = vperm.slane %v2046, 0
      %v2055 = vperm.slane %v2047, 0
      %2056 = vrot.lane.b32.xlu0 %v2048, 48
      %v2057 = vpop.permute.xlu0 %2056
      %2058 = vrot.lane.b32.xlu0 %v2049, 48
      %v2059 = vpop.permute.xlu0 %2058
      %2060 = vrot.lane.b32.xlu0 %v2050, 48
      %v2061 = vpop.permute.xlu0 %2060
      %2062 = vrot.lane.b32.xlu0 %v2051, 48
      %v2063 = vpop.permute.xlu0 %2062
      %2064 = vrot.lane.b32.xlu0 %v2052, 48
      %v2065 = vpop.permute.xlu0 %2064
      %2066 = vrot.lane.b32.xlu0 %v2053, 48
      %v2067 = vpop.permute.xlu0 %2066
      %2068 = vrot.lane.b32.xlu0 %v2054, 48
      %v2069 = vpop.permute.xlu0 %2068
      %2070 = vrot.lane.b32.xlu0 %v2055, 48
      %v2071 = vpop.permute.xlu0 %2070
      %2080 = vst.msk [vmem:[%s256 + $0xa] sm:$0x1] %vm1465, %v2057
      %2081 = vst.msk [vmem:[%s256 + $0x1a] sm:$0x1] %vm1465, %v2059
      %2082 = vst.msk [vmem:[%s256 + $0x2a] sm:$0x1] %vm1465, %v2061
      %2083 = vst.msk [vmem:[%s256 + $0x3a] sm:$0x1] %vm1465, %v2063
      %2084 = vst.msk [vmem:[%s256 + $0x4a] sm:$0x1] %vm1465, %v2065
      %2085 = vst.msk [vmem:[%s256 + $0x5a] sm:$0x1] %vm1465, %v2067
      %2086 = vst.msk [vmem:[%s256 + $0x6a] sm:$0x1] %vm1465, %v2069
      %2087 = vst.msk [vmem:[%s256 + $0x7a] sm:$0x1] %vm1465, %v2071
      %v2089 = vmax.f32 %v1442, %v2036
      %v2091 = vrot.slane %v2089, 1
      %v2092 = vrot.slane %v2089, 2
      %v2093 = vrot.slane %v2089, 3
      %v2094 = vrot.slane %v2089, 4
      %v2095 = vrot.slane %v2089, 5
      %v2096 = vrot.slane %v2089, 6
      %v2097 = vrot.slane %v2089, 7
      %v2098 = vperm.slane %v2089, 0
      %v2099 = vperm.slane %v2091, 0
      %v2100 = vperm.slane %v2092, 0
      %v2101 = vperm.slane %v2093, 0
      %v2102 = vperm.slane %v2094, 0
      %v2103 = vperm.slane %v2095, 0
      %v2104 = vperm.slane %v2096, 0
      %v2105 = vperm.slane %v2097, 0
      %2106 = vrot.lane.b32.xlu0 %v2098, 104
      %v2107 = vpop.permute.xlu0 %2106
      %2108 = vrot.lane.b32.xlu0 %v2099, 104
      %v2109 = vpop.permute.xlu0 %2108
      %2110 = vrot.lane.b32.xlu0 %v2100, 104
      %v2111 = vpop.permute.xlu0 %2110
      %2112 = vrot.lane.b32.xlu0 %v2101, 104
      %v2113 = vpop.permute.xlu0 %2112
      %2114 = vrot.lane.b32.xlu0 %v2102, 104
      %v2115 = vpop.permute.xlu0 %2114
      %2116 = vrot.lane.b32.xlu0 %v2103, 104
      %v2117 = vpop.permute.xlu0 %2116
      %2118 = vrot.lane.b32.xlu0 %v2104, 104
      %v2119 = vpop.permute.xlu0 %2118
      %2120 = vrot.lane.b32.xlu0 %v2105, 104
      %v2121 = vpop.permute.xlu0 %2120
      %2130 = vst.msk [vmem:[%s256 + $0xb] sm:$0x1] %vm1465, %v2107
      %2131 = vst.msk [vmem:[%s256 + $0x1b] sm:$0x1] %vm1465, %v2109
      %2132 = vst.msk [vmem:[%s256 + $0x2b] sm:$0x1] %vm1465, %v2111
      %2133 = vst.msk [vmem:[%s256 + $0x3b] sm:$0x1] %vm1465, %v2113
      %2134 = vst.msk [vmem:[%s256 + $0x4b] sm:$0x1] %vm1465, %v2115
      %2135 = vst.msk [vmem:[%s256 + $0x5b] sm:$0x1] %vm1465, %v2117
      %2136 = vst.msk [vmem:[%s256 + $0x6b] sm:$0x1] %vm1465, %v2119
      %2137 = vst.msk [vmem:[%s256 + $0x7b] sm:$0x1] %vm1465, %v2121
      %2139 = vrot.lane.b32.xlu0 %v1443, 92
      %v2140 = vpop.permute.xlu0 %2139
      %v2142 = vmax.f32 %v1442, %v2140
      %v2144 = vrot.slane %v2142, 1
      %v2145 = vrot.slane %v2142, 2
      %v2146 = vrot.slane %v2142, 3
      %v2147 = vrot.slane %v2142, 4
      %v2148 = vrot.slane %v2142, 5
      %v2149 = vrot.slane %v2142, 6
      %v2150 = vrot.slane %v2142, 7
      %v2151 = vperm.slane %v2142, 0
      %v2152 = vperm.slane %v2144, 0
      %v2153 = vperm.slane %v2145, 0
      %v2154 = vperm.slane %v2146, 0
      %v2155 = vperm.slane %v2147, 0
      %v2156 = vperm.slane %v2148, 0
      %v2157 = vperm.slane %v2149, 0
      %v2158 = vperm.slane %v2150, 0
      %2159 = vrot.lane.b32.xlu0 %v2151, 32
      %v2160 = vpop.permute.xlu0 %2159
      %2161 = vrot.lane.b32.xlu0 %v2152, 32
      %v2162 = vpop.permute.xlu0 %2161
      %2163 = vrot.lane.b32.xlu0 %v2153, 32
      %v2164 = vpop.permute.xlu0 %2163
      %2165 = vrot.lane.b32.xlu0 %v2154, 32
      %v2166 = vpop.permute.xlu0 %2165
      %2167 = vrot.lane.b32.xlu0 %v2155, 32
      %v2168 = vpop.permute.xlu0 %2167
      %2169 = vrot.lane.b32.xlu0 %v2156, 32
      %v2170 = vpop.permute.xlu0 %2169
      %2171 = vrot.lane.b32.xlu0 %v2157, 32
      %v2172 = vpop.permute.xlu0 %2171
      %2173 = vrot.lane.b32.xlu0 %v2158, 32
      %v2174 = vpop.permute.xlu0 %2173
      %2183 = vst.msk [vmem:[%s256 + $0xc] sm:$0x1] %vm1465, %v2160
      %2184 = vst.msk [vmem:[%s256 + $0x1c] sm:$0x1] %vm1465, %v2162
      %2185 = vst.msk [vmem:[%s256 + $0x2c] sm:$0x1] %vm1465, %v2164
      %2186 = vst.msk [vmem:[%s256 + $0x3c] sm:$0x1] %vm1465, %v2166
      %2187 = vst.msk [vmem:[%s256 + $0x4c] sm:$0x1] %vm1465, %v2168
      %2188 = vst.msk [vmem:[%s256 + $0x5c] sm:$0x1] %vm1465, %v2170
      %2189 = vst.msk [vmem:[%s256 + $0x6c] sm:$0x1] %vm1465, %v2172
      %2190 = vst.msk [vmem:[%s256 + $0x7c] sm:$0x1] %vm1465, %v2174
      %v2191 = vmax.f32 %v1443, %v2140
      %v2193 = vrot.slane %v2191, 1
      %v2194 = vrot.slane %v2191, 2
      %v2195 = vrot.slane %v2191, 3
      %v2196 = vrot.slane %v2191, 4
      %v2197 = vrot.slane %v2191, 5
      %v2198 = vrot.slane %v2191, 6
      %v2199 = vrot.slane %v2191, 7
      %v2200 = vperm.slane %v2191, 0
      %v2201 = vperm.slane %v2193, 0
      %v2202 = vperm.slane %v2194, 0
      %v2203 = vperm.slane %v2195, 0
      %v2204 = vperm.slane %v2196, 0
      %v2205 = vperm.slane %v2197, 0
      %v2206 = vperm.slane %v2198, 0
      %v2207 = vperm.slane %v2199, 0
      %2208 = vrot.lane.b32.xlu0 %v2200, 88
      %v2209 = vpop.permute.xlu0 %2208
      %2210 = vrot.lane.b32.xlu0 %v2201, 88
      %v2211 = vpop.permute.xlu0 %2210
      %2212 = vrot.lane.b32.xlu0 %v2202, 88
      %v2213 = vpop.permute.xlu0 %2212
      %2214 = vrot.lane.b32.xlu0 %v2203, 88
      %v2215 = vpop.permute.xlu0 %2214
      %2216 = vrot.lane.b32.xlu0 %v2204, 88
      %v2217 = vpop.permute.xlu0 %2216
      %2218 = vrot.lane.b32.xlu0 %v2205, 88
      %v2219 = vpop.permute.xlu0 %2218
      %2220 = vrot.lane.b32.xlu0 %v2206, 88
      %v2221 = vpop.permute.xlu0 %2220
      %2222 = vrot.lane.b32.xlu0 %v2207, 88
      %v2223 = vpop.permute.xlu0 %2222
      %2232 = vst.msk [vmem:[%s256 + $0xd] sm:$0x1] %vm1465, %v2209
      %2233 = vst.msk [vmem:[%s256 + $0x1d] sm:$0x1] %vm1465, %v2211
      %2234 = vst.msk [vmem:[%s256 + $0x2d] sm:$0x1] %vm1465, %v2213
      %2235 = vst.msk [vmem:[%s256 + $0x3d] sm:$0x1] %vm1465, %v2215
      %2236 = vst.msk [vmem:[%s256 + $0x4d] sm:$0x1] %vm1465, %v2217
      %2237 = vst.msk [vmem:[%s256 + $0x5d] sm:$0x1] %vm1465, %v2219
      %2238 = vst.msk [vmem:[%s256 + $0x6d] sm:$0x1] %vm1465, %v2221
      %2239 = vst.msk [vmem:[%s256 + $0x7d] sm:$0x1] %vm1465, %v2223
      %2241 = vrot.lane.b32.xlu0 %v1444, 92
      %v2242 = vpop.permute.xlu0 %2241
      %v2244 = vmax.f32 %v1443, %v2242
      %v2245 = vmax.f32 %v1444, %v2242
      %v2248 = vrot.slane %v2245, 7
      %v2249 = vsel %vm1691, %v2244, %v2248
      %v2250 = vsel %vm1693, %v2244, %v2248
      %v2251 = vrot.slane %v2250, 1
      %v2252 = vsel %vm1696, %v2244, %v2248
      %v2253 = vrot.slane %v2252, 2
      %v2254 = vsel %vm1699, %v2244, %v2248
      %v2255 = vrot.slane %v2254, 3
      %v2256 = vsel %vm1702, %v2244, %v2248
      %v2257 = vrot.slane %v2256, 4
      %v2258 = vsel %vm1705, %v2244, %v2248
      %v2259 = vrot.slane %v2258, 5
      %v2260 = vsel %vm1708, %v2244, %v2248
      %v2261 = vrot.slane %v2260, 6
      %v2262 = vsel %vm1711, %v2248, %v2244
      %v2263 = vrot.slane %v2262, 7
      %v2264 = vperm.slane %v2249, 0
      %v2265 = vperm.slane %v2249, 1
      %v2266 = vperm.slane %v2251, 0
      %v2267 = vperm.slane %v2251, 1
      %v2268 = vperm.slane %v2253, 0
      %v2269 = vperm.slane %v2253, 1
      %v2270 = vperm.slane %v2255, 0
      %v2271 = vperm.slane %v2255, 1
      %v2272 = vperm.slane %v2257, 0
      %v2273 = vperm.slane %v2257, 1
      %v2274 = vperm.slane %v2259, 0
      %v2275 = vperm.slane %v2259, 1
      %v2276 = vperm.slane %v2261, 0
      %v2277 = vperm.slane %v2261, 1
      %v2278 = vperm.slane %v2263, 0
      %v2279 = vperm.slane %v2263, 1
      %2280 = vrot.lane.b32.xlu0 %v2264, 16
      %v2281 = vpop.permute.xlu0 %2280
      %2282 = vrot.lane.b32.xlu0 %v2265, 16
      %v2283 = vpop.permute.xlu0 %2282
      %2284 = vrot.lane.b32.xlu0 %v2266, 16
      %v2285 = vpop.permute.xlu0 %2284
      %2286 = vrot.lane.b32.xlu0 %v2267, 16
      %v2287 = vpop.permute.xlu0 %2286
      %2288 = vrot.lane.b32.xlu0 %v2268, 16
      %v2289 = vpop.permute.xlu0 %2288
      %2290 = vrot.lane.b32.xlu0 %v2269, 16
      %v2291 = vpop.permute.xlu0 %2290
      %2292 = vrot.lane.b32.xlu0 %v2270, 16
      %v2293 = vpop.permute.xlu0 %2292
      %2294 = vrot.lane.b32.xlu0 %v2271, 16
      %v2295 = vpop.permute.xlu0 %2294
      %2296 = vrot.lane.b32.xlu0 %v2272, 16
      %v2297 = vpop.permute.xlu0 %2296
      %2298 = vrot.lane.b32.xlu0 %v2273, 16
      %v2299 = vpop.permute.xlu0 %2298
      %2300 = vrot.lane.b32.xlu0 %v2274, 16
      %v2301 = vpop.permute.xlu0 %2300
      %2302 = vrot.lane.b32.xlu0 %v2275, 16
      %v2303 = vpop.permute.xlu0 %2302
      %2304 = vrot.lane.b32.xlu0 %v2276, 16
      %v2305 = vpop.permute.xlu0 %2304
      %2306 = vrot.lane.b32.xlu0 %v2277, 16
      %v2307 = vpop.permute.xlu0 %2306
      %2308 = vrot.lane.b32.xlu0 %v2278, 16
      %v2309 = vpop.permute.xlu0 %2308
      %2310 = vrot.lane.b32.xlu0 %v2279, 16
      %v2311 = vpop.permute.xlu0 %2310
      %vm2312 = vcmask 130048
      %v2313 = vsel %vm2312, %v2281, %v2283
      %v2314 = vsel %vm2312, %v2285, %v2287
      %v2315 = vsel %vm2312, %v2289, %v2291
      %v2316 = vsel %vm2312, %v2293, %v2295
      %v2317 = vsel %vm2312, %v2297, %v2299
      %v2318 = vsel %vm2312, %v2301, %v2303
      %v2319 = vsel %vm2312, %v2305, %v2307
      %v2320 = vsel %vm2312, %v2309, %v2311
      %2329 = vst.msk [vmem:[%s256 + $0xe] sm:$0x1] %vm1465, %v2313
      %2330 = vst.msk [vmem:[%s256 + $0x1e] sm:$0x1] %vm1465, %v2314
      %2331 = vst.msk [vmem:[%s256 + $0x2e] sm:$0x1] %vm1465, %v2315
      %2332 = vst.msk [vmem:[%s256 + $0x3e] sm:$0x1] %vm1465, %v2316
      %2333 = vst.msk [vmem:[%s256 + $0x4e] sm:$0x1] %vm1465, %v2317
      %2334 = vst.msk [vmem:[%s256 + $0x5e] sm:$0x1] %vm1465, %v2318
      %2335 = vst.msk [vmem:[%s256 + $0x6e] sm:$0x1] %vm1465, %v2319
      %2336 = vst.msk [vmem:[%s256 + $0x7e] sm:$0x1] %vm1465, %v2320
      %v2337 = vrot.slane %v2245, 1
      %v2338 = vrot.slane %v2245, 2
      %v2339 = vrot.slane %v2245, 3
      %v2340 = vrot.slane %v2245, 4
      %v2341 = vrot.slane %v2245, 5
      %v2342 = vrot.slane %v2245, 6
      %v2343 = vperm.slane %v2245, 0
      %v2344 = vperm.slane %v2337, 0
      %v2345 = vperm.slane %v2338, 0
      %v2346 = vperm.slane %v2339, 0
      %v2347 = vperm.slane %v2340, 0
      %v2348 = vperm.slane %v2341, 0
      %v2349 = vperm.slane %v2342, 0
      %v2350 = vperm.slane %v2248, 0
      %2351 = vrot.lane.b32.xlu0 %v2343, 72
      %v2352 = vpop.permute.xlu0 %2351
      %2353 = vrot.lane.b32.xlu0 %v2344, 72
      %v2354 = vpop.permute.xlu0 %2353
      %2355 = vrot.lane.b32.xlu0 %v2345, 72
      %v2356 = vpop.permute.xlu0 %2355
      %2357 = vrot.lane.b32.xlu0 %v2346, 72
      %v2358 = vpop.permute.xlu0 %2357
      %2359 = vrot.lane.b32.xlu0 %v2347, 72
      %v2360 = vpop.permute.xlu0 %2359
      %2361 = vrot.lane.b32.xlu0 %v2348, 72
      %v2362 = vpop.permute.xlu0 %2361
      %2363 = vrot.lane.b32.xlu0 %v2349, 72
      %v2364 = vpop.permute.xlu0 %2363
      %2365 = vrot.lane.b32.xlu0 %v2350, 72
      %v2366 = vpop.permute.xlu0 %2365
      %2375 = vst.msk [vmem:[%s256 + $0xf] sm:$0x1] %vm1465, %v2352
      %2376 = vst.msk [vmem:[%s256 + $0x1f] sm:$0x1] %vm1465, %v2354
      %2377 = vst.msk [vmem:[%s256 + $0x2f] sm:$0x1] %vm1465, %v2356
      %2378 = vst.msk [vmem:[%s256 + $0x3f] sm:$0x1] %vm1465, %v2358
      %2379 = vst.msk [vmem:[%s256 + $0x4f] sm:$0x1] %vm1465, %v2360
      %2380 = vst.msk [vmem:[%s256 + $0x5f] sm:$0x1] %vm1465, %v2362
      %2381 = vst.msk [vmem:[%s256 + $0x6f] sm:$0x1] %vm1465, %v2364
      %2382 = vst.msk [vmem:[%s256 + $0x7f] sm:$0x1] %vm1465, %v2366
      %2383 = vrot.lane.b32.xlu0 %v1437, 108
      %v2384 = vpop.permute.xlu0 %2383
      %2386 = vst.msk [vmem:[%s261] sm:$0xff] %vm1762, %v2384
      %2387 = vrot.lane.b32.xlu0 %v1437, 96
      %v2388 = vpop.permute.xlu0 %2387
      %vm2390 = vcmask 392384
      %2391 = vst.msk [vmem:[%s261] sm:$0xff] %vm2390, %v2388
      %2392 = vrot.lane.b32.xlu0 %v1437, 84
      %v2393 = vpop.permute.xlu0 %2392
      %vm2395 = vcmask 589184
      %2396 = vst.msk [vmem:[%s261] sm:$0xff] %vm2395, %v2393
      %2397 = vrot.lane.b32.xlu0 %v1438, 72
      %v2398 = vpop.permute.xlu0 %2397
      %vm2400 = vcmask 785984
      %2401 = vst.msk [vmem:[%s261] sm:$0xff] %vm2400, %v2398
      %2402 = vrot.lane.b32.xlu0 %v1438, 60
      %v2403 = vpop.permute.xlu0 %2402
      %vm2405 = vcmask 982784
      %2406 = vst.msk [vmem:[%s261] sm:$0xff] %vm2405, %v2403
      %2407 = vrot.lane.b32.xlu0 %v1438, 48
      %v2408 = vpop.permute.xlu0 %2407
      %vm2410 = vcmask 1048512
      %2411 = vst.msk [vmem:[%s261] sm:$0xff] %vm2410, %v2408
      %2412 = vst.msk [vmem:[%s261 + $0x8] sm:$0xff] %vm2312, %v2408
      %2413 = vrot.lane.b32.xlu0 %v1438, 36
      %v2414 = vpop.permute.xlu0 %2413
      %2415 = vrot.lane.b32.xlu0 %v1439, 36
      %v2416 = vpop.permute.xlu0 %2415
      %vm2417 = vcmask 293888
      %v2418 = vsel %vm2417, %v2414, %v2416
      %vm2420 = vcmask 326784
      %2421 = vst.msk [vmem:[%s261 + $0x8] sm:$0xff] %vm2420, %v2418
      %2422 = vrot.lane.b32.xlu0 %v1439, 24
      %v2423 = vpop.permute.xlu0 %2422
      %vm2425 = vcmask 523584
      %2426 = vst.msk [vmem:[%s261 + $0x8] sm:$0xff] %vm2425, %v2423
      %2427 = vrot.lane.b32.xlu0 %v1439, 12
      %v2428 = vpop.permute.xlu0 %2427
      %vm2430 = vcmask 720384
      %2431 = vst.msk [vmem:[%s261 + $0x8] sm:$0xff] %vm2430, %v2428
      %vm2432 = vcmask 917184
      %2433 = vst.msk [vmem:[%s261 + $0x8] sm:$0xff] %vm2432, %v1439
      %2434 = vrot.lane.b32.xlu0 %v1439, 116
      %v2435 = vpop.permute.xlu0 %2434
      %2436 = vrot.lane.b32.xlu0 %v1440, 116
      %v2437 = vpop.permute.xlu0 %2436
      %vm2438 = vcmask 949248
      %v2439 = vsel %vm2438, %v2435, %v2437
      %vm2442 = vcmask 1048448
      %2443 = vst.msk [vmem:[%s261 + $0x8] sm:$0xff] %vm2442, %v2439
      %2444 = vst.msk [vmem:[%s261 + $0x10] sm:$0xff] %vm1905, %v2437
      %2445 = vrot.lane.b32.xlu0 %v1440, 104
      %v2446 = vpop.permute.xlu0 %2445
      %vm2448 = vcmask 261184
      %2449 = vst.msk [vmem:[%s261 + $0x10] sm:$0xff] %vm2448, %v2446
      %vm2450 = vcmask 457984
      %2451 = vst.msk [vmem:[%s261 + $0x10] sm:$0xff] %vm2450, %v1835
      %2452 = vrot.lane.b32.xlu0 %v1440, 80
      %v2453 = vpop.permute.xlu0 %2452
      %vm2455 = vcmask 654784
      %2456 = vst.msk [vmem:[%s261 + $0x10] sm:$0xff] %vm2455, %v2453
      %2457 = vrot.lane.b32.xlu0 %v1441, 68
      %v2458 = vpop.permute.xlu0 %2457
      %vm2460 = vcmask 851584
      %2461 = vst.msk [vmem:[%s261 + $0x10] sm:$0xff] %vm2460, %v2458
      %2462 = vrot.lane.b32.xlu0 %v1441, 56
      %v2463 = vpop.permute.xlu0 %2462
      %vm2465 = vcmask 1048384
      %2466 = vst.msk [vmem:[%s261 + $0x10] sm:$0xff] %vm2465, %v2463
      %2467 = vrot.lane.b32.xlu0 %v1441, 44
      %v2468 = vpop.permute.xlu0 %2467
      %2470 = vst.msk [vmem:[%s261 + $0x18] sm:$0xff] %vm1762, %v2468
      %2471 = vrot.lane.b32.xlu0 %v1441, 32
      %v2472 = vpop.permute.xlu0 %2471
      %2473 = vrot.lane.b32.xlu0 %v1442, 32
      %v2474 = vpop.permute.xlu0 %2473
      %vm2475 = vcmask 261120
      %v2476 = vsel %vm2475, %v2472, %v2474
      %2478 = vst.msk [vmem:[%s261 + $0x18] sm:$0xff] %vm2390, %v2476
      %2479 = vrot.lane.b32.xlu0 %v1442, 20
      %v2480 = vpop.permute.xlu0 %2479
      %2482 = vst.msk [vmem:[%s261 + $0x18] sm:$0xff] %vm2395, %v2480
      %2483 = vrot.lane.b32.xlu0 %v1442, 8
      %v2484 = vpop.permute.xlu0 %2483
      %2486 = vst.msk [vmem:[%s261 + $0x18] sm:$0xff] %vm2400, %v2484
      %2487 = vrot.lane.b32.xlu0 %v1442, 124
      %v2488 = vpop.permute.xlu0 %2487
      %2490 = vst.msk [vmem:[%s261 + $0x18] sm:$0xff] %vm2405, %v2488
      %2491 = vrot.lane.b32.xlu0 %v1443, 112
      %v2492 = vpop.permute.xlu0 %2491
      %2494 = vst.msk [vmem:[%s261 + $0x18] sm:$0xff] %vm2410, %v2492
      %2495 = vst.msk [vmem:[%s261 + $0x20] sm:$0xff] %vm2312, %v2492
      %2496 = vrot.lane.b32.xlu0 %v1443, 100
      %v2497 = vpop.permute.xlu0 %2496
      %2499 = vst.msk [vmem:[%s261 + $0x20] sm:$0xff] %vm2420, %v2497
      %2500 = vrot.lane.b32.xlu0 %v1443, 88
      %v2501 = vpop.permute.xlu0 %2500
      %2503 = vst.msk [vmem:[%s261 + $0x20] sm:$0xff] %vm2425, %v2501
      %p2504 = scmp.lt.s32.totalorder %s18, 1
      %s2505 = scalar_select %p2504, %s18, 1
      %s2506 = smul.addr %s2505, 16
      %s2507 = smul.addr %s2506, 8
      %s2508 = scalar_lea.vmem %s5, %s2507
      %p2509 = scmp.lt.s32.totalorder %s18, 1
      %s2510 = scalar_select %p2509, %s18, 1
      %s2511 = smul.addr %s2510, 5
      %s2512 = smul.addr %s2511, 8
      %s2513 = scalar_lea.vmem %s6, %s2512
      // Predicated region
      $region41: #{unet_model_forward.3} parent=39 // pred_check
        %p2514 = pneg %p146
      $region42: #{unet_model_forward.3} parent=39 // pred_check_branch
        %2516 = sbr.rel (%p2514) target = $region44
      $region43: #{unet_model_forward.3} parent=39 // pred_region
        _
      $region44: #{unet_model_forward.3} parent=39 // pred_fallthru
        _
      // Predicated region
      $region45: #{unet_model_forward.3} parent=39 // pred_check
        %p2517 = pneg %p172
      $region46: #{unet_model_forward.3} parent=39 // pred_check_branch
        %2519 = sbr.rel (%p2517) target = $region48
      $region47: #{unet_model_forward.3} parent=39 // pred_region
        _
      $region48: #{unet_model_forward.3} parent=39 // pred_fallthru
        _
    $region40: #{unet_model_forward.3} parent=5 // pred_fallthru
      _
    %p2520 = scmp.le.s32.totalorder 2, %s13
    // Predicated region
    $region49: #{unet_model_forward.3} parent=5 // pred_check
      %p2521 = pneg %p2520
    $region50: #{unet_model_forward.3} parent=5 // pred_check_branch
      %2523 = sbr.rel (%p2521) target = $region52
    $region51: #{unet_model_forward.3} parent=5 // pred_region
      %s2524 = ssub.s32 %s13, 2
      // Predicated region
      $region53: #{unet_model_forward.3} parent=51 // pred_check
        %p2525 = pneg %p152
      $region54: #{unet_model_forward.3} parent=51 // pred_check_branch
        %2527 = sbr.rel (%p2525) target = $region56
      $region55: #{unet_model_forward.3} parent=51 // pred_region
        %p2528 = scmp.lt.s32.totalorder %s19, 1
        %s2529 = scalar_select %p2528, %s19, 1
        %s2530 = smul.addr %s2529, 16
        %s2531 = smul.addr %s2530, 8
        %s2532 = scalar_lea.vmem %s5, %s2531
      $region56: #{unet_model_forward.3} parent=51 // pred_fallthru
        _
      // Predicated region
      $region57: #{unet_model_forward.3} parent=51 // pred_check
        %p2533 = pneg %p178
      $region58: #{unet_model_forward.3} parent=51 // pred_check_branch
        %2535 = sbr.rel (%p2533) target = $region60
      $region59: #{unet_model_forward.3} parent=51 // pred_region
        %p2536 = scmp.lt.s32.totalorder %s19, 1
        %s2537 = scalar_select %p2536, %s19, 1
        %s2538 = smul.addr %s2537, 5
        %s2539 = smul.addr %s2538, 8
        %s2540 = scalar_lea.vmem %s6, %s2539
      $region60: #{unet_model_forward.3} parent=51 // pred_fallthru
        _
    $region52: #{unet_model_forward.3} parent=5 // pred_fallthru
      _
  $region6: #{unet_model_forward.3} parent=0 // loop_footer
    %s17 = sadd.s32 1, %s13
  $region7: #{unet_model_forward.3} parent=0 // loop_footer_branch
    %12 = sbr.rel target = $region3
  $region8: #{unet_model_forward.3} parent=0 // loop_exit
    _

// kernel: unet_model_forward.5
$region0: #{unet_model_forward.5}
  #allocation0 [shape = 'u32[]', space=smem, size = 0x4, offset = 0x4, fixed_abs, tag = 'smem constant byte address 0x4 - core index']
  #allocation1 [shape = 'u32[72,128]{1,0:T(1,128)}', space=vmem, size = 0x9000, scoped, tag = 'internal scratch']
  %s0 = inlined_call_operand.vmem [shape: f32[2,8,576], index: 0, kind: input, shape index: {}]
  %s1 = inlined_call_operand.vmem [shape: f32[2,16,576], index: 1, kind: input, shape index: {}]
  %s2 = inlined_call_operand.vmem [shape: f32[8,72], index: 2, kind: input, shape index: {}]
  %s3 = inlined_call_operand.vmem [shape: f32[8,144], index: 3, kind: input, shape index: {}]
  %s4 = inlined_call_operand.vmem [shape: f32[8,1], index: 4, kind: input, shape index: {}]
  %s5 = inlined_call_operand.vmem [shape: f32[8,72], index: 5, kind: input, shape index: {}]
  %s6 = inlined_call_operand.vmem [shape: f32[8,1], index: 6, kind: input, shape index: {}]
  %s7 = inlined_call_operand.vmem [shape: f32[8,8], index: 7, kind: input, shape index: {}]
  %s8 = inlined_call_operand.vmem [shape: f32[8,1], index: 8, kind: input, shape index: {}]
  %s9 = inlined_call_operand.vmem [shape: f32[2,8,512], index: 9, kind: output, shape index: {}]
  %s10 = sld [smem:[#allocation0]]
  $region69: #{unet_model_forward.5} parent=0
    _
  %s12 = ssub.s32 1, %s10
  %s13 = scalar_select 0, %s12, %s10
  loop: start=0, step=1, limit=4
  $region2: #{unet_model_forward.5} parent=0 // loop_pre_header
    _
  $region3: #{unet_model_forward.5} parent=0 // loop_header
    %s15 = sphi 0, %s19
    %p16 = scmp.ge.s32.totalorder %s15, 4
    %s25 = sphi 0, %s27
    %s28 = sphi 0, %s25
    %s29 = sphi 0, %s28
    %s45 = sphi 0, %s29
    %s51 = sphi 0, %s53
    %s54 = sphi 0, %s51
    %s55 = sphi 0, %s54
    %s71 = sphi 0, %s55
    %s75 = sphi 0, %s75
    %s77 = sphi 0, %s75
    %s78 = sphi 0, %s77
    %s92 = sphi 0, %s78
    %s96 = sphi 0, %s96
    %s98 = sphi 0, %s96
    %s99 = sphi 0, %s98
    %s113 = sphi 0, %s99
    %s117 = sphi 0, %s117
    %s119 = sphi 0, %s117
    %s120 = sphi 0, %s119
    %s134 = sphi 0, %s120
    %s138 = sphi 0, %s138
    %s140 = sphi 0, %s138
    %s141 = sphi 0, %s140
    %s155 = sphi 0, %s141
    %s159 = sphi 0, %s159
    %s161 = sphi 0, %s159
    %s162 = sphi 0, %s161
    %s176 = sphi 0, %s162
    %s180 = sphi 0, %s180
    %s182 = sphi 0, %s180
    %s183 = sphi 0, %s182
    %s197 = sphi 0, %s183
    %s201 = sphi 0, %s201
    %s203 = sphi 0, %s201
    %s204 = sphi 0, %s203
    %s218 = sphi 0, %s204
    %s224 = sphi 0, %s226
    %s227 = sphi 0, %s224
    %s228 = sphi 0, %s227
    %s244 = sphi 0, %s228
  $region4: #{unet_model_forward.5} parent=0 // loop_header_branch
    %18 = sbr.rel (%p16) target = $region8
  $region5: #{unet_model_forward.5} parent=0 // loop_body
    %s20 = ssub.s32 %s15, 1
    %s21 = ssub.s32 %s15, 2
    %s22 = sadd.s32 %s15, 1
    %s23 = ssub.s32 %s15, %s22
    %p24 = scmp.eq.s32.totalorder %s23, 0
    %s26 = sadd.s32 %s25, 1
    %s27 = scalar_select %p24, %s25, %s26
    %p30 = pneg %p24
    %p31 = scmp.eq.s32.totalorder %s15, 1
    %p32 = por %p30, %p31
    %p33 = scmp.ne.s32.totalorder %s25, %s28
    %p34 = scmp.eq.s32.totalorder %s15, 0
    %p35 = por %p33, %p34
    %p36 = scmp.ne.s32.totalorder %s25, %s28
    %p37 = scmp.eq.s32.totalorder %s20, 1
    %p38 = por %p36, %p37
    %p39 = scmp.ne.s32.totalorder %s28, %s29
    %p40 = scmp.eq.s32.totalorder %s20, 0
    %p41 = por %p39, %p40
    %p42 = scmp.ne.s32.totalorder %s28, %s29
    %p43 = scmp.eq.s32.totalorder %s21, 1
    %p44 = por %p42, %p43
    %p46 = scmp.ne.s32.totalorder %s29, %s45
    %p47 = scmp.eq.s32.totalorder %s21, 0
    %p48 = por %p46, %p47
    %s49 = ssub.s32 %s15, %s22
    %p50 = scmp.eq.s32.totalorder %s49, 0
    %s52 = sadd.s32 %s51, 1
    %s53 = scalar_select %p50, %s51, %s52
    %p56 = pneg %p50
    %p57 = scmp.eq.s32.totalorder %s15, 1
    %p58 = por %p56, %p57
    %p59 = scmp.ne.s32.totalorder %s51, %s54
    %p60 = scmp.eq.s32.totalorder %s15, 0
    %p61 = por %p59, %p60
    %p62 = scmp.ne.s32.totalorder %s51, %s54
    %p63 = scmp.eq.s32.totalorder %s20, 1
    %p64 = por %p62, %p63
    %p65 = scmp.ne.s32.totalorder %s54, %s55
    %p66 = scmp.eq.s32.totalorder %s20, 0
    %p67 = por %p65, %p66
    %p68 = scmp.ne.s32.totalorder %s54, %s55
    %p69 = scmp.eq.s32.totalorder %s21, 1
    %p70 = por %p68, %p69
    %p72 = scmp.ne.s32.totalorder %s55, %s71
    %p73 = scmp.eq.s32.totalorder %s21, 0
    %p74 = por %p72, %p73
    %s76 = sadd.s32 %s75, 1
    %p79 = scmp.eq.s32.totalorder %s15, 1
    %p80 = scmp.ne.s32.totalorder %s75, %s77
    %p81 = scmp.eq.s32.totalorder %s15, 0
    %p82 = por %p80, %p81
    %p83 = scmp.ne.s32.totalorder %s75, %s77
    %p84 = scmp.eq.s32.totalorder %s20, 1
    %p85 = por %p83, %p84
    %p86 = scmp.ne.s32.totalorder %s77, %s78
    %p87 = scmp.eq.s32.totalorder %s20, 0
    %p88 = por %p86, %p87
    %p89 = scmp.ne.s32.totalorder %s77, %s78
    %p90 = scmp.eq.s32.totalorder %s21, 1
    %p91 = por %p89, %p90
    %p93 = scmp.ne.s32.totalorder %s78, %s92
    %p94 = scmp.eq.s32.totalorder %s21, 0
    %p95 = por %p93, %p94
    %s97 = sadd.s32 %s96, 1
    %p100 = scmp.eq.s32.totalorder %s15, 1
    %p101 = scmp.ne.s32.totalorder %s96, %s98
    %p102 = scmp.eq.s32.totalorder %s15, 0
    %p103 = por %p101, %p102
    %p104 = scmp.ne.s32.totalorder %s96, %s98
    %p105 = scmp.eq.s32.totalorder %s20, 1
    %p106 = por %p104, %p105
    %p107 = scmp.ne.s32.totalorder %s98, %s99
    %p108 = scmp.eq.s32.totalorder %s20, 0
    %p109 = por %p107, %p108
    %p110 = scmp.ne.s32.totalorder %s98, %s99
    %p111 = scmp.eq.s32.totalorder %s21, 1
    %p112 = por %p110, %p111
    %p114 = scmp.ne.s32.totalorder %s99, %s113
    %p115 = scmp.eq.s32.totalorder %s21, 0
    %p116 = por %p114, %p115
    %s118 = sadd.s32 %s117, 1
    %p121 = scmp.eq.s32.totalorder %s15, 1
    %p122 = scmp.ne.s32.totalorder %s117, %s119
    %p123 = scmp.eq.s32.totalorder %s15, 0
    %p124 = por %p122, %p123
    %p125 = scmp.ne.s32.totalorder %s117, %s119
    %p126 = scmp.eq.s32.totalorder %s20, 1
    %p127 = por %p125, %p126
    %p128 = scmp.ne.s32.totalorder %s119, %s120
    %p129 = scmp.eq.s32.totalorder %s20, 0
    %p130 = por %p128, %p129
    %p131 = scmp.ne.s32.totalorder %s119, %s120
    %p132 = scmp.eq.s32.totalorder %s21, 1
    %p133 = por %p131, %p132
    %p135 = scmp.ne.s32.totalorder %s120, %s134
    %p136 = scmp.eq.s32.totalorder %s21, 0
    %p137 = por %p135, %p136
    %s139 = sadd.s32 %s138, 1
    %p142 = scmp.eq.s32.totalorder %s15, 1
    %p143 = scmp.ne.s32.totalorder %s138, %s140
    %p144 = scmp.eq.s32.totalorder %s15, 0
    %p145 = por %p143, %p144
    %p146 = scmp.ne.s32.totalorder %s138, %s140
    %p147 = scmp.eq.s32.totalorder %s20, 1
    %p148 = por %p146, %p147
    %p149 = scmp.ne.s32.totalorder %s140, %s141
    %p150 = scmp.eq.s32.totalorder %s20, 0
    %p151 = por %p149, %p150
    %p152 = scmp.ne.s32.totalorder %s140, %s141
    %p153 = scmp.eq.s32.totalorder %s21, 1
    %p154 = por %p152, %p153
    %p156 = scmp.ne.s32.totalorder %s141, %s155
    %p157 = scmp.eq.s32.totalorder %s21, 0
    %p158 = por %p156, %p157
    %s160 = sadd.s32 %s159, 1
    %p163 = scmp.eq.s32.totalorder %s15, 1
    %p164 = scmp.ne.s32.totalorder %s159, %s161
    %p165 = scmp.eq.s32.totalorder %s15, 0
    %p166 = por %p164, %p165
    %p167 = scmp.ne.s32.totalorder %s159, %s161
    %p168 = scmp.eq.s32.totalorder %s20, 1
    %p169 = por %p167, %p168
    %p170 = scmp.ne.s32.totalorder %s161, %s162
    %p171 = scmp.eq.s32.totalorder %s20, 0
    %p172 = por %p170, %p171
    %p173 = scmp.ne.s32.totalorder %s161, %s162
    %p174 = scmp.eq.s32.totalorder %s21, 1
    %p175 = por %p173, %p174
    %p177 = scmp.ne.s32.totalorder %s162, %s176
    %p178 = scmp.eq.s32.totalorder %s21, 0
    %p179 = por %p177, %p178
    %s181 = sadd.s32 %s180, 1
    %p184 = scmp.eq.s32.totalorder %s15, 1
    %p185 = scmp.ne.s32.totalorder %s180, %s182
    %p186 = scmp.eq.s32.totalorder %s15, 0
    %p187 = por %p185, %p186
    %p188 = scmp.ne.s32.totalorder %s180, %s182
    %p189 = scmp.eq.s32.totalorder %s20, 1
    %p190 = por %p188, %p189
    %p191 = scmp.ne.s32.totalorder %s182, %s183
    %p192 = scmp.eq.s32.totalorder %s20, 0
    %p193 = por %p191, %p192
    %p194 = scmp.ne.s32.totalorder %s182, %s183
    %p195 = scmp.eq.s32.totalorder %s21, 1
    %p196 = por %p194, %p195
    %p198 = scmp.ne.s32.totalorder %s183, %s197
    %p199 = scmp.eq.s32.totalorder %s21, 0
    %p200 = por %p198, %p199
    %s202 = sadd.s32 %s201, 1
    %p205 = scmp.eq.s32.totalorder %s15, 1
    %p206 = scmp.ne.s32.totalorder %s201, %s203
    %p207 = scmp.eq.s32.totalorder %s15, 0
    %p208 = por %p206, %p207
    %p209 = scmp.ne.s32.totalorder %s201, %s203
    %p210 = scmp.eq.s32.totalorder %s20, 1
    %p211 = por %p209, %p210
    %p212 = scmp.ne.s32.totalorder %s203, %s204
    %p213 = scmp.eq.s32.totalorder %s20, 0
    %p214 = por %p212, %p213
    %p215 = scmp.ne.s32.totalorder %s203, %s204
    %p216 = scmp.eq.s32.totalorder %s21, 1
    %p217 = por %p215, %p216
    %p219 = scmp.ne.s32.totalorder %s204, %s218
    %p220 = scmp.eq.s32.totalorder %s21, 0
    %p221 = por %p219, %p220
    %s222 = ssub.s32 %s15, %s22
    %p223 = scmp.eq.s32.totalorder %s222, 0
    %s225 = sadd.s32 %s224, 1
    %s226 = scalar_select %p223, %s224, %s225
    %p229 = pneg %p223
    %p230 = scmp.eq.s32.totalorder %s15, 1
    %p231 = por %p229, %p230
    %p232 = scmp.ne.s32.totalorder %s224, %s227
    %p233 = scmp.eq.s32.totalorder %s15, 0
    %p234 = por %p232, %p233
    %p235 = scmp.ne.s32.totalorder %s224, %s227
    %p236 = scmp.eq.s32.totalorder %s20, 1
    %p237 = por %p235, %p236
    %p238 = scmp.ne.s32.totalorder %s227, %s228
    %p239 = scmp.eq.s32.totalorder %s20, 0
    %p240 = por %p238, %p239
    %p241 = scmp.ne.s32.totalorder %s227, %s228
    %p242 = scmp.eq.s32.totalorder %s21, 1
    %p243 = por %p241, %p242
    %p245 = scmp.ne.s32.totalorder %s228, %s244
    %p246 = scmp.eq.s32.totalorder %s21, 0
    %p247 = por %p245, %p246
    %p248 = scmp.le.s32.totalorder 1, %s15
    %p249 = scmp.lt.s32.totalorder %s15, 3
    %p250 = pnand %p248, %p249
    %p251 = pneg %p250
    // Predicated region
    $region9: #{unet_model_forward.5} parent=5 // pred_check
      _
    $region10: #{unet_model_forward.5} parent=5 // pred_check_branch
      %253 = sbr.rel (%p250) target = $region12
    $region11: #{unet_model_forward.5} parent=5 // pred_region
      %s254 = ssub.s32 %s15, 1
      // Predicated region
      $region13: #{unet_model_forward.5} parent=11 // pred_check
        %p255 = pneg %p88
      $region14: #{unet_model_forward.5} parent=11 // pred_check_branch
        %257 = sbr.rel (%p255) target = $region16
      $region15: #{unet_model_forward.5} parent=11 // pred_region
        _
      $region16: #{unet_model_forward.5} parent=11 // pred_fallthru
        _
      // Predicated region
      $region17: #{unet_model_forward.5} parent=11 // pred_check
        %p258 = pneg %p109
      $region18: #{unet_model_forward.5} parent=11 // pred_check_branch
        %260 = sbr.rel (%p258) target = $region20
      $region19: #{unet_model_forward.5} parent=11 // pred_region
        _
      $region20: #{unet_model_forward.5} parent=11 // pred_fallthru
        _
      // Predicated region
      $region21: #{unet_model_forward.5} parent=11 // pred_check
        %p261 = pneg %p130
      $region22: #{unet_model_forward.5} parent=11 // pred_check_branch
        %263 = sbr.rel (%p261) target = $region24
      $region23: #{unet_model_forward.5} parent=11 // pred_region
        _
      $region24: #{unet_model_forward.5} parent=11 // pred_fallthru
        _
      // Predicated region
      $region25: #{unet_model_forward.5} parent=11 // pred_check
        %p264 = pneg %p151
      $region26: #{unet_model_forward.5} parent=11 // pred_check_branch
        %266 = sbr.rel (%p264) target = $region28
      $region27: #{unet_model_forward.5} parent=11 // pred_region
        _
      $region28: #{unet_model_forward.5} parent=11 // pred_fallthru
        _
      // Predicated region
      $region29: #{unet_model_forward.5} parent=11 // pred_check
        %p267 = pneg %p172
      $region30: #{unet_model_forward.5} parent=11 // pred_check_branch
        %269 = sbr.rel (%p267) target = $region32
      $region31: #{unet_model_forward.5} parent=11 // pred_region
        _
      $region32: #{unet_model_forward.5} parent=11 // pred_fallthru
        _
      // Predicated region
      $region33: #{unet_model_forward.5} parent=11 // pred_check
        %p270 = pneg %p193
      $region34: #{unet_model_forward.5} parent=11 // pred_check_branch
        %272 = sbr.rel (%p270) target = $region36
      $region35: #{unet_model_forward.5} parent=11 // pred_region
        _
      $region36: #{unet_model_forward.5} parent=11 // pred_fallthru
        _
      // Predicated region
      $region37: #{unet_model_forward.5} parent=11 // pred_check
        %p273 = pneg %p214
      $region38: #{unet_model_forward.5} parent=11 // pred_check_branch
        %275 = sbr.rel (%p273) target = $region40
      $region39: #{unet_model_forward.5} parent=11 // pred_region
        _
      $region40: #{unet_model_forward.5} parent=11 // pred_fallthru
        _
    $region12: #{unet_model_forward.5} parent=5 // pred_fallthru
      _
    %p276 = scmp.lt.s32.totalorder %s15, 2
    // Predicated region
    $region41: #{unet_model_forward.5} parent=5 // pred_check
      %p277 = pneg %p276
    $region42: #{unet_model_forward.5} parent=5 // pred_check_branch
      %279 = sbr.rel (%p277) target = $region44
    $region43: #{unet_model_forward.5} parent=5 // pred_region
      // Predicated region
      $region45: #{unet_model_forward.5} parent=43 // pred_check
        %p280 = pneg %p35
      $region46: #{unet_model_forward.5} parent=43 // pred_check_branch
        %282 = sbr.rel (%p280) target = $region48
      $region47: #{unet_model_forward.5} parent=43 // pred_region
        %p283 = scmp.lt.s32.totalorder %s15, 1
        %s284 = scalar_select %p283, %s15, 1
        %s285 = smul.addr %s284, 5
        %s286 = smul.addr %s285, 8
        %s287 = scalar_lea.vmem %s0, %s286
      $region48: #{unet_model_forward.5} parent=43 // pred_fallthru
        _
      // Predicated region
      $region49: #{unet_model_forward.5} parent=43 // pred_check
        %p288 = pneg %p61
      $region50: #{unet_model_forward.5} parent=43 // pred_check_branch
        %290 = sbr.rel (%p288) target = $region52
      $region51: #{unet_model_forward.5} parent=43 // pred_region
        %p291 = scmp.lt.s32.totalorder %s15, 1
        %s292 = scalar_select %p291, %s15, 1
        %s293 = smul.addr %s292, 10
        %s294 = smul.addr %s293, 8
        %s295 = scalar_lea.vmem %s1, %s294
      $region52: #{unet_model_forward.5} parent=43 // pred_fallthru
        _
    $region44: #{unet_model_forward.5} parent=5 // pred_fallthru
      _
    %p296 = scmp.le.s32.totalorder 1, %s15
    %p297 = scmp.lt.s32.totalorder %s15, 3
    %p298 = pnand %p296, %p297
    %p299 = pneg %p298
    // Predicated region
    $region53: #{unet_model_forward.5} parent=5 // pred_check
      _
    $region54: #{unet_model_forward.5} parent=5 // pred_check_branch
      %301 = sbr.rel (%p298) target = $region56
    $region55: #{unet_model_forward.5} parent=5 // pred_region
      %s302 = ssub.s32 %s15, 1
      %p303 = scmp.lt.s32.totalorder %s20, 1
      %s304 = scalar_select %p303, %s20, 1
      %s305 = smul.addr %s304, 5
      %s306 = smul.addr %s305, 8
      %s307 = scalar_lea.vmem %s0, %s306
      %p308 = pneg %p41
      %p309 = pneg %p38
      %p310 = scmp.lt.s32.totalorder %s20, 1
      %s311 = scalar_select %p310, %s20, 1
      %s312 = smul.addr %s311, 10
      %s313 = smul.addr %s312, 8
      %s314 = scalar_lea.vmem %s1, %s313
      %p315 = pneg %p67
      %p316 = pneg %p64
      %p317 = pneg %p88
      %p318 = pneg %p85
      %p319 = pneg %p109
      %p320 = pneg %p106
      %p321 = pneg %p130
      %p322 = pneg %p127
      %p323 = pneg %p151
      %p324 = pneg %p148
      %p325 = pneg %p172
      %p326 = pneg %p169
      %p327 = pneg %p193
      %p328 = pneg %p190
      %p329 = pneg %p214
      %p330 = pneg %p211
      %p331 = pneg %p240
      %p332 = pneg %p237
      %p333 = scmp.lt.s32.totalorder %s20, 1
      %s334 = scalar_select %p333, %s20, 1
      %s335 = smul.addr %s334, 4
      %s336 = smul.addr %s335, 8
      %s337 = scalar_lea.vmem %s9, %s336
      %p338 = scmp.lt.s32.totalorder %s20, 1
      %s339 = scalar_select %p338, %s20, 1
      %s340 = smul.addr %s339, 5
      %s341 = smul.addr %s340, 8
      %s342 = scalar_lea.vmem %s0, %s341
      %p343 = scmp.lt.s32.totalorder %s20, 1
      %s344 = scalar_select %p343, %s20, 1
      %s345 = smul.addr %s344, 10
      %s346 = smul.addr %s345, 8
      %s347 = scalar_lea.vmem %s1, %s346
      %p348 = scmp.lt.s32.totalorder %s20, 1
      %s349 = scalar_select %p348, %s20, 1
      %s350 = smul.addr %s349, 4
      %s351 = smul.addr %s350, 8
      %s352 = scalar_lea.vmem %s9, %s351
      %v353 = vld [vmem:[%s342] sm:$0xff]
      %v354 = vld [vmem:[%s342 + $0x8] sm:$0xff]
      %v355 = vld [vmem:[%s342 + $0x10] sm:$0xff]
      %v356 = vld [vmem:[%s342 + $0x18] sm:$0xff]
      %v357 = vld [vmem:[%s342 + $0x20] sm:$0xff]
      %v358 = vld [vmem:[%s347] sm:$0xff]
      %v359 = vld [vmem:[%s347 + $0x8] sm:$0xff]
      %v360 = vld [vmem:[%s347 + $0x10] sm:$0xff]
      %v361 = vld [vmem:[%s347 + $0x18] sm:$0xff]
      %v362 = vld [vmem:[%s347 + $0x20] sm:$0xff]
      %v363 = vld [vmem:[%s347 + $0x28] sm:$0xff]
      %v364 = vld [vmem:[%s347 + $0x30] sm:$0xff]
      %v365 = vld [vmem:[%s347 + $0x38] sm:$0xff]
      %v366 = vld [vmem:[%s347 + $0x40] sm:$0xff]
      %v367 = vld [vmem:[%s347 + $0x48] sm:$0xff]
      %v368 = vld [vmem:[%s2] sm:$0xff]
      %374 = vrot.lane.b32.xlu0 %v353, 127
      %v375 = vpop.permute.xlu0 %374
      %376 = vrot.lane.b32.xlu0 %v354, 127
      %v377 = vpop.permute.xlu0 %376
      %378 = vrot.lane.b32.xlu0 %v355, 127
      %v379 = vpop.permute.xlu0 %378
      %380 = vrot.lane.b32.xlu0 %v356, 127
      %v381 = vpop.permute.xlu0 %380
      %382 = vrot.lane.b32.xlu0 %v357, 127
      %v383 = vpop.permute.xlu0 %382
      %vm384 = vcmask 1039360
      %v385 = vsel %vm384, %v375, %v377
      %v386 = vsel %vm384, %v377, %v379
      %v387 = vsel %vm384, %v379, %v381
      %v388 = vsel %vm384, %v381, %v383
      %394 = vrot.lane.b32.xlu0 %v353, 126
      %v395 = vpop.permute.xlu0 %394
      %396 = vrot.lane.b32.xlu0 %v354, 126
      %v397 = vpop.permute.xlu0 %396
      %398 = vrot.lane.b32.xlu0 %v355, 126
      %v399 = vpop.permute.xlu0 %398
      %400 = vrot.lane.b32.xlu0 %v356, 126
      %v401 = vpop.permute.xlu0 %400
      %402 = vrot.lane.b32.xlu0 %v357, 126
      %v403 = vpop.permute.xlu0 %402
      %vm404 = vcmask 1031168
      %v405 = vsel %vm404, %v395, %v397
      %v406 = vsel %vm404, %v397, %v399
      %v407 = vsel %vm404, %v399, %v401
      %v408 = vsel %vm404, %v401, %v403
      %414 = vrot.lane.b32.xlu0 %v353, 104
      %v415 = vpop.permute.xlu0 %414
      %416 = vrot.lane.b32.xlu0 %v354, 104
      %v417 = vpop.permute.xlu0 %416
      %418 = vrot.lane.b32.xlu0 %v355, 104
      %v419 = vpop.permute.xlu0 %418
      %420 = vrot.lane.b32.xlu0 %v356, 104
      %v421 = vpop.permute.xlu0 %420
      %422 = vrot.lane.b32.xlu0 %v357, 104
      %v423 = vpop.permute.xlu0 %422
      %vm424 = vcmask 850944
      %v425 = vsel %vm424, %v415, %v417
      %v426 = vsel %vm424, %v417, %v419
      %v427 = vsel %vm424, %v419, %v421
      %v428 = vsel %vm424, %v421, %v423
      %434 = vrot.lane.b32.xlu0 %v353, 103
      %v435 = vpop.permute.xlu0 %434
      %436 = vrot.lane.b32.xlu0 %v354, 103
      %v437 = vpop.permute.xlu0 %436
      %438 = vrot.lane.b32.xlu0 %v355, 103
      %v439 = vpop.permute.xlu0 %438
      %440 = vrot.lane.b32.xlu0 %v356, 103
      %v441 = vpop.permute.xlu0 %440
      %442 = vrot.lane.b32.xlu0 %v357, 103
      %v443 = vpop.permute.xlu0 %442
      %vm444 = vcmask 842752
      %v445 = vsel %vm444, %v435, %v437
      %v446 = vsel %vm444, %v437, %v439
      %v447 = vsel %vm444, %v439, %v441
      %v448 = vsel %vm444, %v441, %v443
      %454 = vrot.lane.b32.xlu0 %v353, 102
      %v455 = vpop.permute.xlu0 %454
      %456 = vrot.lane.b32.xlu0 %v354, 102
      %v457 = vpop.permute.xlu0 %456
      %458 = vrot.lane.b32.xlu0 %v355, 102
      %v459 = vpop.permute.xlu0 %458
      %460 = vrot.lane.b32.xlu0 %v356, 102
      %v461 = vpop.permute.xlu0 %460
      %462 = vrot.lane.b32.xlu0 %v357, 102
      %v463 = vpop.permute.xlu0 %462
      %vm464 = vcmask 834560
      %v465 = vsel %vm464, %v455, %v457
      %v466 = vsel %vm464, %v457, %v459
      %v467 = vsel %vm464, %v459, %v461
      %v468 = vsel %vm464, %v461, %v463
      %474 = vrot.lane.b32.xlu0 %v353, 80
      %v475 = vpop.permute.xlu0 %474
      %476 = vrot.lane.b32.xlu0 %v354, 80
      %v477 = vpop.permute.xlu0 %476
      %478 = vrot.lane.b32.xlu0 %v355, 80
      %v479 = vpop.permute.xlu0 %478
      %480 = vrot.lane.b32.xlu0 %v356, 80
      %v481 = vpop.permute.xlu0 %480
      %482 = vrot.lane.b32.xlu0 %v357, 80
      %v483 = vpop.permute.xlu0 %482
      %vm484 = vcmask 654336
      %v485 = vsel %vm484, %v475, %v477
      %v486 = vsel %vm484, %v477, %v479
      %v487 = vsel %vm484, %v479, %v481
      %v488 = vsel %vm484, %v481, %v483
      %494 = vrot.lane.b32.xlu0 %v353, 79
      %v495 = vpop.permute.xlu0 %494
      %496 = vrot.lane.b32.xlu0 %v354, 79
      %v497 = vpop.permute.xlu0 %496
      %498 = vrot.lane.b32.xlu0 %v355, 79
      %v499 = vpop.permute.xlu0 %498
      %500 = vrot.lane.b32.xlu0 %v356, 79
      %v501 = vpop.permute.xlu0 %500
      %502 = vrot.lane.b32.xlu0 %v357, 79
      %v503 = vpop.permute.xlu0 %502
      %vm504 = vcmask 646144
      %v505 = vsel %vm504, %v495, %v497
      %v506 = vsel %vm504, %v497, %v499
      %v507 = vsel %vm504, %v499, %v501
      %v508 = vsel %vm504, %v501, %v503
      %514 = vrot.lane.b32.xlu0 %v353, 78
      %v515 = vpop.permute.xlu0 %514
      %516 = vrot.lane.b32.xlu0 %v354, 78
      %v517 = vpop.permute.xlu0 %516
      %518 = vrot.lane.b32.xlu0 %v355, 78
      %v519 = vpop.permute.xlu0 %518
      %520 = vrot.lane.b32.xlu0 %v356, 78
      %v521 = vpop.permute.xlu0 %520
      %522 = vrot.lane.b32.xlu0 %v357, 78
      %v523 = vpop.permute.xlu0 %522
      %vm524 = vcmask 637952
      %v525 = vsel %vm524, %v515, %v517
      %v526 = vsel %vm524, %v517, %v519
      %v527 = vsel %vm524, %v519, %v521
      %v528 = vsel %vm524, %v521, %v523
      %v534 = vld [vmem:[%s3] sm:$0xff]
      %v535 = vld [vmem:[%s3 + $0x8] sm:$0xff]
      %546 = vrot.lane.b32.xlu0 %v358, 127
      %v547 = vpop.permute.xlu0 %546
      %548 = vrot.lane.b32.xlu0 %v359, 127
      %v549 = vpop.permute.xlu0 %548
      %550 = vrot.lane.b32.xlu0 %v360, 127
      %v551 = vpop.permute.xlu0 %550
      %552 = vrot.lane.b32.xlu0 %v361, 127
      %v553 = vpop.permute.xlu0 %552
      %554 = vrot.lane.b32.xlu0 %v362, 127
      %v555 = vpop.permute.xlu0 %554
      %556 = vrot.lane.b32.xlu0 %v363, 127
      %v557 = vpop.permute.xlu0 %556
      %558 = vrot.lane.b32.xlu0 %v364, 127
      %v559 = vpop.permute.xlu0 %558
      %560 = vrot.lane.b32.xlu0 %v365, 127
      %v561 = vpop.permute.xlu0 %560
      %562 = vrot.lane.b32.xlu0 %v366, 127
      %v563 = vpop.permute.xlu0 %562
      %564 = vrot.lane.b32.xlu0 %v367, 127
      %v565 = vpop.permute.xlu0 %564
      %v566 = vsel %vm384, %v547, %v549
      %v567 = vsel %vm384, %v549, %v551
      %v568 = vsel %vm384, %v551, %v553
      %v569 = vsel %vm384, %v553, %v555
      %v570 = vsel %vm384, %v557, %v559
      %v571 = vsel %vm384, %v559, %v561
      %v572 = vsel %vm384, %v561, %v563
      %v573 = vsel %vm384, %v563, %v565
      %584 = vrot.lane.b32.xlu0 %v358, 126
      %v585 = vpop.permute.xlu0 %584
      %586 = vrot.lane.b32.xlu0 %v359, 126
      %v587 = vpop.permute.xlu0 %586
      %588 = vrot.lane.b32.xlu0 %v360, 126
      %v589 = vpop.permute.xlu0 %588
      %590 = vrot.lane.b32.xlu0 %v361, 126
      %v591 = vpop.permute.xlu0 %590
      %592 = vrot.lane.b32.xlu0 %v362, 126
      %v593 = vpop.permute.xlu0 %592
      %594 = vrot.lane.b32.xlu0 %v363, 126
      %v595 = vpop.permute.xlu0 %594
      %596 = vrot.lane.b32.xlu0 %v364, 126
      %v597 = vpop.permute.xlu0 %596
      %598 = vrot.lane.b32.xlu0 %v365, 126
      %v599 = vpop.permute.xlu0 %598
      %600 = vrot.lane.b32.xlu0 %v366, 126
      %v601 = vpop.permute.xlu0 %600
      %602 = vrot.lane.b32.xlu0 %v367, 126
      %v603 = vpop.permute.xlu0 %602
      %v604 = vsel %vm404, %v585, %v587
      %v605 = vsel %vm404, %v587, %v589
      %v606 = vsel %vm404, %v589, %v591
      %v607 = vsel %vm404, %v591, %v593
      %v608 = vsel %vm404, %v595, %v597
      %v609 = vsel %vm404, %v597, %v599
      %v610 = vsel %vm404, %v599, %v601
      %v611 = vsel %vm404, %v601, %v603
      %622 = vrot.lane.b32.xlu0 %v358, 104
      %v623 = vpop.permute.xlu0 %622
      %624 = vrot.lane.b32.xlu0 %v359, 104
      %v625 = vpop.permute.xlu0 %624
      %626 = vrot.lane.b32.xlu0 %v360, 104
      %v627 = vpop.permute.xlu0 %626
      %628 = vrot.lane.b32.xlu0 %v361, 104
      %v629 = vpop.permute.xlu0 %628
      %630 = vrot.lane.b32.xlu0 %v362, 104
      %v631 = vpop.permute.xlu0 %630
      %632 = vrot.lane.b32.xlu0 %v363, 104
      %v633 = vpop.permute.xlu0 %632
      %634 = vrot.lane.b32.xlu0 %v364, 104
      %v635 = vpop.permute.xlu0 %634
      %636 = vrot.lane.b32.xlu0 %v365, 104
      %v637 = vpop.permute.xlu0 %636
      %638 = vrot.lane.b32.xlu0 %v366, 104
      %v639 = vpop.permute.xlu0 %638
      %640 = vrot.lane.b32.xlu0 %v367, 104
      %v641 = vpop.permute.xlu0 %640
      %v642 = vsel %vm424, %v623, %v625
      %v643 = vsel %vm424, %v625, %v627
      %v644 = vsel %vm424, %v627, %v629
      %v645 = vsel %vm424, %v629, %v631
      %v646 = vsel %vm424, %v633, %v635
      %v647 = vsel %vm424, %v635, %v637
      %v648 = vsel %vm424, %v637, %v639
      %v649 = vsel %vm424, %v639, %v641
      %660 = vrot.lane.b32.xlu0 %v358, 103
      %v661 = vpop.permute.xlu0 %660
      %662 = vrot.lane.b32.xlu0 %v359, 103
      %v663 = vpop.permute.xlu0 %662
      %664 = vrot.lane.b32.xlu0 %v360, 103
      %v665 = vpop.permute.xlu0 %664
      %666 = vrot.lane.b32.xlu0 %v361, 103
      %v667 = vpop.permute.xlu0 %666
      %668 = vrot.lane.b32.xlu0 %v362, 103
      %v669 = vpop.permute.xlu0 %668
      %670 = vrot.lane.b32.xlu0 %v363, 103
      %v671 = vpop.permute.xlu0 %670
      %672 = vrot.lane.b32.xlu0 %v364, 103
      %v673 = vpop.permute.xlu0 %672
      %674 = vrot.lane.b32.xlu0 %v365, 103
      %v675 = vpop.permute.xlu0 %674
      %676 = vrot.lane.b32.xlu0 %v366, 103
      %v677 = vpop.permute.xlu0 %676
      %678 = vrot.lane.b32.xlu0 %v367, 103
      %v679 = vpop.permute.xlu0 %678
      %v680 = vsel %vm444, %v661, %v663
      %v681 = vsel %vm444, %v663, %v665
      %v682 = vsel %vm444, %v665, %v667
      %v683 = vsel %vm444, %v667, %v669
      %v684 = vsel %vm444, %v671, %v673
      %v685 = vsel %vm444, %v673, %v675
      %v686 = vsel %vm444, %v675, %v677
      %v687 = vsel %vm444, %v677, %v679
      %698 = vrot.lane.b32.xlu0 %v358, 102
      %v699 = vpop.permute.xlu0 %698
      %700 = vrot.lane.b32.xlu0 %v359, 102
      %v701 = vpop.permute.xlu0 %700
      %702 = vrot.lane.b32.xlu0 %v360, 102
      %v703 = vpop.permute.xlu0 %702
      %704 = vrot.lane.b32.xlu0 %v361, 102
      %v705 = vpop.permute.xlu0 %704
      %706 = vrot.lane.b32.xlu0 %v362, 102
      %v707 = vpop.permute.xlu0 %706
      %708 = vrot.lane.b32.xlu0 %v363, 102
      %v709 = vpop.permute.xlu0 %708
      %710 = vrot.lane.b32.xlu0 %v364, 102
      %v711 = vpop.permute.xlu0 %710
      %712 = vrot.lane.b32.xlu0 %v365, 102
      %v713 = vpop.permute.xlu0 %712
      %714 = vrot.lane.b32.xlu0 %v366, 102
      %v715 = vpop.permute.xlu0 %714
      %716 = vrot.lane.b32.xlu0 %v367, 102
      %v717 = vpop.permute.xlu0 %716
      %v718 = vsel %vm464, %v699, %v701
      %v719 = vsel %vm464, %v701, %v703
      %v720 = vsel %vm464, %v703, %v705
      %v721 = vsel %vm464, %v705, %v707
      %v722 = vsel %vm464, %v709, %v711
      %v723 = vsel %vm464, %v711, %v713
      %v724 = vsel %vm464, %v713, %v715
      %v725 = vsel %vm464, %v715, %v717
      %736 = vrot.lane.b32.xlu0 %v358, 80
      %v737 = vpop.permute.xlu0 %736
      %738 = vrot.lane.b32.xlu0 %v359, 80
      %v739 = vpop.permute.xlu0 %738
      %740 = vrot.lane.b32.xlu0 %v360, 80
      %v741 = vpop.permute.xlu0 %740
      %742 = vrot.lane.b32.xlu0 %v361, 80
      %v743 = vpop.permute.xlu0 %742
      %744 = vrot.lane.b32.xlu0 %v362, 80
      %v745 = vpop.permute.xlu0 %744
      %746 = vrot.lane.b32.xlu0 %v363, 80
      %v747 = vpop.permute.xlu0 %746
      %748 = vrot.lane.b32.xlu0 %v364, 80
      %v749 = vpop.permute.xlu0 %748
      %750 = vrot.lane.b32.xlu0 %v365, 80
      %v751 = vpop.permute.xlu0 %750
      %752 = vrot.lane.b32.xlu0 %v366, 80
      %v753 = vpop.permute.xlu0 %752
      %754 = vrot.lane.b32.xlu0 %v367, 80
      %v755 = vpop.permute.xlu0 %754
      %v756 = vsel %vm484, %v737, %v739
      %v757 = vsel %vm484, %v739, %v741
      %v758 = vsel %vm484, %v741, %v743
      %v759 = vsel %vm484, %v743, %v745
      %v760 = vsel %vm484, %v747, %v749
      %v761 = vsel %vm484, %v749, %v751
      %v762 = vsel %vm484, %v751, %v753
      %v763 = vsel %vm484, %v753, %v755
      %774 = vrot.lane.b32.xlu0 %v358, 79
      %v775 = vpop.permute.xlu0 %774
      %776 = vrot.lane.b32.xlu0 %v359, 79
      %v777 = vpop.permute.xlu0 %776
      %778 = vrot.lane.b32.xlu0 %v360, 79
      %v779 = vpop.permute.xlu0 %778
      %780 = vrot.lane.b32.xlu0 %v361, 79
      %v781 = vpop.permute.xlu0 %780
      %782 = vrot.lane.b32.xlu0 %v362, 79
      %v783 = vpop.permute.xlu0 %782
      %784 = vrot.lane.b32.xlu0 %v363, 79
      %v785 = vpop.permute.xlu0 %784
      %786 = vrot.lane.b32.xlu0 %v364, 79
      %v787 = vpop.permute.xlu0 %786
      %788 = vrot.lane.b32.xlu0 %v365, 79
      %v789 = vpop.permute.xlu0 %788
      %790 = vrot.lane.b32.xlu0 %v366, 79
      %v791 = vpop.permute.xlu0 %790
      %792 = vrot.lane.b32.xlu0 %v367, 79
      %v793 = vpop.permute.xlu0 %792
      %v794 = vsel %vm504, %v775, %v777
      %v795 = vsel %vm504, %v777, %v779
      %v796 = vsel %vm504, %v779, %v781
      %v797 = vsel %vm504, %v781, %v783
      %v798 = vsel %vm504, %v785, %v787
      %v799 = vsel %vm504, %v787, %v789
      %v800 = vsel %vm504, %v789, %v791
      %v801 = vsel %vm504, %v791, %v793
      %812 = vrot.lane.b32.xlu0 %v358, 78
      %v813 = vpop.permute.xlu0 %812
      %814 = vrot.lane.b32.xlu0 %v359, 78
      %v815 = vpop.permute.xlu0 %814
      %816 = vrot.lane.b32.xlu0 %v360, 78
      %v817 = vpop.permute.xlu0 %816
      %818 = vrot.lane.b32.xlu0 %v361, 78
      %v819 = vpop.permute.xlu0 %818
      %820 = vrot.lane.b32.xlu0 %v362, 78
      %v821 = vpop.permute.xlu0 %820
      %822 = vrot.lane.b32.xlu0 %v363, 78
      %v823 = vpop.permute.xlu0 %822
      %824 = vrot.lane.b32.xlu0 %v364, 78
      %v825 = vpop.permute.xlu0 %824
      %826 = vrot.lane.b32.xlu0 %v365, 78
      %v827 = vpop.permute.xlu0 %826
      %828 = vrot.lane.b32.xlu0 %v366, 78
      %v829 = vpop.permute.xlu0 %828
      %830 = vrot.lane.b32.xlu0 %v367, 78
      %v831 = vpop.permute.xlu0 %830
      %v832 = vsel %vm524, %v813, %v815
      %v833 = vsel %vm524, %v815, %v817
      %v834 = vsel %vm524, %v817, %v819
      %v835 = vsel %vm524, %v819, %v821
      %v836 = vsel %vm524, %v823, %v825
      %v837 = vsel %vm524, %v825, %v827
      %v838 = vsel %vm524, %v827, %v829
      %v839 = vsel %vm524, %v829, %v831
      %vm850 = vcmask 130048
      %v852 = vsel %vm850, %v535, 0
      %854 = vmatpush.msra.mxu0 %v798
      %855 = vmatpush.msra.mxu0 %v794
      %856 = vmatpush.msra.mxu0 %v760
      %857 = vmatpush.msra.mxu0 %v756
      %858 = vmatpush.msra.mxu0 %v722
      %859 = vmatpush.msra.mxu0 %v718
      %860 = vmatpush.msra.mxu0 %v684
      %861 = vmatpush.msra.mxu0 %v680
      %862 = vmatpush.msra.mxu0 %v646
      %863 = vmatpush.msra.mxu0 %v642
      %864 = vmatpush.msra.mxu0 %v608
      %865 = vmatpush.msra.mxu0 %v604
      %866 = vmatpush.msra.mxu0 %v570
      %867 = vmatpush.msra.mxu0 %v566
      %868 = vmatpush.msra.mxu0 %v363
      %869 = vmatpush.msra.mxu0 %v358
      %870 = vmatmul.f32.gmra.mxu0 %v534
      %v871 = vpop.f32.mrf.mxu0
      %v872 = vadd.f32 0.0, %v871
      %873 = vdwg.mxu0
      %874 = vmatpush.msra.mxu0 0.0
      %875 = vmatpush.msra.mxu0 0.0
      %876 = vmatpush.msra.mxu0 0.0
      %877 = vmatpush.msra.mxu0 0.0
      %878 = vmatpush.msra.mxu0 0.0
      %879 = vmatpush.msra.mxu0 0.0
      %880 = vmatpush.msra.mxu0 0.0
      %881 = vmatpush.msra.mxu0 0.0
      %882 = vmatpush.msra.mxu0 0.0
      %883 = vmatpush.msra.mxu0 0.0
      %884 = vmatpush.msra.mxu0 0.0
      %885 = vmatpush.msra.mxu0 0.0
      %886 = vmatpush.msra.mxu0 0.0
      %887 = vmatpush.msra.mxu0 0.0
      %888 = vmatpush.msra.mxu0 %v836
      %889 = vmatpush.msra.mxu0 %v832
      %890 = vmatmul.f32.gmra.mxu0 %v852
      %v891 = vpop.f32.mrf.mxu0
      %v892 = vadd.f32 %v872, %v891
      %893 = vdwg.mxu0
      %894 = vmatpush.msra.mxu0 %v799
      %895 = vmatpush.msra.mxu0 %v795
      %896 = vmatpush.msra.mxu0 %v761
      %897 = vmatpush.msra.mxu0 %v757
      %898 = vmatpush.msra.mxu0 %v723
      %899 = vmatpush.msra.mxu0 %v719
      %900 = vmatpush.msra.mxu0 %v685
      %901 = vmatpush.msra.mxu0 %v681
      %902 = vmatpush.msra.mxu0 %v647
      %903 = vmatpush.msra.mxu0 %v643
      %904 = vmatpush.msra.mxu0 %v609
      %905 = vmatpush.msra.mxu0 %v605
      %906 = vmatpush.msra.mxu0 %v571
      %907 = vmatpush.msra.mxu0 %v567
      %908 = vmatpush.msra.mxu0 %v364
      %909 = vmatpush.msra.mxu0 %v359
      %910 = vmatmul.f32.gmra.mxu0 %v534
      %v911 = vpop.f32.mrf.mxu0
      %v912 = vadd.f32 0.0, %v911
      %913 = vdwg.mxu0
      %914 = vmatpush.msra.mxu0 0.0
      %915 = vmatpush.msra.mxu0 0.0
      %916 = vmatpush.msra.mxu0 0.0
      %917 = vmatpush.msra.mxu0 0.0
      %918 = vmatpush.msra.mxu0 0.0
      %919 = vmatpush.msra.mxu0 0.0
      %920 = vmatpush.msra.mxu0 0.0
      %921 = vmatpush.msra.mxu0 0.0
      %922 = vmatpush.msra.mxu0 0.0
      %923 = vmatpush.msra.mxu0 0.0
      %924 = vmatpush.msra.mxu0 0.0
      %925 = vmatpush.msra.mxu0 0.0
      %926 = vmatpush.msra.mxu0 0.0
      %927 = vmatpush.msra.mxu0 0.0
      %928 = vmatpush.msra.mxu0 %v837
      %929 = vmatpush.msra.mxu0 %v833
      %930 = vmatmul.f32.gmra.mxu0 %v852
      %v931 = vpop.f32.mrf.mxu0
      %v932 = vadd.f32 %v912, %v931
      %933 = vdwg.mxu0
      %934 = vmatpush.msra.mxu0 %v800
      %935 = vmatpush.msra.mxu0 %v796
      %936 = vmatpush.msra.mxu0 %v762
      %937 = vmatpush.msra.mxu0 %v758
      %938 = vmatpush.msra.mxu0 %v724
      %939 = vmatpush.msra.mxu0 %v720
      %940 = vmatpush.msra.mxu0 %v686
      %941 = vmatpush.msra.mxu0 %v682
      %942 = vmatpush.msra.mxu0 %v648
      %943 = vmatpush.msra.mxu0 %v644
      %944 = vmatpush.msra.mxu0 %v610
      %945 = vmatpush.msra.mxu0 %v606
      %946 = vmatpush.msra.mxu0 %v572
      %947 = vmatpush.msra.mxu0 %v568
      %948 = vmatpush.msra.mxu0 %v365
      %949 = vmatpush.msra.mxu0 %v360
      %950 = vmatmul.f32.gmra.mxu0 %v534
      %v951 = vpop.f32.mrf.mxu0
      %v952 = vadd.f32 0.0, %v951
      %953 = vdwg.mxu0
      %954 = vmatpush.msra.mxu0 0.0
      %955 = vmatpush.msra.mxu0 0.0
      %956 = vmatpush.msra.mxu0 0.0
      %957 = vmatpush.msra.mxu0 0.0
      %958 = vmatpush.msra.mxu0 0.0
      %959 = vmatpush.msra.mxu0 0.0
      %960 = vmatpush.msra.mxu0 0.0
      %961 = vmatpush.msra.mxu0 0.0
      %962 = vmatpush.msra.mxu0 0.0
      %963 = vmatpush.msra.mxu0 0.0
      %964 = vmatpush.msra.mxu0 0.0
      %965 = vmatpush.msra.mxu0 0.0
      %966 = vmatpush.msra.mxu0 0.0
      %967 = vmatpush.msra.mxu0 0.0
      %968 = vmatpush.msra.mxu0 %v838
      %969 = vmatpush.msra.mxu0 %v834
      %970 = vmatmul.f32.gmra.mxu0 %v852
      %v971 = vpop.f32.mrf.mxu0
      %v972 = vadd.f32 %v952, %v971
      %973 = vdwg.mxu0
      %974 = vmatpush.msra.mxu0 %v801
      %975 = vmatpush.msra.mxu0 %v797
      %976 = vmatpush.msra.mxu0 %v763
      %977 = vmatpush.msra.mxu0 %v759
      %978 = vmatpush.msra.mxu0 %v725
      %979 = vmatpush.msra.mxu0 %v721
      %980 = vmatpush.msra.mxu0 %v687
      %981 = vmatpush.msra.mxu0 %v683
      %982 = vmatpush.msra.mxu0 %v649
      %983 = vmatpush.msra.mxu0 %v645
      %984 = vmatpush.msra.mxu0 %v611
      %985 = vmatpush.msra.mxu0 %v607
      %986 = vmatpush.msra.mxu0 %v573
      %987 = vmatpush.msra.mxu0 %v569
      %988 = vmatpush.msra.mxu0 %v366
      %989 = vmatpush.msra.mxu0 %v361
      %990 = vmatmul.f32.gmra.mxu0 %v534
      %v991 = vpop.f32.mrf.mxu0
      %v992 = vadd.f32 0.0, %v991
      %993 = vdwg.mxu0
      %994 = vmatpush.msra.mxu0 0.0
      %995 = vmatpush.msra.mxu0 0.0
      %996 = vmatpush.msra.mxu0 0.0
      %997 = vmatpush.msra.mxu0 0.0
      %998 = vmatpush.msra.mxu0 0.0
      %999 = vmatpush.msra.mxu0 0.0
      %1000 = vmatpush.msra.mxu0 0.0
      %1001 = vmatpush.msra.mxu0 0.0
      %1002 = vmatpush.msra.mxu0 0.0
      %1003 = vmatpush.msra.mxu0 0.0
      %1004 = vmatpush.msra.mxu0 0.0
      %1005 = vmatpush.msra.mxu0 0.0
      %1006 = vmatpush.msra.mxu0 0.0
      %1007 = vmatpush.msra.mxu0 0.0
      %1008 = vmatpush.msra.mxu0 %v839
      %1009 = vmatpush.msra.mxu0 %v835
      %1010 = vmatmul.f32.gmra.mxu0 %v852
      %v1011 = vpop.f32.mrf.mxu0
      %v1012 = vadd.f32 %v992, %v1011
      %1013 = vdwg.mxu0
      %1014 = vmatpush.msra.mxu0 %v793
      %1015 = vmatpush.msra.mxu0 %v783
      %1016 = vmatpush.msra.mxu0 %v755
      %1017 = vmatpush.msra.mxu0 %v745
      %1018 = vmatpush.msra.mxu0 %v717
      %1019 = vmatpush.msra.mxu0 %v707
      %1020 = vmatpush.msra.mxu0 %v679
      %1021 = vmatpush.msra.mxu0 %v669
      %1022 = vmatpush.msra.mxu0 %v641
      %1023 = vmatpush.msra.mxu0 %v631
      %1024 = vmatpush.msra.mxu0 %v603
      %1025 = vmatpush.msra.mxu0 %v593
      %1026 = vmatpush.msra.mxu0 %v565
      %1027 = vmatpush.msra.mxu0 %v555
      %1028 = vmatpush.msra.mxu0 %v367
      %1029 = vmatpush.msra.mxu0 %v362
      %1030 = vmatmul.f32.gmra.mxu0 %v534
      %v1031 = vpop.f32.mrf.mxu0
      %v1032 = vadd.f32 0.0, %v1031
      %1033 = vdwg.mxu0
      %1034 = vmatpush.msra.mxu0 0.0
      %1035 = vmatpush.msra.mxu0 0.0
      %1036 = vmatpush.msra.mxu0 0.0
      %1037 = vmatpush.msra.mxu0 0.0
      %1038 = vmatpush.msra.mxu0 0.0
      %1039 = vmatpush.msra.mxu0 0.0
      %1040 = vmatpush.msra.mxu0 0.0
      %1041 = vmatpush.msra.mxu0 0.0
      %1042 = vmatpush.msra.mxu0 0.0
      %1043 = vmatpush.msra.mxu0 0.0
      %1044 = vmatpush.msra.mxu0 0.0
      %1045 = vmatpush.msra.mxu0 0.0
      %1046 = vmatpush.msra.mxu0 0.0
      %1047 = vmatpush.msra.mxu0 0.0
      %1048 = vmatpush.msra.mxu0 %v831
      %1049 = vmatpush.msra.mxu0 %v821
      %1050 = vmatmul.f32.gmra.mxu0 %v852
      %v1051 = vpop.f32.mrf.mxu0
      %v1052 = vadd.f32 %v1032, %v1051
      %1053 = vdwg.mxu0
      %vm1054 = vcmask 588800
      %v1056 = vsel %vm1054, %v368, 0
      %1058 = vmatpush.msra.mxu0 0.0
      %1059 = vmatpush.msra.mxu0 0.0
      %1060 = vmatpush.msra.mxu0 0.0
      %1061 = vmatpush.msra.mxu0 0.0
      %1062 = vmatpush.msra.mxu0 0.0
      %1063 = vmatpush.msra.mxu0 0.0
      %1064 = vmatpush.msra.mxu0 0.0
      %1065 = vmatpush.msra.mxu0 %v525
      %1066 = vmatpush.msra.mxu0 %v505
      %1067 = vmatpush.msra.mxu0 %v485
      %1068 = vmatpush.msra.mxu0 %v465
      %1069 = vmatpush.msra.mxu0 %v445
      %1070 = vmatpush.msra.mxu0 %v425
      %1071 = vmatpush.msra.mxu0 %v405
      %1072 = vmatpush.msra.mxu0 %v385
      %1073 = vmatpush.msra.mxu0 %v353
      %1074 = vmatmul.f32.gmra.mxu0 %v1056
      %v1075 = vpop.f32.mrf.mxu0
      %v1076 = vadd.f32 %v892, %v1075
      %1077 = vdwg.mxu0
      %1078 = vmatpush.msra.mxu0 0.0
      %1079 = vmatpush.msra.mxu0 0.0
      %1080 = vmatpush.msra.mxu0 0.0
      %1081 = vmatpush.msra.mxu0 0.0
      %1082 = vmatpush.msra.mxu0 0.0
      %1083 = vmatpush.msra.mxu0 0.0
      %1084 = vmatpush.msra.mxu0 0.0
      %1085 = vmatpush.msra.mxu0 %v526
      %1086 = vmatpush.msra.mxu0 %v506
      %1087 = vmatpush.msra.mxu0 %v486
      %1088 = vmatpush.msra.mxu0 %v466
      %1089 = vmatpush.msra.mxu0 %v446
      %1090 = vmatpush.msra.mxu0 %v426
      %1091 = vmatpush.msra.mxu0 %v406
      %1092 = vmatpush.msra.mxu0 %v386
      %1093 = vmatpush.msra.mxu0 %v354
      %1094 = vmatmul.f32.gmra.mxu0 %v1056
      %v1095 = vpop.f32.mrf.mxu0
      %v1096 = vadd.f32 %v932, %v1095
      %1097 = vdwg.mxu0
      %1098 = vmatpush.msra.mxu0 0.0
      %1099 = vmatpush.msra.mxu0 0.0
      %1100 = vmatpush.msra.mxu0 0.0
      %1101 = vmatpush.msra.mxu0 0.0
      %1102 = vmatpush.msra.mxu0 0.0
      %1103 = vmatpush.msra.mxu0 0.0
      %1104 = vmatpush.msra.mxu0 0.0
      %1105 = vmatpush.msra.mxu0 %v527
      %1106 = vmatpush.msra.mxu0 %v507
      %1107 = vmatpush.msra.mxu0 %v487
      %1108 = vmatpush.msra.mxu0 %v467
      %1109 = vmatpush.msra.mxu0 %v447
      %1110 = vmatpush.msra.mxu0 %v427
      %1111 = vmatpush.msra.mxu0 %v407
      %1112 = vmatpush.msra.mxu0 %v387
      %1113 = vmatpush.msra.mxu0 %v355
      %1114 = vmatmul.f32.gmra.mxu0 %v1056
      %v1115 = vpop.f32.mrf.mxu0
      %v1116 = vadd.f32 %v972, %v1115
      %1117 = vdwg.mxu0
      %1118 = vmatpush.msra.mxu0 0.0
      %1119 = vmatpush.msra.mxu0 0.0
      %1120 = vmatpush.msra.mxu0 0.0
      %1121 = vmatpush.msra.mxu0 0.0
      %1122 = vmatpush.msra.mxu0 0.0
      %1123 = vmatpush.msra.mxu0 0.0
      %1124 = vmatpush.msra.mxu0 0.0
      %1125 = vmatpush.msra.mxu0 %v528
      %1126 = vmatpush.msra.mxu0 %v508
      %1127 = vmatpush.msra.mxu0 %v488
      %1128 = vmatpush.msra.mxu0 %v468
      %1129 = vmatpush.msra.mxu0 %v448
      %1130 = vmatpush.msra.mxu0 %v428
      %1131 = vmatpush.msra.mxu0 %v408
      %1132 = vmatpush.msra.mxu0 %v388
      %1133 = vmatpush.msra.mxu0 %v356
      %1134 = vmatmul.f32.gmra.mxu0 %v1056
      %v1135 = vpop.f32.mrf.mxu0
      %v1136 = vadd.f32 %v1012, %v1135
      %1137 = vdwg.mxu0
      %1138 = vmatpush.msra.mxu0 0.0
      %1139 = vmatpush.msra.mxu0 0.0
      %1140 = vmatpush.msra.mxu0 0.0
      %1141 = vmatpush.msra.mxu0 0.0
      %1142 = vmatpush.msra.mxu0 0.0
      %1143 = vmatpush.msra.mxu0 0.0
      %1144 = vmatpush.msra.mxu0 0.0
      %1145 = vmatpush.msra.mxu0 %v523
      %1146 = vmatpush.msra.mxu0 %v503
      %1147 = vmatpush.msra.mxu0 %v483
      %1148 = vmatpush.msra.mxu0 %v463
      %1149 = vmatpush.msra.mxu0 %v443
      %1150 = vmatpush.msra.mxu0 %v423
      %1151 = vmatpush.msra.mxu0 %v403
      %1152 = vmatpush.msra.mxu0 %v383
      %1153 = vmatpush.msra.mxu0 %v357
      %1154 = vmatmul.f32.gmra.mxu0 %v1056
      %v1155 = vpop.f32.mrf.mxu0
      %v1156 = vadd.f32 %v1052, %v1155
      %1157 = vdwg.mxu0
      %v1158 = vld [vmem:[%s4] sm:$0xff]
      %1160 = vset.pattern.permute.xlu0 0
      %1161 = vperm.xlu0 %1160, %v1158
      %v1162 = vpop.permute.xlu0 %1161
      %v1164 = vadd.f32 %v1076, %v1162
      %v1165 = vadd.f32 %v1096, %v1162
      %v1166 = vadd.f32 %v1116, %v1162
      %v1167 = vadd.f32 %v1136, %v1162
      %v1168 = vadd.f32 %v1156, %v1162
      %v1169 = vmax.f32 %v1164, 0.0
      %v1170 = vmax.f32 %v1165, 0.0
      %v1171 = vmax.f32 %v1166, 0.0
      %v1172 = vmax.f32 %v1167, 0.0
      %v1173 = vmax.f32 %v1168, 0.0
      %1178 = vrot.lane.b32.xlu0 %v1169, 127
      %v1179 = vpop.permute.xlu0 %1178
      %1180 = vrot.lane.b32.xlu0 %v1170, 127
      %v1181 = vpop.permute.xlu0 %1180
      %1182 = vrot.lane.b32.xlu0 %v1171, 127
      %v1183 = vpop.permute.xlu0 %1182
      %1184 = vrot.lane.b32.xlu0 %v1172, 127
      %v1185 = vpop.permute.xlu0 %1184
      %v1186 = vsel %vm384, %v1179, %v1181
      %v1187 = vsel %vm384, %v1181, %v1183
      %v1188 = vsel %vm384, %v1183, %v1185
      %1193 = vrot.lane.b32.xlu0 %v1169, 126
      %v1194 = vpop.permute.xlu0 %1193
      %1195 = vrot.lane.b32.xlu0 %v1170, 126
      %v1196 = vpop.permute.xlu0 %1195
      %1197 = vrot.lane.b32.xlu0 %v1171, 126
      %v1198 = vpop.permute.xlu0 %1197
      %1199 = vrot.lane.b32.xlu0 %v1172, 126
      %v1200 = vpop.permute.xlu0 %1199
      %v1201 = vsel %vm404, %v1194, %v1196
      %v1202 = vsel %vm404, %v1196, %v1198
      %v1203 = vsel %vm404, %v1198, %v1200
      %1208 = vrot.lane.b32.xlu0 %v1169, 104
      %v1209 = vpop.permute.xlu0 %1208
      %1210 = vrot.lane.b32.xlu0 %v1170, 104
      %v1211 = vpop.permute.xlu0 %1210
      %1212 = vrot.lane.b32.xlu0 %v1171, 104
      %v1213 = vpop.permute.xlu0 %1212
      %1214 = vrot.lane.b32.xlu0 %v1172, 104
      %v1215 = vpop.permute.xlu0 %1214
      %v1216 = vsel %vm424, %v1209, %v1211
      %v1217 = vsel %vm424, %v1211, %v1213
      %v1218 = vsel %vm424, %v1213, %v1215
      %1223 = vrot.lane.b32.xlu0 %v1169, 103
      %v1224 = vpop.permute.xlu0 %1223
      %1225 = vrot.lane.b32.xlu0 %v1170, 103
      %v1226 = vpop.permute.xlu0 %1225
      %1227 = vrot.lane.b32.xlu0 %v1171, 103
      %v1228 = vpop.permute.xlu0 %1227
      %1229 = vrot.lane.b32.xlu0 %v1172, 103
      %v1230 = vpop.permute.xlu0 %1229
      %v1231 = vsel %vm444, %v1224, %v1226
      %v1232 = vsel %vm444, %v1226, %v1228
      %v1233 = vsel %vm444, %v1228, %v1230
      %1238 = vrot.lane.b32.xlu0 %v1169, 102
      %v1239 = vpop.permute.xlu0 %1238
      %1240 = vrot.lane.b32.xlu0 %v1170, 102
      %v1241 = vpop.permute.xlu0 %1240
      %1242 = vrot.lane.b32.xlu0 %v1171, 102
      %v1243 = vpop.permute.xlu0 %1242
      %1244 = vrot.lane.b32.xlu0 %v1172, 102
      %v1245 = vpop.permute.xlu0 %1244
      %v1246 = vsel %vm464, %v1239, %v1241
      %v1247 = vsel %vm464, %v1241, %v1243
      %v1248 = vsel %vm464, %v1243, %v1245
      %1254 = vrot.lane.b32.xlu0 %v1169, 80
      %v1255 = vpop.permute.xlu0 %1254
      %1256 = vrot.lane.b32.xlu0 %v1170, 80
      %v1257 = vpop.permute.xlu0 %1256
      %1258 = vrot.lane.b32.xlu0 %v1171, 80
      %v1259 = vpop.permute.xlu0 %1258
      %1260 = vrot.lane.b32.xlu0 %v1172, 80
      %v1261 = vpop.permute.xlu0 %1260
      %1262 = vrot.lane.b32.xlu0 %v1173, 80
      %v1263 = vpop.permute.xlu0 %1262
      %v1264 = vsel %vm484, %v1255, %v1257
      %v1265 = vsel %vm484, %v1257, %v1259
      %v1266 = vsel %vm484, %v1259, %v1261
      %v1267 = vsel %vm484, %v1261, %v1263
      %1272 = vrot.lane.b32.xlu0 %v1169, 79
      %v1273 = vpop.permute.xlu0 %1272
      %1274 = vrot.lane.b32.xlu0 %v1170, 79
      %v1275 = vpop.permute.xlu0 %1274
      %1276 = vrot.lane.b32.xlu0 %v1171, 79
      %v1277 = vpop.permute.xlu0 %1276
      %1278 = vrot.lane.b32.xlu0 %v1172, 79
      %v1279 = vpop.permute.xlu0 %1278
      %1280 = vrot.lane.b32.xlu0 %v1173, 79
      %v1281 = vpop.permute.xlu0 %1280
      %v1282 = vsel %vm504, %v1273, %v1275
      %v1283 = vsel %vm504, %v1275, %v1277
      %v1284 = vsel %vm504, %v1277, %v1279
      %v1285 = vsel %vm504, %v1279, %v1281
      %1290 = vrot.lane.b32.xlu0 %v1169, 78
      %v1291 = vpop.permute.xlu0 %1290
      %1292 = vrot.lane.b32.xlu0 %v1170, 78
      %v1293 = vpop.permute.xlu0 %1292
      %1294 = vrot.lane.b32.xlu0 %v1171, 78
      %v1295 = vpop.permute.xlu0 %1294
      %1296 = vrot.lane.b32.xlu0 %v1172, 78
      %v1297 = vpop.permute.xlu0 %1296
      %1298 = vrot.lane.b32.xlu0 %v1173, 78
      %v1299 = vpop.permute.xlu0 %1298
      %v1300 = vsel %vm524, %v1291, %v1293
      %v1301 = vsel %vm524, %v1293, %v1295
      %v1302 = vsel %vm524, %v1295, %v1297
      %v1303 = vsel %vm524, %v1297, %v1299
      %v1308 = vld [vmem:[%s5] sm:$0xff]
      %v1309 = vld [vmem:[%s6] sm:$0xff]
      %1311 = vset.pattern.permute.xlu0 0
      %1312 = vperm.xlu0 %1311, %v1309
      %v1313 = vpop.permute.xlu0 %1312
      %v1316 = vsel %vm1054, %v1308, 0
      %1318 = vmatpush.msra.mxu0 0.0
      %1319 = vmatpush.msra.mxu0 0.0
      %1320 = vmatpush.msra.mxu0 0.0
      %1321 = vmatpush.msra.mxu0 0.0
      %1322 = vmatpush.msra.mxu0 0.0
      %1323 = vmatpush.msra.mxu0 0.0
      %1324 = vmatpush.msra.mxu0 0.0
      %1325 = vmatpush.msra.mxu0 %v1300
      %1326 = vmatpush.msra.mxu0 %v1282
      %1327 = vmatpush.msra.mxu0 %v1264
      %1328 = vmatpush.msra.mxu0 %v1246
      %1329 = vmatpush.msra.mxu0 %v1231
      %1330 = vmatpush.msra.mxu0 %v1216
      %1331 = vmatpush.msra.mxu0 %v1201
      %1332 = vmatpush.msra.mxu0 %v1186
      %1333 = vmatpush.msra.mxu0 %v1169
      %1334 = vmatmul.f32.gmra.mxu0 %v1316
      %v1335 = vpop.f32.mrf.mxu0
      %v1336 = vadd.f32 %v1313, %v1335
      %1337 = vdwg.mxu0
      %1338 = vmatpush.msra.mxu0 0.0
      %1339 = vmatpush.msra.mxu0 0.0
      %1340 = vmatpush.msra.mxu0 0.0
      %1341 = vmatpush.msra.mxu0 0.0
      %1342 = vmatpush.msra.mxu0 0.0
      %1343 = vmatpush.msra.mxu0 0.0
      %1344 = vmatpush.msra.mxu0 0.0
      %1345 = vmatpush.msra.mxu0 %v1301
      %1346 = vmatpush.msra.mxu0 %v1283
      %1347 = vmatpush.msra.mxu0 %v1265
      %1348 = vmatpush.msra.mxu0 %v1247
      %1349 = vmatpush.msra.mxu0 %v1232
      %1350 = vmatpush.msra.mxu0 %v1217
      %1351 = vmatpush.msra.mxu0 %v1202
      %1352 = vmatpush.msra.mxu0 %v1187
      %1353 = vmatpush.msra.mxu0 %v1170
      %1354 = vmatmul.f32.gmra.mxu0 %v1316
      %v1355 = vpop.f32.mrf.mxu0
      %v1356 = vadd.f32 %v1313, %v1355
      %1357 = vdwg.mxu0
      %1358 = vmatpush.msra.mxu0 0.0
      %1359 = vmatpush.msra.mxu0 0.0
      %1360 = vmatpush.msra.mxu0 0.0
      %1361 = vmatpush.msra.mxu0 0.0
      %1362 = vmatpush.msra.mxu0 0.0
      %1363 = vmatpush.msra.mxu0 0.0
      %1364 = vmatpush.msra.mxu0 0.0
      %1365 = vmatpush.msra.mxu0 %v1302
      %1366 = vmatpush.msra.mxu0 %v1284
      %1367 = vmatpush.msra.mxu0 %v1266
      %1368 = vmatpush.msra.mxu0 %v1248
      %1369 = vmatpush.msra.mxu0 %v1233
      %1370 = vmatpush.msra.mxu0 %v1218
      %1371 = vmatpush.msra.mxu0 %v1203
      %1372 = vmatpush.msra.mxu0 %v1188
      %1373 = vmatpush.msra.mxu0 %v1171
      %1374 = vmatmul.f32.gmra.mxu0 %v1316
      %v1375 = vpop.f32.mrf.mxu0
      %v1376 = vadd.f32 %v1313, %v1375
      %1377 = vdwg.mxu0
      %1378 = vmatpush.msra.mxu0 0.0
      %1379 = vmatpush.msra.mxu0 0.0
      %1380 = vmatpush.msra.mxu0 0.0
      %1381 = vmatpush.msra.mxu0 0.0
      %1382 = vmatpush.msra.mxu0 0.0
      %1383 = vmatpush.msra.mxu0 0.0
      %1384 = vmatpush.msra.mxu0 0.0
      %1385 = vmatpush.msra.mxu0 %v1303
      %1386 = vmatpush.msra.mxu0 %v1285
      %1387 = vmatpush.msra.mxu0 %v1267
      %1388 = vmatpush.msra.mxu0 %v1245
      %1389 = vmatpush.msra.mxu0 %v1230
      %1390 = vmatpush.msra.mxu0 %v1215
      %1391 = vmatpush.msra.mxu0 %v1200
      %1392 = vmatpush.msra.mxu0 %v1185
      %1393 = vmatpush.msra.mxu0 %v1172
      %1394 = vmatmul.f32.gmra.mxu0 %v1316
      %v1395 = vpop.f32.mrf.mxu0
      %v1396 = vadd.f32 %v1313, %v1395
      %1397 = vdwg.mxu0
      %v1398 = vmax.f32 %v1336, 0.0
      %v1399 = vmax.f32 %v1356, 0.0
      %v1400 = vmax.f32 %v1376, 0.0
      %v1401 = vmax.f32 %v1396, 0.0
      %v1402 = vld [vmem:[%s7] sm:$0xff]
      %v1403 = vld [vmem:[%s8] sm:$0xff]
      %1405 = vset.pattern.permute.xlu0 0
      %1406 = vperm.xlu0 %1405, %v1403
      %v1407 = vpop.permute.xlu0 %1406
      %vm1409 = vcmask 64512
      %v1411 = vsel %vm1409, %v1402, 0
      %1413 = vmatpush.msra.mxu0 0.0
      %1414 = vmatpush.msra.mxu0 0.0
      %1415 = vmatpush.msra.mxu0 0.0
      %1416 = vmatpush.msra.mxu0 0.0
      %1417 = vmatpush.msra.mxu0 0.0
      %1418 = vmatpush.msra.mxu0 0.0
      %1419 = vmatpush.msra.mxu0 0.0
      %1420 = vmatpush.msra.mxu0 0.0
      %1421 = vmatpush.msra.mxu0 0.0
      %1422 = vmatpush.msra.mxu0 0.0
      %1423 = vmatpush.msra.mxu0 0.0
      %1424 = vmatpush.msra.mxu0 0.0
      %1425 = vmatpush.msra.mxu0 0.0
      %1426 = vmatpush.msra.mxu0 0.0
      %1427 = vmatpush.msra.mxu0 0.0
      %1428 = vmatpush.msra.mxu0 %v1398
      %1429 = vmatmul.f32.gmra.mxu0 %v1411
      %v1430 = vpop.f32.mrf.mxu0
      %v1431 = vadd.f32 %v1407, %v1430
      %1432 = vdwg.mxu0
      %1433 = vmatpush.msra.mxu0 0.0
      %1434 = vmatpush.msra.mxu0 0.0
      %1435 = vmatpush.msra.mxu0 0.0
      %1436 = vmatpush.msra.mxu0 0.0
      %1437 = vmatpush.msra.mxu0 0.0
      %1438 = vmatpush.msra.mxu0 0.0
      %1439 = vmatpush.msra.mxu0 0.0
      %1440 = vmatpush.msra.mxu0 0.0
      %1441 = vmatpush.msra.mxu0 0.0
      %1442 = vmatpush.msra.mxu0 0.0
      %1443 = vmatpush.msra.mxu0 0.0
      %1444 = vmatpush.msra.mxu0 0.0
      %1445 = vmatpush.msra.mxu0 0.0
      %1446 = vmatpush.msra.mxu0 0.0
      %1447 = vmatpush.msra.mxu0 0.0
      %1448 = vmatpush.msra.mxu0 %v1399
      %1449 = vmatmul.f32.gmra.mxu0 %v1411
      %v1450 = vpop.f32.mrf.mxu0
      %v1451 = vadd.f32 %v1407, %v1450
      %1452 = vdwg.mxu0
      %1453 = vmatpush.msra.mxu0 0.0
      %1454 = vmatpush.msra.mxu0 0.0
      %1455 = vmatpush.msra.mxu0 0.0
      %1456 = vmatpush.msra.mxu0 0.0
      %1457 = vmatpush.msra.mxu0 0.0
      %1458 = vmatpush.msra.mxu0 0.0
      %1459 = vmatpush.msra.mxu0 0.0
      %1460 = vmatpush.msra.mxu0 0.0
      %1461 = vmatpush.msra.mxu0 0.0
      %1462 = vmatpush.msra.mxu0 0.0
      %1463 = vmatpush.msra.mxu0 0.0
      %1464 = vmatpush.msra.mxu0 0.0
      %1465 = vmatpush.msra.mxu0 0.0
      %1466 = vmatpush.msra.mxu0 0.0
      %1467 = vmatpush.msra.mxu0 0.0
      %1468 = vmatpush.msra.mxu0 %v1400
      %1469 = vmatmul.f32.gmra.mxu0 %v1411
      %v1470 = vpop.f32.mrf.mxu0
      %v1471 = vadd.f32 %v1407, %v1470
      %1472 = vdwg.mxu0
      %1473 = vmatpush.msra.mxu0 0.0
      %1474 = vmatpush.msra.mxu0 0.0
      %1475 = vmatpush.msra.mxu0 0.0
      %1476 = vmatpush.msra.mxu0 0.0
      %1477 = vmatpush.msra.mxu0 0.0
      %1478 = vmatpush.msra.mxu0 0.0
      %1479 = vmatpush.msra.mxu0 0.0
      %1480 = vmatpush.msra.mxu0 0.0
      %1481 = vmatpush.msra.mxu0 0.0
      %1482 = vmatpush.msra.mxu0 0.0
      %1483 = vmatpush.msra.mxu0 0.0
      %1484 = vmatpush.msra.mxu0 0.0
      %1485 = vmatpush.msra.mxu0 0.0
      %1486 = vmatpush.msra.mxu0 0.0
      %1487 = vmatpush.msra.mxu0 0.0
      %1488 = vmatpush.msra.mxu0 %v1401
      %1489 = vmatmul.f32.gmra.mxu0 %v1411
      %v1490 = vpop.f32.mrf.mxu0
      %v1491 = vadd.f32 %v1407, %v1490
      %1492 = vdwg.mxu0
      %v1493 = vtanh.pop %v1431
      %v1494 = vtanh.pop %v1451
      %v1495 = vtanh.pop %v1471
      %v1496 = vtanh.pop %v1491
      %vm1497 = vcmask 752640
      %v1498 = vsel %vm1497, %v1496, 0.0
      %1499 = vst [vmem:[%s352] sm:$0xff] %v1493
      %1500 = vst [vmem:[%s352 + $0x8] sm:$0xff] %v1494
      %1501 = vst [vmem:[%s352 + $0x10] sm:$0xff] %v1495
      %1502 = vst [vmem:[%s352 + $0x18] sm:$0xff] %v1498
      %p1503 = scmp.lt.s32.totalorder %s20, 1
      %s1504 = scalar_select %p1503, %s20, 1
      %s1505 = smul.addr %s1504, 4
      %s1506 = smul.addr %s1505, 8
      %s1507 = scalar_lea.vmem %s9, %s1506
      // Predicated region
      $region57: #{unet_model_forward.5} parent=55 // pred_check
        %p1508 = pneg %p237
      $region58: #{unet_model_forward.5} parent=55 // pred_check_branch
        %1510 = sbr.rel (%p1508) target = $region60
      $region59: #{unet_model_forward.5} parent=55 // pred_region
        _
      $region60: #{unet_model_forward.5} parent=55 // pred_fallthru
        _
    $region56: #{unet_model_forward.5} parent=5 // pred_fallthru
      _
    %p1511 = scmp.le.s32.totalorder 2, %s15
    // Predicated region
    $region61: #{unet_model_forward.5} parent=5 // pred_check
      %p1512 = pneg %p1511
    $region62: #{unet_model_forward.5} parent=5 // pred_check_branch
      %1514 = sbr.rel (%p1512) target = $region64
    $region63: #{unet_model_forward.5} parent=5 // pred_region
      %s1515 = ssub.s32 %s15, 2
      // Predicated region
      $region65: #{unet_model_forward.5} parent=63 // pred_check
        %p1516 = pneg %p243
      $region66: #{unet_model_forward.5} parent=63 // pred_check_branch
        %1518 = sbr.rel (%p1516) target = $region68
      $region67: #{unet_model_forward.5} parent=63 // pred_region
        %p1519 = scmp.lt.s32.totalorder %s21, 1
        %s1520 = scalar_select %p1519, %s21, 1
        %s1521 = smul.addr %s1520, 4
        %s1522 = smul.addr %s1521, 8
        %s1523 = scalar_lea.vmem %s9, %s1522
      $region68: #{unet_model_forward.5} parent=63 // pred_fallthru
        _
    $region64: #{unet_model_forward.5} parent=5 // pred_fallthru
      _
  $region6: #{unet_model_forward.5} parent=0 // loop_footer
    %s19 = sadd.s32 1, %s15
  $region7: #{unet_model_forward.5} parent=0 // loop_footer_branch
    %14 = sbr.rel target = $region3
  $region8: #{unet_model_forward.5} parent=0 // loop_exit
    _

</llo_original>
